<compile_context>
chip_gen: v5e
topology: v5e:2x2
jax: 0.10.0
libtpu: 0.0.40
codegen_flags: <defaults>
</compile_context>

<pallas_src>
import jax
import jax.numpy as jnp
from jax import lax
from jax.experimental import pallas as pl
from jax.experimental.pallas import tpu as pltpu


# Flat-slab extents (pixel (r, c) of the 32x32 image lives at flat index 32r+c).
L_C1 = 958   # conv1 outputs: 32*oh + ow,  oh, ow < 30  (max 957)
L_P1 = 925   # pool1 outputs: 64*i  + 2*j,  i,  j  < 15 (max 924)
L_C2 = 793   # conv2 outputs: 64*u  + 2*v,  u,  v  < 13 (max 792)
L_P2 = 661   # pool2 outputs: 128*m + 4*n,  m,  n  < 6  (max 660)


def _round_up(x, m):
    return ((x + m - 1) // m) * m


# --------------------------- kernel 1: convs + pools -------------------------

def _conv_pool_kernel(x_ref, w1_ref, b1_ref, w2_ref, b2_ref, o_ref):
    """One grid step = one block of images.

    x_ref : (B, 3, 1024) bf16  -- flat 32x32 image slabs
    w1_ref: (9, 6, 3)  bf16,  b1_ref: (6, 1)  f32
    w2_ref: (9, 16, 6) bf16,  b2_ref: (16, 1) f32
    o_ref : (B, 16, L_P2) bf16 -- pool2 slab; survivors at lane 128*m + 4*n
    """
    f32, bf16 = jnp.float32, jnp.bfloat16
    n_img = x_ref.shape[0]

    def one_image(b, carry):
        xb = x_ref[b]                                      # (3, 1024) bf16

        # conv1 (3x3 valid) + bias + ReLU on the 32-wide flat slab.
        acc = jnp.zeros((6, L_C1), f32)
        for di in range(3):
            for dj in range(3):
                s = 32 * di + dj
                acc = acc + jnp.dot(w1_ref[3 * di + dj], xb[:, s:s + L_C1],
                                    preferred_element_type=f32)
        a1 = jnp.maximum(acc + b1_ref[...], 0.0)           # (6, L_C1) f32

        # pool1: 2x2 / stride 2 -> survivors on the stride-2 sub-grid.
        p1 = a1[:, 0:L_P1]
        for t in (1, 32, 33):
            p1 = jnp.maximum(p1, a1[:, t:t + L_P1])
        p1 = p1.astype(bf16)                               # (6, L_P1) bf16

        # conv2 (3x3 valid on the stride-2 grid) + bias + ReLU.
        acc = jnp.zeros((16, L_C2), f32)
        for di in range(3):
            for dj in range(3):
                s = 64 * di + 2 * dj
                acc = acc + jnp.dot(w2_ref[3 * di + dj], p1[:, s:s + L_C2],
                                    preferred_element_type=f32)
        a2 = jnp.maximum(acc + b2_ref[...], 0.0)           # (16, L_C2) f32

        # pool2: 2x2 / stride 2 -> survivors on the stride-4 sub-grid.
        p2 = a2[:, 0:L_P2]
        for t in (2, 64, 66):
            p2 = jnp.maximum(p2, a2[:, t:t + L_P2])

        o_ref[b] = p2.astype(bf16)
        return carry

    lax.fori_loop(0, n_img, one_image, 0)


# ------------------------------ kernel 2: the MLP -----------------------------

def _mlp_kernel(x_ref, w1_ref, b1_ref, w2_ref, b2_ref, w3_ref, b3_ref, o_ref):
    """x_ref: (B, 576) bf16 -> o_ref: (B, NC_PAD) f32, all batched MXU matmuls."""
    f32, bf16 = jnp.float32, jnp.bfloat16
    h = jnp.dot(x_ref[...], w1_ref[...], preferred_element_type=f32)
    h = jnp.maximum(h + b1_ref[...], 0.0)
    h = jnp.dot(h.astype(bf16), w2_ref[...], preferred_element_type=f32)
    h = jnp.maximum(h + b2_ref[...], 0.0)
    o_ref[...] = (jnp.dot(h.astype(bf16), w3_ref[...],
                          preferred_element_type=f32) + b3_ref[...])


# ------------------------------------ wrapper ---------------------------------

def lenet_forward(prepared, x, *, num_classes, block_batch=32):
    """x: (N, 3, 32, 32) f32 NCHW -> logits (N, num_classes) f32."""
    n = x.shape[0]
    bb = max(8, min(_round_up(block_batch, 8), _round_up(n, 8)))
    g = pl.cdiv(n, bb)
    n_pad = g * bb
    nc_pad = prepared["fb3"].shape[1]

    xq = x.reshape(n, 3, 32 * 32).astype(jnp.bfloat16)      # bf16 image slabs
    if n_pad != n:
        xq = jnp.pad(xq, ((0, n_pad - n), (0, 0), (0, 0)))

    parallel = pltpu.CompilerParams(dimension_semantics=("parallel",))

    # ---- stage 1: conv1 -> relu -> pool1 -> conv2 -> relu -> pool2 -----------
    p2 = pl.pallas_call(
        _conv_pool_kernel,
        out_shape=jax.ShapeDtypeStruct((n_pad, 16, L_P2), jnp.bfloat16),
        grid=(g,),
        in_specs=[
            pl.BlockSpec((bb, 3, 1024), lambda i: (i, 0, 0)),    # images
            pl.BlockSpec((9, 6, 3),     lambda i: (0, 0, 0)),    # conv1 w
            pl.BlockSpec((6, 1),        lambda i: (0, 0)),       # conv1 b
            pl.BlockSpec((9, 16, 6),    lambda i: (0, 0, 0)),    # conv2 w
            pl.BlockSpec((16, 1),       lambda i: (0, 0)),       # conv2 b
        ],
        out_specs=pl.BlockSpec((bb, 16, L_P2), lambda i: (i, 0, 0)),
        compiler_params=parallel,
    )(xq, prepared["w1"], prepared["b1"], prepared["w2"], prepared["b2"])

    # ---- pool2-survivor gather (pure indexing, zero FLOPs, done by XLA) ------
    # Survivor (c, m, n) of image b lives at p2[b, c, 128*m + 4*n]; this
    # reproduces PyTorch's (C, H, W) .view(-1, 576) flatten order.
    idx = jnp.array([128 * m + 4 * nn for m in range(6) for nn in range(6)],
                    dtype=jnp.int32)
    feat = jnp.take(p2, idx, axis=2).reshape(n_pad, 16 * 36)     # (N, 576) bf16

    # ---- stage 2: fc1 -> relu -> fc2 -> relu -> fc3 (batched, padded lanes) --
    out = pl.pallas_call(
        _mlp_kernel,
        out_shape=jax.ShapeDtypeStruct((n_pad, nc_pad), jnp.float32),
        grid=(g,),
        in_specs=[
            pl.BlockSpec((bb, 576),    lambda i: (i, 0)),        # features
            pl.BlockSpec((576, 120),   lambda i: (0, 0)),        # fc1 w
            pl.BlockSpec((1, 120),     lambda i: (0, 0)),        # fc1 b
            pl.BlockSpec((120, 84),    lambda i: (0, 0)),        # fc2 w
            pl.BlockSpec((1, 84),      lambda i: (0, 0)),        # fc2 b
            pl.BlockSpec((84, nc_pad), lambda i: (0, 0)),        # fc3 w (padded)
            pl.BlockSpec((1, nc_pad),  lambda i: (0, 0)),        # fc3 b (padded)
        ],
        out_specs=pl.BlockSpec((bb, nc_pad), lambda i: (i, 0)),
        compiler_params=parallel,
    )(feat, prepared["fw1"], prepared["fb1"], prepared["fw2"], prepared["fb2"],
      prepared["fw3"], prepared["fb3"])

    return out[:n, :num_classes]


# ------------------------- parameter init / layout prep ------------------------

def init_lenet_params(key, num_classes):
    """Deterministic synthetic init (PyTorch-default-style uniform bounds),
    stored in the PyTorch layouts (OIHW convs, (out, in) FC weights)."""
    ks = jax.random.split(key, 10)

    def u(k, shape, fan_in):
        bound = 1.0 / (fan_in ** 0.5)
        return jax.random.uniform(k, shape, jnp.float32, -bound, bound)

    return {
        "conv1_w": u(ks[0], (6, 3, 3, 3), 3 * 3 * 3),
        "conv1_b": u(ks[1], (6,), 3 * 3 * 3),
        "conv2_w": u(ks[2], (16, 6, 3, 3), 6 * 3 * 3),
        "conv2_b": u(ks[3], (16,), 6 * 3 * 3),
        "fc1_w":   u(ks[4], (120, 16 * 6 * 6), 16 * 6 * 6),
        "fc1_b":   u(ks[5], (120,), 16 * 6 * 6),
        "fc2_w":   u(ks[6], (84, 120), 120),
        "fc2_b":   u(ks[7], (84,), 120),
        "fc3_w":   u(ks[8], (num_classes, 84), 84),
        "fc3_b":   u(ks[9], (num_classes,), 84),
    }


def prepare_lenet_params(params):
    """One-time layout transform: bf16 matmul weights, f32 biases, conv taps as
    (9, OC, IC), fc weights transposed, fc3 padded to 128 output lanes."""
    f32, bf16 = jnp.float32, jnp.bfloat16
    nc = params["fc3_w"].shape[0]
    nc_pad = _round_up(max(nc, 1), 128)

    w1 = params["conv1_w"].transpose(2, 3, 0, 1).reshape(9, 6, 3).astype(bf16)
    b1 = params["conv1_b"].reshape(6, 1).astype(f32)
    w2 = params["conv2_w"].transpose(2, 3, 0, 1).reshape(9, 16, 6).astype(bf16)
    b2 = params["conv2_b"].reshape(16, 1).astype(f32)

    fw1 = params["fc1_w"].T.astype(bf16)                    # (576, 120)
    fb1 = params["fc1_b"].reshape(1, 120).astype(f32)
    fw2 = params["fc2_w"].T.astype(bf16)                    # (120, 84)
    fb2 = params["fc2_b"].reshape(1, 84).astype(f32)
    fw3 = jnp.zeros((84, nc_pad), bf16).at[:, :nc].set(
        params["fc3_w"].T.astype(bf16))                     # (84, NC_PAD)
    fb3 = jnp.zeros((1, nc_pad), f32).at[:, :nc].set(
        params["fc3_b"].astype(f32))                        # (1, NC_PAD)

    return dict(w1=w1, b1=b1, w2=w2, b2=b2, fw1=fw1, fb1=fb1,
                fw2=fw2, fb2=fb2, fw3=fw3, fb3=fb3)


# ------------------------------ plain-JAX reference ----------------------------

def lenet_reference(params, x):
    def conv(x, w, b):
        y = lax.conv_general_dilated(
            x, w, (1, 1), "VALID",
            dimension_numbers=("NCHW", "OIHW", "NCHW"))
        return jax.nn.relu(y + b[None, :, None, None])

    def pool(x):
        return lax.reduce_window(x, -jnp.inf, lax.max,
                                 (1, 1, 2, 2), (1, 1, 2, 2), "VALID")

    x = pool(conv(x, params["conv1_w"], params["conv1_b"]))
    x = pool(conv(x, params["conv2_w"], params["conv2_b"]))
    x = x.reshape(x.shape[0], -1)
    x = jax.nn.relu(x @ params["fc1_w"].T + params["fc1_b"])
    x = jax.nn.relu(x @ params["fc2_w"].T + params["fc2_b"])
    return x @ params["fc3_w"].T + params["fc3_b"]


# ------------------------------------- main -------------------------------------

if __name__ == "__main__":
    num_classes = 10
    key_x, key_p = jax.random.split(jax.random.PRNGKey(0))
    x = jax.random.normal(key_x, (64, 3, 32, 32), jnp.float32)
    params = init_lenet_params(key_p, num_classes)
    prepared = prepare_lenet_params(params)       # one-time weight layout prep

    fwd = jax.jit(lenet_forward, static_argnames=("num_classes", "block_batch"))
    out = fwd(prepared, x, num_classes=num_classes)   # 2 grid steps of 32 images
    jax.block_until_ready(out)

    assert out.shape == (64, num_classes), out.shape
    assert bool(jnp.all(jnp.isfinite(out)))

    # Loose check vs. a plain-JAX f32 reference (kernel matmuls run in bf16).
    ref = jax.jit(lenet_reference)(params, x)
    err = float(jnp.max(jnp.abs(out - ref)))
    assert jnp.allclose(out, ref, rtol=1e-1, atol=1e-1), err
    print("KERNEL_OK")
</pallas_src>

<mosaic_0001>
module attributes {stable_mosaic.version = 11 : i64} {
  func.func @_conv_pool_kernel(%arg0: i32, %arg1: memref<32x3x1024xbf16, #tpu.memory_space<vmem>>, %arg2: memref<9x6x3xbf16, #tpu.memory_space<vmem>>, %arg3: memref<6x1xf32, #tpu.memory_space<vmem>>, %arg4: memref<9x16x6xbf16, #tpu.memory_space<vmem>>, %arg5: memref<16x1xf32, #tpu.memory_space<vmem>>, %arg6: memref<32x16x661xbf16, #tpu.memory_space<vmem>>) attributes {dimension_semantics = [#tpu.dimension_semantics<parallel>], iteration_bounds = array<i64: 2>, scalar_prefetch = 0 : i64, scratch_operands = 0 : i64, tpu.core_type = #tpu.core_type<tc>, window_params = [{transform_indices = @transform_0, window_bounds = array<i64: 32, 3, 1024>}, {pipeline_mode = #tpu.pipeline_mode<synchronous>, transform_indices = @transform_1, window_bounds = array<i64: 9, 6, 3>}, {pipeline_mode = #tpu.pipeline_mode<synchronous>, transform_indices = @transform_2, window_bounds = array<i64: 6, 1>}, {pipeline_mode = #tpu.pipeline_mode<synchronous>, transform_indices = @transform_3, window_bounds = array<i64: 9, 16, 6>}, {pipeline_mode = #tpu.pipeline_mode<synchronous>, transform_indices = @transform_4, window_bounds = array<i64: 16, 1>}, {transform_indices = @transform_5, window_bounds = array<i64: 32, 16, 661>}]} {
    %c0_i32 = arith.constant 0 : i32
    %c32_i32 = arith.constant 32 : i32
    %0 = arith.addi %c0_i32, %c32_i32 : i32
    %c1_i32 = arith.constant 1 : i32
    scf.for %arg7 = %c0_i32 to %0 step %c1_i32  : i32 {
      %1 = arith.index_cast %arg7 : i32 to index
      %c0 = arith.constant 0 : index
      %c0_1 = arith.constant 0 : index
      %2 = vector.load %arg1[%1, %c0, %c0_1] : memref<32x3x1024xbf16, #tpu.memory_space<vmem>>, vector<1x3x1024xbf16>
      %3 = vector.shape_cast %2 : vector<1x3x1024xbf16> to vector<3x1024xbf16>
      %cst = arith.constant 0.000000e+00 : f32
      %4 = vector.broadcast %cst : f32 to vector<6x958xf32>
      %c0_2 = arith.constant 0 : index
      %c0_3 = arith.constant 0 : index
      %c0_4 = arith.constant 0 : index
      %5 = vector.load %arg2[%c0_2, %c0_3, %c0_4] : memref<9x6x3xbf16, #tpu.memory_space<vmem>>, vector<1x6x3xbf16>
      %6 = vector.shape_cast %5 : vector<1x6x3xbf16> to vector<6x3xbf16>
      %7 = vector.extract_strided_slice %3 {offsets = [0, 0], sizes = [3, 958], strides = [1, 1]} : vector<3x1024xbf16> to vector<3x958xbf16>
      %cst_5 = arith.constant dense<0.000000e+00> : vector<6x958xf32>
      %8 = tpu.matmul %6, %7, %cst_5 {dimension_numbers = #tpu.dot_dimension_numbers<[1], [0], [0], [1], [0, 0, 1, 1], [], []>} : vector<6x3xbf16>, vector<3x958xbf16>, vector<6x958xf32> -> vector<6x958xf32>
      %9 = arith.addf %4, %8 : vector<6x958xf32>
      %c1 = arith.constant 1 : index
      %c0_6 = arith.constant 0 : index
      %c0_7 = arith.constant 0 : index
      %10 = vector.load %arg2[%c1, %c0_6, %c0_7] : memref<9x6x3xbf16, #tpu.memory_space<vmem>>, vector<1x6x3xbf16>
      %11 = vector.shape_cast %10 : vector<1x6x3xbf16> to vector<6x3xbf16>
      %12 = vector.extract_strided_slice %3 {offsets = [0, 1], sizes = [3, 958], strides = [1, 1]} : vector<3x1024xbf16> to vector<3x958xbf16>
      %cst_8 = arith.constant dense<0.000000e+00> : vector<6x958xf32>
      %13 = tpu.matmul %11, %12, %cst_8 {dimension_numbers = #tpu.dot_dimension_numbers<[1], [0], [0], [1], [0, 0, 1, 1], [], []>} : vector<6x3xbf16>, vector<3x958xbf16>, vector<6x958xf32> -> vector<6x958xf32>
      %14 = arith.addf %9, %13 : vector<6x958xf32>
      %c2 = arith.constant 2 : index
      %c0_9 = arith.constant 0 : index
      %c0_10 = arith.constant 0 : index
      %15 = vector.load %arg2[%c2, %c0_9, %c0_10] : memref<9x6x3xbf16, #tpu.memory_space<vmem>>, vector<1x6x3xbf16>
      %16 = vector.shape_cast %15 : vector<1x6x3xbf16> to vector<6x3xbf16>
      %17 = vector.extract_strided_slice %3 {offsets = [0, 2], sizes = [3, 958], strides = [1, 1]} : vector<3x1024xbf16> to vector<3x958xbf16>
      %cst_11 = arith.constant dense<0.000000e+00> : vector<6x958xf32>
      %18 = tpu.matmul %16, %17, %cst_11 {dimension_numbers = #tpu.dot_dimension_numbers<[1], [0], [0], [1], [0, 0, 1, 1], [], []>} : vector<6x3xbf16>, vector<3x958xbf16>, vector<6x958xf32> -> vector<6x958xf32>
      %19 = arith.addf %14, %18 : vector<6x958xf32>
      %c3 = arith.constant 3 : index
      %c0_12 = arith.constant 0 : index
      %c0_13 = arith.constant 0 : index
      %20 = vector.load %arg2[%c3, %c0_12, %c0_13] : memref<9x6x3xbf16, #tpu.memory_space<vmem>>, vector<1x6x3xbf16>
      %21 = vector.shape_cast %20 : vector<1x6x3xbf16> to vector<6x3xbf16>
      %22 = vector.extract_strided_slice %3 {offsets = [0, 32], sizes = [3, 958], strides = [1, 1]} : vector<3x1024xbf16> to vector<3x958xbf16>
      %cst_14 = arith.constant dense<0.000000e+00> : vector<6x958xf32>
      %23 = tpu.matmul %21, %22, %cst_14 {dimension_numbers = #tpu.dot_dimension_numbers<[1], [0], [0], [1], [0, 0, 1, 1], [], []>} : vector<6x3xbf16>, vector<3x958xbf16>, vector<6x958xf32> -> vector<6x958xf32>
      %24 = arith.addf %19, %23 : vector<6x958xf32>
      %c4 = arith.constant 4 : index
      %c0_15 = arith.constant 0 : index
      %c0_16 = arith.constant 0 : index
      %25 = vector.load %arg2[%c4, %c0_15, %c0_16] : memref<9x6x3xbf16, #tpu.memory_space<vmem>>, vector<1x6x3xbf16>
      %26 = vector.shape_cast %25 : vector<1x6x3xbf16> to vector<6x3xbf16>
      %27 = vector.extract_strided_slice %3 {offsets = [0, 33], sizes = [3, 958], strides = [1, 1]} : vector<3x1024xbf16> to vector<3x958xbf16>
      %cst_17 = arith.constant dense<0.000000e+00> : vector<6x958xf32>
      %28 = tpu.matmul %26, %27, %cst_17 {dimension_numbers = #tpu.dot_dimension_numbers<[1], [0], [0], [1], [0, 0, 1, 1], [], []>} : vector<6x3xbf16>, vector<3x958xbf16>, vector<6x958xf32> -> vector<6x958xf32>
      %29 = arith.addf %24, %28 : vector<6x958xf32>
      %c5 = arith.constant 5 : index
      %c0_18 = arith.constant 0 : index
      %c0_19 = arith.constant 0 : index
      %30 = vector.load %arg2[%c5, %c0_18, %c0_19] : memref<9x6x3xbf16, #tpu.memory_space<vmem>>, vector<1x6x3xbf16>
      %31 = vector.shape_cast %30 : vector<1x6x3xbf16> to vector<6x3xbf16>
      %32 = vector.extract_strided_slice %3 {offsets = [0, 34], sizes = [3, 958], strides = [1, 1]} : vector<3x1024xbf16> to vector<3x958xbf16>
      %cst_20 = arith.constant dense<0.000000e+00> : vector<6x958xf32>
      %33 = tpu.matmul %31, %32, %cst_20 {dimension_numbers = #tpu.dot_dimension_numbers<[1], [0], [0], [1], [0, 0, 1, 1], [], []>} : vector<6x3xbf16>, vector<3x958xbf16>, vector<6x958xf32> -> vector<6x958xf32>
      %34 = arith.addf %29, %33 : vector<6x958xf32>
      %c6 = arith.constant 6 : index
      %c0_21 = arith.constant 0 : index
      %c0_22 = arith.constant 0 : index
      %35 = vector.load %arg2[%c6, %c0_21, %c0_22] : memref<9x6x3xbf16, #tpu.memory_space<vmem>>, vector<1x6x3xbf16>
      %36 = vector.shape_cast %35 : vector<1x6x3xbf16> to vector<6x3xbf16>
      %37 = vector.extract_strided_slice %3 {offsets = [0, 64], sizes = [3, 958], strides = [1, 1]} : vector<3x1024xbf16> to vector<3x958xbf16>
      %cst_23 = arith.constant dense<0.000000e+00> : vector<6x958xf32>
      %38 = tpu.matmul %36, %37, %cst_23 {dimension_numbers = #tpu.dot_dimension_numbers<[1], [0], [0], [1], [0, 0, 1, 1], [], []>} : vector<6x3xbf16>, vector<3x958xbf16>, vector<6x958xf32> -> vector<6x958xf32>
      %39 = arith.addf %34, %38 : vector<6x958xf32>
      %c7 = arith.constant 7 : index
      %c0_24 = arith.constant 0 : index
      %c0_25 = arith.constant 0 : index
      %40 = vector.load %arg2[%c7, %c0_24, %c0_25] : memref<9x6x3xbf16, #tpu.memory_space<vmem>>, vector<1x6x3xbf16>
      %41 = vector.shape_cast %40 : vector<1x6x3xbf16> to vector<6x3xbf16>
      %42 = vector.extract_strided_slice %3 {offsets = [0, 65], sizes = [3, 958], strides = [1, 1]} : vector<3x1024xbf16> to vector<3x958xbf16>
      %cst_26 = arith.constant dense<0.000000e+00> : vector<6x958xf32>
      %43 = tpu.matmul %41, %42, %cst_26 {dimension_numbers = #tpu.dot_dimension_numbers<[1], [0], [0], [1], [0, 0, 1, 1], [], []>} : vector<6x3xbf16>, vector<3x958xbf16>, vector<6x958xf32> -> vector<6x958xf32>
      %44 = arith.addf %39, %43 : vector<6x958xf32>
      %c8 = arith.constant 8 : index
      %c0_27 = arith.constant 0 : index
      %c0_28 = arith.constant 0 : index
      %45 = vector.load %arg2[%c8, %c0_27, %c0_28] : memref<9x6x3xbf16, #tpu.memory_space<vmem>>, vector<1x6x3xbf16>
      %46 = vector.shape_cast %45 : vector<1x6x3xbf16> to vector<6x3xbf16>
      %47 = vector.extract_strided_slice %3 {offsets = [0, 66], sizes = [3, 958], strides = [1, 1]} : vector<3x1024xbf16> to vector<3x958xbf16>
      %cst_29 = arith.constant dense<0.000000e+00> : vector<6x958xf32>
      %48 = tpu.matmul %46, %47, %cst_29 {dimension_numbers = #tpu.dot_dimension_numbers<[1], [0], [0], [1], [0, 0, 1, 1], [], []>} : vector<6x3xbf16>, vector<3x958xbf16>, vector<6x958xf32> -> vector<6x958xf32>
      %49 = arith.addf %44, %48 : vector<6x958xf32>
      %c0_30 = arith.constant 0 : index
      %c0_31 = arith.constant 0 : index
      %50 = vector.load %arg3[%c0_30, %c0_31] : memref<6x1xf32, #tpu.memory_space<vmem>>, vector<6x1xf32>
      %51 = vector.broadcast %50 : vector<6x1xf32> to vector<6x958xf32>
      %52 = arith.addf %49, %51 : vector<6x958xf32>
      %cst_32 = arith.constant 0.000000e+00 : f32
      %53 = vector.broadcast %cst_32 : f32 to vector<6x958xf32>
      %54 = arith.maximumf %52, %53 : vector<6x958xf32>
      %55 = vector.extract_strided_slice %54 {offsets = [0, 0], sizes = [6, 925], strides = [1, 1]} : vector<6x958xf32> to vector<6x925xf32>
      %56 = vector.extract_strided_slice %54 {offsets = [0, 1], sizes = [6, 925], strides = [1, 1]} : vector<6x958xf32> to vector<6x925xf32>
      %57 = arith.maximumf %55, %56 : vector<6x925xf32>
      %58 = vector.extract_strided_slice %54 {offsets = [0, 32], sizes = [6, 925], strides = [1, 1]} : vector<6x958xf32> to vector<6x925xf32>
      %59 = arith.maximumf %57, %58 : vector<6x925xf32>
      %60 = vector.extract_strided_slice %54 {offsets = [0, 33], sizes = [6, 925], strides = [1, 1]} : vector<6x958xf32> to vector<6x925xf32>
      %61 = arith.maximumf %59, %60 : vector<6x925xf32>
      %62 = arith.truncf %61 : vector<6x925xf32> to vector<6x925xbf16>
      %cst_33 = arith.constant 0.000000e+00 : f32
      %63 = vector.broadcast %cst_33 : f32 to vector<16x793xf32>
      %c0_34 = arith.constant 0 : index
      %c0_35 = arith.constant 0 : index
      %c0_36 = arith.constant 0 : index
      %64 = vector.load %arg4[%c0_34, %c0_35, %c0_36] : memref<9x16x6xbf16, #tpu.memory_space<vmem>>, vector<1x16x6xbf16>
      %65 = vector.shape_cast %64 : vector<1x16x6xbf16> to vector<16x6xbf16>
      %66 = vector.extract_strided_slice %62 {offsets = [0, 0], sizes = [6, 793], strides = [1, 1]} : vector<6x925xbf16> to vector<6x793xbf16>
      %cst_37 = arith.constant dense<0.000000e+00> : vector<16x793xf32>
      %67 = tpu.matmul %65, %66, %cst_37 {dimension_numbers = #tpu.dot_dimension_numbers<[1], [0], [0], [1], [0, 0, 1, 1], [], []>} : vector<16x6xbf16>, vector<6x793xbf16>, vector<16x793xf32> -> vector<16x793xf32>
      %68 = arith.addf %63, %67 : vector<16x793xf32>
      %c1_38 = arith.constant 1 : index
      %c0_39 = arith.constant 0 : index
      %c0_40 = arith.constant 0 : index
      %69 = vector.load %arg4[%c1_38, %c0_39, %c0_40] : memref<9x16x6xbf16, #tpu.memory_space<vmem>>, vector<1x16x6xbf16>
      %70 = vector.shape_cast %69 : vector<1x16x6xbf16> to vector<16x6xbf16>
      %71 = vector.extract_strided_slice %62 {offsets = [0, 2], sizes = [6, 793], strides = [1, 1]} : vector<6x925xbf16> to vector<6x793xbf16>
      %cst_41 = arith.constant dense<0.000000e+00> : vector<16x793xf32>
      %72 = tpu.matmul %70, %71, %cst_41 {dimension_numbers = #tpu.dot_dimension_numbers<[1], [0], [0], [1], [0, 0, 1, 1], [], []>} : vector<16x6xbf16>, vector<6x793xbf16>, vector<16x793xf32> -> vector<16x793xf32>
      %73 = arith.addf %68, %72 : vector<16x793xf32>
      %c2_42 = arith.constant 2 : index
      %c0_43 = arith.constant 0 : index
      %c0_44 = arith.constant 0 : index
      %74 = vector.load %arg4[%c2_42, %c0_43, %c0_44] : memref<9x16x6xbf16, #tpu.memory_space<vmem>>, vector<1x16x6xbf16>
      %75 = vector.shape_cast %74 : vector<1x16x6xbf16> to vector<16x6xbf16>
      %76 = vector.extract_strided_slice %62 {offsets = [0, 4], sizes = [6, 793], strides = [1, 1]} : vector<6x925xbf16> to vector<6x793xbf16>
      %cst_45 = arith.constant dense<0.000000e+00> : vector<16x793xf32>
      %77 = tpu.matmul %75, %76, %cst_45 {dimension_numbers = #tpu.dot_dimension_numbers<[1], [0], [0], [1], [0, 0, 1, 1], [], []>} : vector<16x6xbf16>, vector<6x793xbf16>, vector<16x793xf32> -> vector<16x793xf32>
      %78 = arith.addf %73, %77 : vector<16x793xf32>
      %c3_46 = arith.constant 3 : index
      %c0_47 = arith.constant 0 : index
      %c0_48 = arith.constant 0 : index
      %79 = vector.load %arg4[%c3_46, %c0_47, %c0_48] : memref<9x16x6xbf16, #tpu.memory_space<vmem>>, vector<1x16x6xbf16>
      %80 = vector.shape_cast %79 : vector<1x16x6xbf16> to vector<16x6xbf16>
      %81 = vector.extract_strided_slice %62 {offsets = [0, 64], sizes = [6, 793], strides = [1, 1]} : vector<6x925xbf16> to vector<6x793xbf16>
      %cst_49 = arith.constant dense<0.000000e+00> : vector<16x793xf32>
      %82 = tpu.matmul %80, %81, %cst_49 {dimension_numbers = #tpu.dot_dimension_numbers<[1], [0], [0], [1], [0, 0, 1, 1], [], []>} : vector<16x6xbf16>, vector<6x793xbf16>, vector<16x793xf32> -> vector<16x793xf32>
      %83 = arith.addf %78, %82 : vector<16x793xf32>
      %c4_50 = arith.constant 4 : index
      %c0_51 = arith.constant 0 : index
      %c0_52 = arith.constant 0 : index
      %84 = vector.load %arg4[%c4_50, %c0_51, %c0_52] : memref<9x16x6xbf16, #tpu.memory_space<vmem>>, vector<1x16x6xbf16>
      %85 = vector.shape_cast %84 : vector<1x16x6xbf16> to vector<16x6xbf16>
      %86 = vector.extract_strided_slice %62 {offsets = [0, 66], sizes = [6, 793], strides = [1, 1]} : vector<6x925xbf16> to vector<6x793xbf16>
      %cst_53 = arith.constant dense<0.000000e+00> : vector<16x793xf32>
      %87 = tpu.matmul %85, %86, %cst_53 {dimension_numbers = #tpu.dot_dimension_numbers<[1], [0], [0], [1], [0, 0, 1, 1], [], []>} : vector<16x6xbf16>, vector<6x793xbf16>, vector<16x793xf32> -> vector<16x793xf32>
      %88 = arith.addf %83, %87 : vector<16x793xf32>
      %c5_54 = arith.constant 5 : index
      %c0_55 = arith.constant 0 : index
      %c0_56 = arith.constant 0 : index
      %89 = vector.load %arg4[%c5_54, %c0_55, %c0_56] : memref<9x16x6xbf16, #tpu.memory_space<vmem>>, vector<1x16x6xbf16>
      %90 = vector.shape_cast %89 : vector<1x16x6xbf16> to vector<16x6xbf16>
      %91 = vector.extract_strided_slice %62 {offsets = [0, 68], sizes = [6, 793], strides = [1, 1]} : vector<6x925xbf16> to vector<6x793xbf16>
      %cst_57 = arith.constant dense<0.000000e+00> : vector<16x793xf32>
      %92 = tpu.matmul %90, %91, %cst_57 {dimension_numbers = #tpu.dot_dimension_numbers<[1], [0], [0], [1], [0, 0, 1, 1], [], []>} : vector<16x6xbf16>, vector<6x793xbf16>, vector<16x793xf32> -> vector<16x793xf32>
      %93 = arith.addf %88, %92 : vector<16x793xf32>
      %c6_58 = arith.constant 6 : index
      %c0_59 = arith.constant 0 : index
      %c0_60 = arith.constant 0 : index
      %94 = vector.load %arg4[%c6_58, %c0_59, %c0_60] : memref<9x16x6xbf16, #tpu.memory_space<vmem>>, vector<1x16x6xbf16>
      %95 = vector.shape_cast %94 : vector<1x16x6xbf16> to vector<16x6xbf16>
      %96 = vector.extract_strided_slice %62 {offsets = [0, 128], sizes = [6, 793], strides = [1, 1]} : vector<6x925xbf16> to vector<6x793xbf16>
      %cst_61 = arith.constant dense<0.000000e+00> : vector<16x793xf32>
      %97 = tpu.matmul %95, %96, %cst_61 {dimension_numbers = #tpu.dot_dimension_numbers<[1], [0], [0], [1], [0, 0, 1, 1], [], []>} : vector<16x6xbf16>, vector<6x793xbf16>, vector<16x793xf32> -> vector<16x793xf32>
      %98 = arith.addf %93, %97 : vector<16x793xf32>
      %c7_62 = arith.constant 7 : index
      %c0_63 = arith.constant 0 : index
      %c0_64 = arith.constant 0 : index
      %99 = vector.load %arg4[%c7_62, %c0_63, %c0_64] : memref<9x16x6xbf16, #tpu.memory_space<vmem>>, vector<1x16x6xbf16>
      %100 = vector.shape_cast %99 : vector<1x16x6xbf16> to vector<16x6xbf16>
      %101 = vector.extract_strided_slice %62 {offsets = [0, 130], sizes = [6, 793], strides = [1, 1]} : vector<6x925xbf16> to vector<6x793xbf16>
      %cst_65 = arith.constant dense<0.000000e+00> : vector<16x793xf32>
      %102 = tpu.matmul %100, %101, %cst_65 {dimension_numbers = #tpu.dot_dimension_numbers<[1], [0], [0], [1], [0, 0, 1, 1], [], []>} : vector<16x6xbf16>, vector<6x793xbf16>, vector<16x793xf32> -> vector<16x793xf32>
      %103 = arith.addf %98, %102 : vector<16x793xf32>
      %c8_66 = arith.constant 8 : index
      %c0_67 = arith.constant 0 : index
      %c0_68 = arith.constant 0 : index
      %104 = vector.load %arg4[%c8_66, %c0_67, %c0_68] : memref<9x16x6xbf16, #tpu.memory_space<vmem>>, vector<1x16x6xbf16>
      %105 = vector.shape_cast %104 : vector<1x16x6xbf16> to vector<16x6xbf16>
      %106 = vector.extract_strided_slice %62 {offsets = [0, 132], sizes = [6, 793], strides = [1, 1]} : vector<6x925xbf16> to vector<6x793xbf16>
      %cst_69 = arith.constant dense<0.000000e+00> : vector<16x793xf32>
      %107 = tpu.matmul %105, %106, %cst_69 {dimension_numbers = #tpu.dot_dimension_numbers<[1], [0], [0], [1], [0, 0, 1, 1], [], []>} : vector<16x6xbf16>, vector<6x793xbf16>, vector<16x793xf32> -> vector<16x793xf32>
      %108 = arith.addf %103, %107 : vector<16x793xf32>
      %c0_70 = arith.constant 0 : index
      %c0_71 = arith.constant 0 : index
      %109 = vector.load %arg5[%c0_70, %c0_71] : memref<16x1xf32, #tpu.memory_space<vmem>>, vector<16x1xf32>
      %110 = vector.broadcast %109 : vector<16x1xf32> to vector<16x793xf32>
      %111 = arith.addf %108, %110 : vector<16x793xf32>
      %cst_72 = arith.constant 0.000000e+00 : f32
      %112 = vector.broadcast %cst_72 : f32 to vector<16x793xf32>
      %113 = arith.maximumf %111, %112 : vector<16x793xf32>
      %114 = vector.extract_strided_slice %113 {offsets = [0, 0], sizes = [16, 661], strides = [1, 1]} : vector<16x793xf32> to vector<16x661xf32>
      %115 = vector.extract_strided_slice %113 {offsets = [0, 2], sizes = [16, 661], strides = [1, 1]} : vector<16x793xf32> to vector<16x661xf32>
      %116 = arith.maximumf %114, %115 : vector<16x661xf32>
      %117 = vector.extract_strided_slice %113 {offsets = [0, 64], sizes = [16, 661], strides = [1, 1]} : vector<16x793xf32> to vector<16x661xf32>
      %118 = arith.maximumf %116, %117 : vector<16x661xf32>
      %119 = vector.extract_strided_slice %113 {offsets = [0, 66], sizes = [16, 661], strides = [1, 1]} : vector<16x793xf32> to vector<16x661xf32>
      %120 = arith.maximumf %118, %119 : vector<16x661xf32>
      %121 = arith.truncf %120 : vector<16x661xf32> to vector<16x661xbf16>
      %122 = arith.index_cast %arg7 : i32 to index
      %c0_73 = arith.constant 0 : index
      %c0_74 = arith.constant 0 : index
      %123 = vector.load %arg6[%122, %c0_73, %c0_74] : memref<32x16x661xbf16, #tpu.memory_space<vmem>>, vector<1x16x661xbf16>
      %124 = vector.shape_cast %123 : vector<1x16x661xbf16> to vector<16x661xbf16>
      %125 = vector.shape_cast %121 : vector<16x661xbf16> to vector<1x16x661xbf16>
      tpu.vector_store %arg6[%122, %c0_73, %c0_74], %125 {strides = array<i32>} : memref<32x16x661xbf16, #tpu.memory_space<vmem>>, vector<1x16x661xbf16>,
    }
    %c32_i32_0 = arith.constant 32 : i32
    return
  }
  func.func @transform_0(%arg0: i32) -> (i32, i32, i32) {
    %c0_i32 = arith.constant 0 : i32
    %c0_i32_0 = arith.constant 0 : i32
    %c0_i32_1 = arith.constant 0 : i32
    return %arg0, %c0_i32, %c0_i32_0 : i32, i32, i32
  }
  func.func @transform_1(%arg0: i32) -> (i32, i32, i32) {
    %c0_i32 = arith.constant 0 : i32
    %c0_i32_0 = arith.constant 0 : i32
    %c0_i32_1 = arith.constant 0 : i32
    %c0_i32_2 = arith.constant 0 : i32
    return %c0_i32, %c0_i32_0, %c0_i32_1 : i32, i32, i32
  }
  func.func @transform_2(%arg0: i32) -> (i32, i32) {
    %c0_i32 = arith.constant 0 : i32
    %c0_i32_0 = arith.constant 0 : i32
    %c0_i32_1 = arith.constant 0 : i32
    return %c0_i32, %c0_i32_0 : i32, i32
  }
  func.func @transform_3(%arg0: i32) -> (i32, i32, i32) {
    %c0_i32 = arith.constant 0 : i32
    %c0_i32_0 = arith.constant 0 : i32
    %c0_i32_1 = arith.constant 0 : i32
    %c0_i32_2 = arith.constant 0 : i32
    return %c0_i32, %c0_i32_0, %c0_i32_1 : i32, i32, i32
  }
  func.func @transform_4(%arg0: i32) -> (i32, i32) {
    %c0_i32 = arith.constant 0 : i32
    %c0_i32_0 = arith.constant 0 : i32
    %c0_i32_1 = arith.constant 0 : i32
    return %c0_i32, %c0_i32_0 : i32, i32
  }
  func.func @transform_5(%arg0: i32) -> (i32, i32, i32) {
    %c0_i32 = arith.constant 0 : i32
    %c0_i32_0 = arith.constant 0 : i32
    %c0_i32_1 = arith.constant 0 : i32
    return %arg0, %c0_i32, %c0_i32_0 : i32, i32, i32
  }
}

module attributes {stable_mosaic.version = 11 : i64} {
  func.func @_mlp_kernel(%arg0: i32, %arg1: memref<32x576xbf16, #tpu.memory_space<vmem>>, %arg2: memref<576x120xbf16, #tpu.memory_space<vmem>>, %arg3: memref<1x120xf32, #tpu.memory_space<vmem>>, %arg4: memref<120x84xbf16, #tpu.memory_space<vmem>>, %arg5: memref<1x84xf32, #tpu.memory_space<vmem>>, %arg6: memref<84x128xbf16, #tpu.memory_space<vmem>>, %arg7: memref<1x128xf32, #tpu.memory_space<vmem>>, %arg8: memref<32x128xf32, #tpu.memory_space<vmem>>) attributes {dimension_semantics = [#tpu.dimension_semantics<parallel>], iteration_bounds = array<i64: 2>, scalar_prefetch = 0 : i64, scratch_operands = 0 : i64, tpu.core_type = #tpu.core_type<tc>, window_params = [{transform_indices = @transform_0, window_bounds = array<i64: 32, 576>}, {pipeline_mode = #tpu.pipeline_mode<synchronous>, transform_indices = @transform_1, window_bounds = array<i64: 576, 120>}, {pipeline_mode = #tpu.pipeline_mode<synchronous>, transform_indices = @transform_2, window_bounds = array<i64: 1, 120>}, {pipeline_mode = #tpu.pipeline_mode<synchronous>, transform_indices = @transform_3, window_bounds = array<i64: 120, 84>}, {pipeline_mode = #tpu.pipeline_mode<synchronous>, transform_indices = @transform_4, window_bounds = array<i64: 1, 84>}, {pipeline_mode = #tpu.pipeline_mode<synchronous>, transform_indices = @transform_5, window_bounds = array<i64: 84, 128>}, {pipeline_mode = #tpu.pipeline_mode<synchronous>, transform_indices = @transform_6, window_bounds = array<i64: 1, 128>}, {transform_indices = @transform_7, window_bounds = array<i64: 32, 128>}]} {
    %c0 = arith.constant 0 : index
    %c0_0 = arith.constant 0 : index
    %0 = vector.load %arg1[%c0, %c0_0] : memref<32x576xbf16, #tpu.memory_space<vmem>>, vector<32x576xbf16>
    %c0_1 = arith.constant 0 : index
    %c0_2 = arith.constant 0 : index
    %1 = vector.load %arg2[%c0_1, %c0_2] : memref<576x120xbf16, #tpu.memory_space<vmem>>, vector<576x120xbf16>
    %cst = arith.constant dense<0.000000e+00> : vector<32x120xf32>
    %2 = tpu.matmul %0, %1, %cst {dimension_numbers = #tpu.dot_dimension_numbers<[1], [0], [0], [1], [0, 0, 1, 1], [], []>} : vector<32x576xbf16>, vector<576x120xbf16>, vector<32x120xf32> -> vector<32x120xf32>
    %c0_3 = arith.constant 0 : index
    %c0_4 = arith.constant 0 : index
    %3 = vector.load %arg3[%c0_3, %c0_4] : memref<1x120xf32, #tpu.memory_space<vmem>>, vector<1x120xf32>
    %4 = vector.broadcast %3 : vector<1x120xf32> to vector<32x120xf32>
    %5 = arith.addf %2, %4 : vector<32x120xf32>
    %cst_5 = arith.constant 0.000000e+00 : f32
    %6 = vector.broadcast %cst_5 : f32 to vector<32x120xf32>
    %7 = arith.maximumf %5, %6 : vector<32x120xf32>
    %8 = arith.truncf %7 : vector<32x120xf32> to vector<32x120xbf16>
    %c0_6 = arith.constant 0 : index
    %c0_7 = arith.constant 0 : index
    %9 = vector.load %arg4[%c0_6, %c0_7] : memref<120x84xbf16, #tpu.memory_space<vmem>>, vector<120x84xbf16>
    %cst_8 = arith.constant dense<0.000000e+00> : vector<32x84xf32>
    %10 = tpu.matmul %8, %9, %cst_8 {dimension_numbers = #tpu.dot_dimension_numbers<[1], [0], [0], [1], [0, 0, 1, 1], [], []>} : vector<32x120xbf16>, vector<120x84xbf16>, vector<32x84xf32> -> vector<32x84xf32>
    %c0_9 = arith.constant 0 : index
    %c0_10 = arith.constant 0 : index
    %11 = vector.load %arg5[%c0_9, %c0_10] : memref<1x84xf32, #tpu.memory_space<vmem>>, vector<1x84xf32>
    %12 = vector.broadcast %11 : vector<1x84xf32> to vector<32x84xf32>
    %13 = arith.addf %10, %12 : vector<32x84xf32>
    %cst_11 = arith.constant 0.000000e+00 : f32
    %14 = vector.broadcast %cst_11 : f32 to vector<32x84xf32>
    %15 = arith.maximumf %13, %14 : vector<32x84xf32>
    %16 = arith.truncf %15 : vector<32x84xf32> to vector<32x84xbf16>
    %c0_12 = arith.constant 0 : index
    %c0_13 = arith.constant 0 : index
    %17 = vector.load %arg6[%c0_12, %c0_13] : memref<84x128xbf16, #tpu.memory_space<vmem>>, vector<84x128xbf16>
    %cst_14 = arith.constant dense<0.000000e+00> : vector<32x128xf32>
    %18 = tpu.matmul %16, %17, %cst_14 {dimension_numbers = #tpu.dot_dimension_numbers<[1], [0], [0], [1], [0, 0, 1, 1], [], []>} : vector<32x84xbf16>, vector<84x128xbf16>, vector<32x128xf32> -> vector<32x128xf32>
    %c0_15 = arith.constant 0 : index
    %c0_16 = arith.constant 0 : index
    %19 = vector.load %arg7[%c0_15, %c0_16] : memref<1x128xf32, #tpu.memory_space<vmem>>, vector<1x128xf32>
    %20 = vector.broadcast %19 : vector<1x128xf32> to vector<32x128xf32>
    %21 = arith.addf %18, %20 : vector<32x128xf32>
    %c0_17 = arith.constant 0 : index
    %c0_18 = arith.constant 0 : index
    %22 = vector.load %arg8[%c0_17, %c0_18] : memref<32x128xf32, #tpu.memory_space<vmem>>, vector<32x128xf32>
    tpu.vector_store %arg8[%c0_17, %c0_18], %21 {strides = array<i32>} : memref<32x128xf32, #tpu.memory_space<vmem>>, vector<32x128xf32>,
    return
  }
  func.func @transform_0(%arg0: i32) -> (i32, i32) {
    %c0_i32 = arith.constant 0 : i32
    %c0_i32_0 = arith.constant 0 : i32
    return %arg0, %c0_i32 : i32, i32
  }
  func.func @transform_1(%arg0: i32) -> (i32, i32) {
    %c0_i32 = arith.constant 0 : i32
    %c0_i32_0 = arith.constant 0 : i32
    %c0_i32_1 = arith.constant 0 : i32
    return %c0_i32, %c0_i32_0 : i32, i32
  }
  func.func @transform_2(%arg0: i32) -> (i32, i32) {
    %c0_i32 = arith.constant 0 : i32
    %c0_i32_0 = arith.constant 0 : i32
    %c0_i32_1 = arith.constant 0 : i32
    return %c0_i32, %c0_i32_0 : i32, i32
  }
  func.func @transform_3(%arg0: i32) -> (i32, i32) {
    %c0_i32 = arith.constant 0 : i32
    %c0_i32_0 = arith.constant 0 : i32
    %c0_i32_1 = arith.constant 0 : i32
    return %c0_i32, %c0_i32_0 : i32, i32
  }
  func.func @transform_4(%arg0: i32) -> (i32, i32) {
    %c0_i32 = arith.constant 0 : i32
    %c0_i32_0 = arith.constant 0 : i32
    %c0_i32_1 = arith.constant 0 : i32
    return %c0_i32, %c0_i32_0 : i32, i32
  }
  func.func @transform_5(%arg0: i32) -> (i32, i32) {
    %c0_i32 = arith.constant 0 : i32
    %c0_i32_0 = arith.constant 0 : i32
    %c0_i32_1 = arith.constant 0 : i32
    return %c0_i32, %c0_i32_0 : i32, i32
  }
  func.func @transform_6(%arg0: i32) -> (i32, i32) {
    %c0_i32 = arith.constant 0 : i32
    %c0_i32_0 = arith.constant 0 : i32
    %c0_i32_1 = arith.constant 0 : i32
    return %c0_i32, %c0_i32_0 : i32, i32
  }
  func.func @transform_7(%arg0: i32) -> (i32, i32) {
    %c0_i32 = arith.constant 0 : i32
    %c0_i32_0 = arith.constant 0 : i32
    return %arg0, %c0_i32 : i32, i32
  }
}

</mosaic_0001>

<llo_original>
// kernel: lenet_forward.2
$region0: #{lenet_forward.2}
  #allocation0 [shape = 'u32[]', space=smem, size = 0x4, offset = 0x4, fixed_abs, tag = 'smem constant byte address 0x4 - core index']
  #allocation1 [shape = 'u32[72,128]{1,0:T(1,128)}', space=vmem, size = 0x9000, scoped, tag = 'internal scratch']
  %s0 = inlined_call_operand.vmem [shape: bf16[64,3,1024], index: 0, kind: input, shape index: {}]
  %s1 = inlined_call_operand.vmem [shape: bf16[9,6,3], index: 1, kind: input, shape index: {}]
  %s2 = inlined_call_operand.vmem [shape: f32[6,1], index: 2, kind: input, shape index: {}]
  %s3 = inlined_call_operand.vmem [shape: bf16[9,16,6], index: 3, kind: input, shape index: {}]
  %s4 = inlined_call_operand.vmem [shape: f32[16,1], index: 4, kind: input, shape index: {}]
  %s5 = inlined_call_operand.vmem [shape: bf16[64,16,661], index: 5, kind: output, shape index: {}]
  %s6 = sld [smem:[#allocation0]]
  $region60: #{lenet_forward.2} parent=0
    _
  %s8 = ssub.s32 1, %s6
  %s9 = scalar_select 0, %s8, %s6
  loop: start=0, step=1, limit=4
  $region2: #{lenet_forward.2} parent=0 // loop_pre_header
    _
  $region3: #{lenet_forward.2} parent=0 // loop_header
    %s11 = sphi 0, %s15
    %p12 = scmp.ge.s32.totalorder %s11, 4
    %s21 = sphi 0, %s23
    %s24 = sphi 0, %s21
    %s25 = sphi 0, %s24
    %s41 = sphi 0, %s25
    %s45 = sphi 0, %s45
    %s47 = sphi 0, %s45
    %s48 = sphi 0, %s47
    %s62 = sphi 0, %s48
    %s66 = sphi 0, %s66
    %s68 = sphi 0, %s66
    %s69 = sphi 0, %s68
    %s83 = sphi 0, %s69
    %s87 = sphi 0, %s87
    %s89 = sphi 0, %s87
    %s90 = sphi 0, %s89
    %s104 = sphi 0, %s90
    %s108 = sphi 0, %s108
    %s110 = sphi 0, %s108
    %s111 = sphi 0, %s110
    %s125 = sphi 0, %s111
    %s131 = sphi 0, %s133
    %s134 = sphi 0, %s131
    %s135 = sphi 0, %s134
    %s151 = sphi 0, %s135
  $region4: #{lenet_forward.2} parent=0 // loop_header_branch
    %14 = sbr.rel (%p12) target = $region8
  $region5: #{lenet_forward.2} parent=0 // loop_body
    %s16 = ssub.s32 %s11, 1
    %s17 = ssub.s32 %s11, 2
    %s18 = sadd.s32 %s11, 1
    %s19 = ssub.s32 %s11, %s18
    %p20 = scmp.eq.s32.totalorder %s19, 0
    %s22 = sadd.s32 %s21, 1
    %s23 = scalar_select %p20, %s21, %s22
    %p26 = pneg %p20
    %p27 = scmp.eq.s32.totalorder %s11, 1
    %p28 = por %p26, %p27
    %p29 = scmp.ne.s32.totalorder %s21, %s24
    %p30 = scmp.eq.s32.totalorder %s11, 0
    %p31 = por %p29, %p30
    %p32 = scmp.ne.s32.totalorder %s21, %s24
    %p33 = scmp.eq.s32.totalorder %s16, 1
    %p34 = por %p32, %p33
    %p35 = scmp.ne.s32.totalorder %s24, %s25
    %p36 = scmp.eq.s32.totalorder %s16, 0
    %p37 = por %p35, %p36
    %p38 = scmp.ne.s32.totalorder %s24, %s25
    %p39 = scmp.eq.s32.totalorder %s17, 1
    %p40 = por %p38, %p39
    %p42 = scmp.ne.s32.totalorder %s25, %s41
    %p43 = scmp.eq.s32.totalorder %s17, 0
    %p44 = por %p42, %p43
    %s46 = sadd.s32 %s45, 1
    %p49 = scmp.eq.s32.totalorder %s11, 1
    %p50 = scmp.ne.s32.totalorder %s45, %s47
    %p51 = scmp.eq.s32.totalorder %s11, 0
    %p52 = por %p50, %p51
    %p53 = scmp.ne.s32.totalorder %s45, %s47
    %p54 = scmp.eq.s32.totalorder %s16, 1
    %p55 = por %p53, %p54
    %p56 = scmp.ne.s32.totalorder %s47, %s48
    %p57 = scmp.eq.s32.totalorder %s16, 0
    %p58 = por %p56, %p57
    %p59 = scmp.ne.s32.totalorder %s47, %s48
    %p60 = scmp.eq.s32.totalorder %s17, 1
    %p61 = por %p59, %p60
    %p63 = scmp.ne.s32.totalorder %s48, %s62
    %p64 = scmp.eq.s32.totalorder %s17, 0
    %p65 = por %p63, %p64
    %s67 = sadd.s32 %s66, 1
    %p70 = scmp.eq.s32.totalorder %s11, 1
    %p71 = scmp.ne.s32.totalorder %s66, %s68
    %p72 = scmp.eq.s32.totalorder %s11, 0
    %p73 = por %p71, %p72
    %p74 = scmp.ne.s32.totalorder %s66, %s68
    %p75 = scmp.eq.s32.totalorder %s16, 1
    %p76 = por %p74, %p75
    %p77 = scmp.ne.s32.totalorder %s68, %s69
    %p78 = scmp.eq.s32.totalorder %s16, 0
    %p79 = por %p77, %p78
    %p80 = scmp.ne.s32.totalorder %s68, %s69
    %p81 = scmp.eq.s32.totalorder %s17, 1
    %p82 = por %p80, %p81
    %p84 = scmp.ne.s32.totalorder %s69, %s83
    %p85 = scmp.eq.s32.totalorder %s17, 0
    %p86 = por %p84, %p85
    %s88 = sadd.s32 %s87, 1
    %p91 = scmp.eq.s32.totalorder %s11, 1
    %p92 = scmp.ne.s32.totalorder %s87, %s89
    %p93 = scmp.eq.s32.totalorder %s11, 0
    %p94 = por %p92, %p93
    %p95 = scmp.ne.s32.totalorder %s87, %s89
    %p96 = scmp.eq.s32.totalorder %s16, 1
    %p97 = por %p95, %p96
    %p98 = scmp.ne.s32.totalorder %s89, %s90
    %p99 = scmp.eq.s32.totalorder %s16, 0
    %p100 = por %p98, %p99
    %p101 = scmp.ne.s32.totalorder %s89, %s90
    %p102 = scmp.eq.s32.totalorder %s17, 1
    %p103 = por %p101, %p102
    %p105 = scmp.ne.s32.totalorder %s90, %s104
    %p106 = scmp.eq.s32.totalorder %s17, 0
    %p107 = por %p105, %p106
    %s109 = sadd.s32 %s108, 1
    %p112 = scmp.eq.s32.totalorder %s11, 1
    %p113 = scmp.ne.s32.totalorder %s108, %s110
    %p114 = scmp.eq.s32.totalorder %s11, 0
    %p115 = por %p113, %p114
    %p116 = scmp.ne.s32.totalorder %s108, %s110
    %p117 = scmp.eq.s32.totalorder %s16, 1
    %p118 = por %p116, %p117
    %p119 = scmp.ne.s32.totalorder %s110, %s111
    %p120 = scmp.eq.s32.totalorder %s16, 0
    %p121 = por %p119, %p120
    %p122 = scmp.ne.s32.totalorder %s110, %s111
    %p123 = scmp.eq.s32.totalorder %s17, 1
    %p124 = por %p122, %p123
    %p126 = scmp.ne.s32.totalorder %s111, %s125
    %p127 = scmp.eq.s32.totalorder %s17, 0
    %p128 = por %p126, %p127
    %s129 = ssub.s32 %s11, %s18
    %p130 = scmp.eq.s32.totalorder %s129, 0
    %s132 = sadd.s32 %s131, 1
    %s133 = scalar_select %p130, %s131, %s132
    %p136 = pneg %p130
    %p137 = scmp.eq.s32.totalorder %s11, 1
    %p138 = por %p136, %p137
    %p139 = scmp.ne.s32.totalorder %s131, %s134
    %p140 = scmp.eq.s32.totalorder %s11, 0
    %p141 = por %p139, %p140
    %p142 = scmp.ne.s32.totalorder %s131, %s134
    %p143 = scmp.eq.s32.totalorder %s16, 1
    %p144 = por %p142, %p143
    %p145 = scmp.ne.s32.totalorder %s134, %s135
    %p146 = scmp.eq.s32.totalorder %s16, 0
    %p147 = por %p145, %p146
    %p148 = scmp.ne.s32.totalorder %s134, %s135
    %p149 = scmp.eq.s32.totalorder %s17, 1
    %p150 = por %p148, %p149
    %p152 = scmp.ne.s32.totalorder %s135, %s151
    %p153 = scmp.eq.s32.totalorder %s17, 0
    %p154 = por %p152, %p153
    %p155 = scmp.le.s32.totalorder 1, %s11
    %p156 = scmp.lt.s32.totalorder %s11, 3
    %p157 = pnand %p155, %p156
    %p158 = pneg %p157
    // Predicated region
    $region9: #{lenet_forward.2} parent=5 // pred_check
      _
    $region10: #{lenet_forward.2} parent=5 // pred_check_branch
      %160 = sbr.rel (%p157) target = $region12
    $region11: #{lenet_forward.2} parent=5 // pred_region
      %s161 = ssub.s32 %s11, 1
      // Predicated region
      $region13: #{lenet_forward.2} parent=11 // pred_check
        %p162 = pneg %p58
      $region14: #{lenet_forward.2} parent=11 // pred_check_branch
        %164 = sbr.rel (%p162) target = $region16
      $region15: #{lenet_forward.2} parent=11 // pred_region
        _
      $region16: #{lenet_forward.2} parent=11 // pred_fallthru
        _
      // Predicated region
      $region17: #{lenet_forward.2} parent=11 // pred_check
        %p165 = pneg %p79
      $region18: #{lenet_forward.2} parent=11 // pred_check_branch
        %167 = sbr.rel (%p165) target = $region20
      $region19: #{lenet_forward.2} parent=11 // pred_region
        _
      $region20: #{lenet_forward.2} parent=11 // pred_fallthru
        _
      // Predicated region
      $region21: #{lenet_forward.2} parent=11 // pred_check
        %p168 = pneg %p100
      $region22: #{lenet_forward.2} parent=11 // pred_check_branch
        %170 = sbr.rel (%p168) target = $region24
      $region23: #{lenet_forward.2} parent=11 // pred_region
        _
      $region24: #{lenet_forward.2} parent=11 // pred_fallthru
        _
      // Predicated region
      $region25: #{lenet_forward.2} parent=11 // pred_check
        %p171 = pneg %p121
      $region26: #{lenet_forward.2} parent=11 // pred_check_branch
        %173 = sbr.rel (%p171) target = $region28
      $region27: #{lenet_forward.2} parent=11 // pred_region
        _
      $region28: #{lenet_forward.2} parent=11 // pred_fallthru
        _
    $region12: #{lenet_forward.2} parent=5 // pred_fallthru
      _
    %p174 = scmp.lt.s32.totalorder %s11, 2
    // Predicated region
    $region29: #{lenet_forward.2} parent=5 // pred_check
      %p175 = pneg %p174
    $region30: #{lenet_forward.2} parent=5 // pred_check_branch
      %177 = sbr.rel (%p175) target = $region32
    $region31: #{lenet_forward.2} parent=5 // pred_region
      // Predicated region
      $region33: #{lenet_forward.2} parent=31 // pred_check
        %p178 = pneg %p31
      $region34: #{lenet_forward.2} parent=31 // pred_check_branch
        %180 = sbr.rel (%p178) target = $region36
      $region35: #{lenet_forward.2} parent=31 // pred_region
        %s181 = smul.u32 32, %s11
        %p182 = scmp.lt.s32.totalorder %s181, 63
        %s183 = scalar_select %p182, %s181, 63
        %s184 = smul.addr %s183, 8
        %s185 = smul.addr %s184, 2
        %s186 = scalar_lea.vmem %s0, %s185
        %s187 = smul.u32 32, %s11
      $region36: #{lenet_forward.2} parent=31 // pred_fallthru
        _
    $region32: #{lenet_forward.2} parent=5 // pred_fallthru
      _
    %p188 = scmp.le.s32.totalorder 1, %s11
    %p189 = scmp.lt.s32.totalorder %s11, 3
    %p190 = pnand %p188, %p189
    %p191 = pneg %p190
    // Predicated region
    $region37: #{lenet_forward.2} parent=5 // pred_check
      _
    $region38: #{lenet_forward.2} parent=5 // pred_check_branch
      %193 = sbr.rel (%p190) target = $region40
    $region39: #{lenet_forward.2} parent=5 // pred_region
      %s194 = ssub.s32 %s11, 1
      %s195 = smul.u32 32, %s16
      %p196 = scmp.lt.s32.totalorder %s195, 63
      %s197 = scalar_select %p196, %s195, 63
      %s198 = smul.addr %s197, 8
      %s199 = smul.addr %s198, 2
      %s200 = scalar_lea.vmem %s0, %s199
      %p201 = pneg %p37
      %p202 = pneg %p34
      %p203 = pneg %p58
      %p204 = pneg %p55
      %p205 = pneg %p79
      %p206 = pneg %p76
      %p207 = pneg %p100
      %p208 = pneg %p97
      %p209 = pneg %p121
      %p210 = pneg %p118
      %p211 = pneg %p147
      %p212 = pneg %p144
      %s213 = smul.u32 32, %s16
      %p214 = scmp.lt.s32.totalorder %s213, 63
      %s215 = scalar_select %p214, %s213, 63
      %s216 = smul.addr %s215, 12
      %s217 = smul.addr %s216, 4
      %s218 = scalar_lea.vmem %s5, %s217
      %s219 = smul.u32 32, %s16
      %p220 = scmp.lt.s32.totalorder %s219, 63
      %s221 = scalar_select %p220, %s219, 63
      %s222 = smul.addr %s221, 8
      %s223 = smul.addr %s222, 2
      %s224 = scalar_lea.vmem %s0, %s223
      %s225 = smul.u32 32, %s16
      %s226 = smul.u32 32, %s16
      %p227 = scmp.lt.s32.totalorder %s226, 63
      %s228 = scalar_select %p227, %s226, 63
      %s229 = smul.addr %s228, 12
      %s230 = smul.addr %s229, 4
      %s231 = scalar_lea.vmem %s5, %s230
      %s232 = smul.u32 32, %s16
      loop: start=0, step=1, limit=32
      $region41: #{lenet_forward.2} parent=39 // loop_pre_header
        _
      $region42: #{lenet_forward.2} parent=39 // loop_header
        %s235 = sphi 0, %s239
        %p236 = scmp.ge.s32.totalorder %s235, 32
      $region43: #{lenet_forward.2} parent=39 // loop_header_branch
        %238 = sbr.rel (%p236) target = $region47
      $region44: #{lenet_forward.2} parent=39 // loop_body
        %s240 = smul.u32 %s235, 8
        %s241 = smul.addr %s240, 2
        %s242 = scalar_lea.vmem %s224, %s241
        %v243 = vld [vmem:[%s242] sm:$0xff]
        %v244 = vld [vmem:[%s242 + $0x8] sm:$0xff]
        %v245 = vld [vmem:[%s1] sm:$0x7]
        %s246 = scalar_lea.vmem %s1, 4
        %v247 = vld [vmem:[%s246] sm:$0x7]
        %249 = vst [vmem:[#allocation1] ss:$4 sm:$0xff] %v243
        %s251 = scalar_lea.vmem [#allocation1], 32
        %252 = vst [vmem:[%s251] ss:$4 sm:$0xff] %v244
        %v253 = vld.sshfl [vmem:[#allocation1] sm:$0xff pattern:$0x73625140]
        %v255 = vld.sshfl [vmem:[#allocation1 + $0x8] sm:$0xff pattern:$0x73625140]
        %v257 = vld.sshfl [vmem:[#allocation1 + $0x10] sm:$0xff pattern:$0x73625140]
        %v259 = vld.sshfl [vmem:[#allocation1 + $0x18] sm:$0xff pattern:$0x73625140]
        %v261 = vld.sshfl [vmem:[#allocation1 + $0x20] sm:$0xff pattern:$0x73625140]
        %v263 = vld.sshfl [vmem:[#allocation1 + $0x28] sm:$0xff pattern:$0x73625140]
        %v265 = vld.sshfl [vmem:[#allocation1 + $0x30] sm:$0xff pattern:$0x73625140]
        %v267 = vld.sshfl [vmem:[#allocation1 + $0x38] sm:$0xff pattern:$0x73625140]
        %269 = vrot.lane.b32.xlu0 %v253, 127
        %v270 = vpop.permute.xlu0 %269
        %271 = vrot.lane.b32.xlu0 %v255, 127
        %v272 = vpop.permute.xlu0 %271
        %273 = vrot.lane.b32.xlu0 %v257, 127
        %v274 = vpop.permute.xlu0 %273
        %275 = vrot.lane.b32.xlu0 %v259, 127
        %v276 = vpop.permute.xlu0 %275
        %277 = vrot.lane.b32.xlu0 %v261, 127
        %v278 = vpop.permute.xlu0 %277
        %279 = vrot.lane.b32.xlu0 %v263, 127
        %v280 = vpop.permute.xlu0 %279
        %281 = vrot.lane.b32.xlu0 %v265, 127
        %v282 = vpop.permute.xlu0 %281
        %283 = vrot.lane.b32.xlu0 %v267, 127
        %v284 = vpop.permute.xlu0 %283
        %vm285 = vcmask 1039360
        %v286 = vsel %vm285, %v270, %v272
        %v287 = vsel %vm285, %v272, %v274
        %v288 = vsel %vm285, %v274, %v276
        %v289 = vsel %vm285, %v276, %v278
        %v290 = vsel %vm285, %v278, %v280
        %v291 = vsel %vm285, %v280, %v282
        %v292 = vsel %vm285, %v282, %v284
        %vm293 = vcmask 23552
        %v295 = vsel %vm293, %v247, 0
        %vm297 = vcmask 1040384
        %vm298 = vcmask 1041408
        %v299 = vsel %vm297, 4294967295, 65535
        %v300 = vsel %vm298, %v299, 0
        %v302 = vand.u32 %v286, %v300
        %v305 = vand.u32 %v287, %v300
        %v308 = vand.u32 %v288, %v300
        %v311 = vand.u32 %v289, %v300
        %v314 = vand.u32 %v290, %v300
        %v317 = vand.u32 %v291, %v300
        %v320 = vand.u32 %v292, %v300
        %v323 = vand.u32 %v284, %v300
        %325 = vmatpush.bf16.msra.mxu0 0
        %326 = vmatpush.bf16.msra.mxu0 0
        %327 = vmatpush.bf16.msra.mxu0 0
        %328 = vmatpush.bf16.msra.mxu0 0
        %329 = vmatpush.bf16.msra.mxu0 0
        %330 = vmatpush.bf16.msra.mxu0 0
        %331 = vmatpush.bf16.msra.mxu0 0
        %332 = vmatpush.bf16.msra.mxu0 %v302
        %333 = vmatmul.bf16.gmra.mxu0 %v295
        %v334 = vpop.f32.mrf.mxu0
        %v335 = vadd.f32 0.0, %v334
        %v336 = vpop.f32.mrf.mxu0
        %337 = vdwg.mxu0
        %338 = vmatpush.bf16.msra.mxu0 0
        %339 = vmatpush.bf16.msra.mxu0 0
        %340 = vmatpush.bf16.msra.mxu0 0
        %341 = vmatpush.bf16.msra.mxu0 0
        %342 = vmatpush.bf16.msra.mxu0 0
        %343 = vmatpush.bf16.msra.mxu0 0
        %344 = vmatpush.bf16.msra.mxu0 0
        %345 = vmatpush.bf16.msra.mxu0 %v305
        %346 = vmatmul.bf16.gmra.mxu0 %v295
        %v347 = vpop.f32.mrf.mxu0
        %v348 = vadd.f32 0.0, %v347
        %v349 = vpop.f32.mrf.mxu0
        %350 = vdwg.mxu0
        %351 = vmatpush.bf16.msra.mxu0 0
        %352 = vmatpush.bf16.msra.mxu0 0
        %353 = vmatpush.bf16.msra.mxu0 0
        %354 = vmatpush.bf16.msra.mxu0 0
        %355 = vmatpush.bf16.msra.mxu0 0
        %356 = vmatpush.bf16.msra.mxu0 0
        %357 = vmatpush.bf16.msra.mxu0 0
        %358 = vmatpush.bf16.msra.mxu0 %v308
        %359 = vmatmul.bf16.gmra.mxu0 %v295
        %v360 = vpop.f32.mrf.mxu0
        %v361 = vadd.f32 0.0, %v360
        %v362 = vpop.f32.mrf.mxu0
        %363 = vdwg.mxu0
        %364 = vmatpush.bf16.msra.mxu0 0
        %365 = vmatpush.bf16.msra.mxu0 0
        %366 = vmatpush.bf16.msra.mxu0 0
        %367 = vmatpush.bf16.msra.mxu0 0
        %368 = vmatpush.bf16.msra.mxu0 0
        %369 = vmatpush.bf16.msra.mxu0 0
        %370 = vmatpush.bf16.msra.mxu0 0
        %371 = vmatpush.bf16.msra.mxu0 %v311
        %372 = vmatmul.bf16.gmra.mxu0 %v295
        %v373 = vpop.f32.mrf.mxu0
        %v374 = vadd.f32 0.0, %v373
        %v375 = vpop.f32.mrf.mxu0
        %376 = vdwg.mxu0
        %377 = vmatpush.bf16.msra.mxu0 0
        %378 = vmatpush.bf16.msra.mxu0 0
        %379 = vmatpush.bf16.msra.mxu0 0
        %380 = vmatpush.bf16.msra.mxu0 0
        %381 = vmatpush.bf16.msra.mxu0 0
        %382 = vmatpush.bf16.msra.mxu0 0
        %383 = vmatpush.bf16.msra.mxu0 0
        %384 = vmatpush.bf16.msra.mxu0 %v314
        %385 = vmatmul.bf16.gmra.mxu0 %v295
        %v386 = vpop.f32.mrf.mxu0
        %v387 = vadd.f32 0.0, %v386
        %v388 = vpop.f32.mrf.mxu0
        %389 = vdwg.mxu0
        %390 = vmatpush.bf16.msra.mxu0 0
        %391 = vmatpush.bf16.msra.mxu0 0
        %392 = vmatpush.bf16.msra.mxu0 0
        %393 = vmatpush.bf16.msra.mxu0 0
        %394 = vmatpush.bf16.msra.mxu0 0
        %395 = vmatpush.bf16.msra.mxu0 0
        %396 = vmatpush.bf16.msra.mxu0 0
        %397 = vmatpush.bf16.msra.mxu0 %v317
        %398 = vmatmul.bf16.gmra.mxu0 %v295
        %v399 = vpop.f32.mrf.mxu0
        %v400 = vadd.f32 0.0, %v399
        %v401 = vpop.f32.mrf.mxu0
        %402 = vdwg.mxu0
        %403 = vmatpush.bf16.msra.mxu0 0
        %404 = vmatpush.bf16.msra.mxu0 0
        %405 = vmatpush.bf16.msra.mxu0 0
        %406 = vmatpush.bf16.msra.mxu0 0
        %407 = vmatpush.bf16.msra.mxu0 0
        %408 = vmatpush.bf16.msra.mxu0 0
        %409 = vmatpush.bf16.msra.mxu0 0
        %410 = vmatpush.bf16.msra.mxu0 %v320
        %411 = vmatmul.bf16.gmra.mxu0 %v295
        %v412 = vpop.f32.mrf.mxu0
        %v413 = vadd.f32 0.0, %v412
        %v414 = vpop.f32.mrf.mxu0
        %415 = vdwg.mxu0
        %416 = vmatpush.bf16.msra.mxu0 0
        %417 = vmatpush.bf16.msra.mxu0 0
        %418 = vmatpush.bf16.msra.mxu0 0
        %419 = vmatpush.bf16.msra.mxu0 0
        %420 = vmatpush.bf16.msra.mxu0 0
        %421 = vmatpush.bf16.msra.mxu0 0
        %422 = vmatpush.bf16.msra.mxu0 0
        %423 = vmatpush.bf16.msra.mxu0 %v323
        %424 = vmatmul.bf16.gmra.mxu0 %v295
        %v425 = vpop.f32.mrf.mxu0
        %v426 = vadd.f32 0.0, %v425
        %v427 = vpop.f32.mrf.mxu0
        %428 = vdwg.mxu0
        %429 = vst [vmem:[#allocation1] ss:$4 sm:$0xff] %v243
        %s430 = scalar_lea.vmem [#allocation1], 32
        %431 = vst [vmem:[%s430] ss:$4 sm:$0xff] %v244
        %v432 = vld.sshfl [vmem:[#allocation1] sm:$0xff pattern:$0x73625140]
        %v433 = vld.sshfl [vmem:[#allocation1 + $0x8] sm:$0xff pattern:$0x73625140]
        %v434 = vld.sshfl [vmem:[#allocation1 + $0x10] sm:$0xff pattern:$0x73625140]
        %v435 = vld.sshfl [vmem:[#allocation1 + $0x18] sm:$0xff pattern:$0x73625140]
        %v436 = vld.sshfl [vmem:[#allocation1 + $0x20] sm:$0xff pattern:$0x73625140]
        %v437 = vld.sshfl [vmem:[#allocation1 + $0x28] sm:$0xff pattern:$0x73625140]
        %v438 = vld.sshfl [vmem:[#allocation1 + $0x30] sm:$0xff pattern:$0x73625140]
        %v439 = vld.sshfl [vmem:[#allocation1 + $0x38] sm:$0xff pattern:$0x73625140]
        %v441 = vsel %vm293, %v245, 0
        %v443 = vand.u32 %v432, %v300
        %v445 = vand.u32 %v433, %v300
        %v447 = vand.u32 %v434, %v300
        %v449 = vand.u32 %v435, %v300
        %v451 = vand.u32 %v436, %v300
        %v453 = vand.u32 %v437, %v300
        %v455 = vand.u32 %v438, %v300
        %v457 = vand.u32 %v439, %v300
        %459 = vmatpush.bf16.msra.mxu0 0
        %460 = vmatpush.bf16.msra.mxu0 0
        %461 = vmatpush.bf16.msra.mxu0 0
        %462 = vmatpush.bf16.msra.mxu0 0
        %463 = vmatpush.bf16.msra.mxu0 0
        %464 = vmatpush.bf16.msra.mxu0 0
        %465 = vmatpush.bf16.msra.mxu0 0
        %466 = vmatpush.bf16.msra.mxu0 %v443
        %467 = vmatmul.bf16.gmra.mxu0 %v441
        %v468 = vpop.f32.mrf.mxu0
        %v469 = vadd.f32 %v335, %v468
        %v470 = vpop.f32.mrf.mxu0
        %471 = vdwg.mxu0
        %472 = vmatpush.bf16.msra.mxu0 0
        %473 = vmatpush.bf16.msra.mxu0 0
        %474 = vmatpush.bf16.msra.mxu0 0
        %475 = vmatpush.bf16.msra.mxu0 0
        %476 = vmatpush.bf16.msra.mxu0 0
        %477 = vmatpush.bf16.msra.mxu0 0
        %478 = vmatpush.bf16.msra.mxu0 0
        %479 = vmatpush.bf16.msra.mxu0 %v445
        %480 = vmatmul.bf16.gmra.mxu0 %v441
        %v481 = vpop.f32.mrf.mxu0
        %v482 = vadd.f32 %v348, %v481
        %v483 = vpop.f32.mrf.mxu0
        %484 = vdwg.mxu0
        %485 = vmatpush.bf16.msra.mxu0 0
        %486 = vmatpush.bf16.msra.mxu0 0
        %487 = vmatpush.bf16.msra.mxu0 0
        %488 = vmatpush.bf16.msra.mxu0 0
        %489 = vmatpush.bf16.msra.mxu0 0
        %490 = vmatpush.bf16.msra.mxu0 0
        %491 = vmatpush.bf16.msra.mxu0 0
        %492 = vmatpush.bf16.msra.mxu0 %v447
        %493 = vmatmul.bf16.gmra.mxu0 %v441
        %v494 = vpop.f32.mrf.mxu0
        %v495 = vadd.f32 %v361, %v494
        %v496 = vpop.f32.mrf.mxu0
        %497 = vdwg.mxu0
        %498 = vmatpush.bf16.msra.mxu0 0
        %499 = vmatpush.bf16.msra.mxu0 0
        %500 = vmatpush.bf16.msra.mxu0 0
        %501 = vmatpush.bf16.msra.mxu0 0
        %502 = vmatpush.bf16.msra.mxu0 0
        %503 = vmatpush.bf16.msra.mxu0 0
        %504 = vmatpush.bf16.msra.mxu0 0
        %505 = vmatpush.bf16.msra.mxu0 %v449
        %506 = vmatmul.bf16.gmra.mxu0 %v441
        %v507 = vpop.f32.mrf.mxu0
        %v508 = vadd.f32 %v374, %v507
        %v509 = vpop.f32.mrf.mxu0
        %510 = vdwg.mxu0
        %511 = vmatpush.bf16.msra.mxu0 0
        %512 = vmatpush.bf16.msra.mxu0 0
        %513 = vmatpush.bf16.msra.mxu0 0
        %514 = vmatpush.bf16.msra.mxu0 0
        %515 = vmatpush.bf16.msra.mxu0 0
        %516 = vmatpush.bf16.msra.mxu0 0
        %517 = vmatpush.bf16.msra.mxu0 0
        %518 = vmatpush.bf16.msra.mxu0 %v451
        %519 = vmatmul.bf16.gmra.mxu0 %v441
        %v520 = vpop.f32.mrf.mxu0
        %v521 = vadd.f32 %v387, %v520
        %v522 = vpop.f32.mrf.mxu0
        %523 = vdwg.mxu0
        %524 = vmatpush.bf16.msra.mxu0 0
        %525 = vmatpush.bf16.msra.mxu0 0
        %526 = vmatpush.bf16.msra.mxu0 0
        %527 = vmatpush.bf16.msra.mxu0 0
        %528 = vmatpush.bf16.msra.mxu0 0
        %529 = vmatpush.bf16.msra.mxu0 0
        %530 = vmatpush.bf16.msra.mxu0 0
        %531 = vmatpush.bf16.msra.mxu0 %v453
        %532 = vmatmul.bf16.gmra.mxu0 %v441
        %v533 = vpop.f32.mrf.mxu0
        %v534 = vadd.f32 %v400, %v533
        %v535 = vpop.f32.mrf.mxu0
        %536 = vdwg.mxu0
        %537 = vmatpush.bf16.msra.mxu0 0
        %538 = vmatpush.bf16.msra.mxu0 0
        %539 = vmatpush.bf16.msra.mxu0 0
        %540 = vmatpush.bf16.msra.mxu0 0
        %541 = vmatpush.bf16.msra.mxu0 0
        %542 = vmatpush.bf16.msra.mxu0 0
        %543 = vmatpush.bf16.msra.mxu0 0
        %544 = vmatpush.bf16.msra.mxu0 %v455
        %545 = vmatmul.bf16.gmra.mxu0 %v441
        %v546 = vpop.f32.mrf.mxu0
        %v547 = vadd.f32 %v413, %v546
        %v548 = vpop.f32.mrf.mxu0
        %549 = vdwg.mxu0
        %550 = vmatpush.bf16.msra.mxu0 0
        %551 = vmatpush.bf16.msra.mxu0 0
        %552 = vmatpush.bf16.msra.mxu0 0
        %553 = vmatpush.bf16.msra.mxu0 0
        %554 = vmatpush.bf16.msra.mxu0 0
        %555 = vmatpush.bf16.msra.mxu0 0
        %556 = vmatpush.bf16.msra.mxu0 0
        %557 = vmatpush.bf16.msra.mxu0 %v457
        %558 = vmatmul.bf16.gmra.mxu0 %v441
        %v559 = vpop.f32.mrf.mxu0
        %v560 = vadd.f32 %v426, %v559
        %v561 = vpop.f32.mrf.mxu0
        %562 = vdwg.mxu0
        %s563 = scalar_lea.vmem %s1, 8
        %v564 = vld [vmem:[%s563] sm:$0x7]
        %565 = vst [vmem:[#allocation1] ss:$4 sm:$0xff] %v243
        %s566 = scalar_lea.vmem [#allocation1], 32
        %567 = vst [vmem:[%s566] ss:$4 sm:$0xff] %v244
        %v568 = vld.sshfl [vmem:[#allocation1] sm:$0xff pattern:$0x73625140]
        %v570 = vld.sshfl [vmem:[#allocation1 + $0x8] sm:$0xff pattern:$0x73625140]
        %v572 = vld.sshfl [vmem:[#allocation1 + $0x10] sm:$0xff pattern:$0x73625140]
        %v574 = vld.sshfl [vmem:[#allocation1 + $0x18] sm:$0xff pattern:$0x73625140]
        %v576 = vld.sshfl [vmem:[#allocation1 + $0x20] sm:$0xff pattern:$0x73625140]
        %v578 = vld.sshfl [vmem:[#allocation1 + $0x28] sm:$0xff pattern:$0x73625140]
        %v580 = vld.sshfl [vmem:[#allocation1 + $0x30] sm:$0xff pattern:$0x73625140]
        %v582 = vld.sshfl [vmem:[#allocation1 + $0x38] sm:$0xff pattern:$0x73625140]
        %584 = vrot.lane.b32.xlu0 %v568, 126
        %v585 = vpop.permute.xlu0 %584
        %586 = vrot.lane.b32.xlu0 %v570, 126
        %v587 = vpop.permute.xlu0 %586
        %588 = vrot.lane.b32.xlu0 %v572, 126
        %v589 = vpop.permute.xlu0 %588
        %590 = vrot.lane.b32.xlu0 %v574, 126
        %v591 = vpop.permute.xlu0 %590
        %592 = vrot.lane.b32.xlu0 %v576, 126
        %v593 = vpop.permute.xlu0 %592
        %594 = vrot.lane.b32.xlu0 %v578, 126
        %v595 = vpop.permute.xlu0 %594
        %596 = vrot.lane.b32.xlu0 %v580, 126
        %v597 = vpop.permute.xlu0 %596
        %598 = vrot.lane.b32.xlu0 %v582, 126
        %v599 = vpop.permute.xlu0 %598
        %vm600 = vcmask 1031168
        %v601 = vsel %vm600, %v585, %v587
        %v602 = vsel %vm600, %v587, %v589
        %v603 = vsel %vm600, %v589, %v591
        %v604 = vsel %vm600, %v591, %v593
        %v605 = vsel %vm600, %v593, %v595
        %v606 = vsel %vm600, %v595, %v597
        %v607 = vsel %vm600, %v597, %v599
        %v609 = vsel %vm293, %v564, 0
        %v612 = vand.u32 %v601, %v300
        %v615 = vand.u32 %v602, %v300
        %v618 = vand.u32 %v603, %v300
        %v621 = vand.u32 %v604, %v300
        %v624 = vand.u32 %v605, %v300
        %v627 = vand.u32 %v606, %v300
        %v630 = vand.u32 %v607, %v300
        %v633 = vand.u32 %v599, %v300
        %635 = vmatpush.bf16.msra.mxu0 0
        %636 = vmatpush.bf16.msra.mxu0 0
        %637 = vmatpush.bf16.msra.mxu0 0
        %638 = vmatpush.bf16.msra.mxu0 0
        %639 = vmatpush.bf16.msra.mxu0 0
        %640 = vmatpush.bf16.msra.mxu0 0
        %641 = vmatpush.bf16.msra.mxu0 0
        %642 = vmatpush.bf16.msra.mxu0 %v612
        %643 = vmatmul.bf16.gmra.mxu0 %v609
        %v644 = vpop.f32.mrf.mxu0
        %v645 = vadd.f32 0.0, %v644
        %v646 = vpop.f32.mrf.mxu0
        %647 = vdwg.mxu0
        %648 = vmatpush.bf16.msra.mxu0 0
        %649 = vmatpush.bf16.msra.mxu0 0
        %650 = vmatpush.bf16.msra.mxu0 0
        %651 = vmatpush.bf16.msra.mxu0 0
        %652 = vmatpush.bf16.msra.mxu0 0
        %653 = vmatpush.bf16.msra.mxu0 0
        %654 = vmatpush.bf16.msra.mxu0 0
        %655 = vmatpush.bf16.msra.mxu0 %v615
        %656 = vmatmul.bf16.gmra.mxu0 %v609
        %v657 = vpop.f32.mrf.mxu0
        %v658 = vadd.f32 0.0, %v657
        %v659 = vpop.f32.mrf.mxu0
        %660 = vdwg.mxu0
        %661 = vmatpush.bf16.msra.mxu0 0
        %662 = vmatpush.bf16.msra.mxu0 0
        %663 = vmatpush.bf16.msra.mxu0 0
        %664 = vmatpush.bf16.msra.mxu0 0
        %665 = vmatpush.bf16.msra.mxu0 0
        %666 = vmatpush.bf16.msra.mxu0 0
        %667 = vmatpush.bf16.msra.mxu0 0
        %668 = vmatpush.bf16.msra.mxu0 %v618
        %669 = vmatmul.bf16.gmra.mxu0 %v609
        %v670 = vpop.f32.mrf.mxu0
        %v671 = vadd.f32 0.0, %v670
        %v672 = vpop.f32.mrf.mxu0
        %673 = vdwg.mxu0
        %674 = vmatpush.bf16.msra.mxu0 0
        %675 = vmatpush.bf16.msra.mxu0 0
        %676 = vmatpush.bf16.msra.mxu0 0
        %677 = vmatpush.bf16.msra.mxu0 0
        %678 = vmatpush.bf16.msra.mxu0 0
        %679 = vmatpush.bf16.msra.mxu0 0
        %680 = vmatpush.bf16.msra.mxu0 0
        %681 = vmatpush.bf16.msra.mxu0 %v621
        %682 = vmatmul.bf16.gmra.mxu0 %v609
        %v683 = vpop.f32.mrf.mxu0
        %v684 = vadd.f32 0.0, %v683
        %v685 = vpop.f32.mrf.mxu0
        %686 = vdwg.mxu0
        %687 = vmatpush.bf16.msra.mxu0 0
        %688 = vmatpush.bf16.msra.mxu0 0
        %689 = vmatpush.bf16.msra.mxu0 0
        %690 = vmatpush.bf16.msra.mxu0 0
        %691 = vmatpush.bf16.msra.mxu0 0
        %692 = vmatpush.bf16.msra.mxu0 0
        %693 = vmatpush.bf16.msra.mxu0 0
        %694 = vmatpush.bf16.msra.mxu0 %v624
        %695 = vmatmul.bf16.gmra.mxu0 %v609
        %v696 = vpop.f32.mrf.mxu0
        %v697 = vadd.f32 0.0, %v696
        %v698 = vpop.f32.mrf.mxu0
        %699 = vdwg.mxu0
        %700 = vmatpush.bf16.msra.mxu0 0
        %701 = vmatpush.bf16.msra.mxu0 0
        %702 = vmatpush.bf16.msra.mxu0 0
        %703 = vmatpush.bf16.msra.mxu0 0
        %704 = vmatpush.bf16.msra.mxu0 0
        %705 = vmatpush.bf16.msra.mxu0 0
        %706 = vmatpush.bf16.msra.mxu0 0
        %707 = vmatpush.bf16.msra.mxu0 %v627
        %708 = vmatmul.bf16.gmra.mxu0 %v609
        %v709 = vpop.f32.mrf.mxu0
        %v710 = vadd.f32 0.0, %v709
        %v711 = vpop.f32.mrf.mxu0
        %712 = vdwg.mxu0
        %713 = vmatpush.bf16.msra.mxu0 0
        %714 = vmatpush.bf16.msra.mxu0 0
        %715 = vmatpush.bf16.msra.mxu0 0
        %716 = vmatpush.bf16.msra.mxu0 0
        %717 = vmatpush.bf16.msra.mxu0 0
        %718 = vmatpush.bf16.msra.mxu0 0
        %719 = vmatpush.bf16.msra.mxu0 0
        %720 = vmatpush.bf16.msra.mxu0 %v630
        %721 = vmatmul.bf16.gmra.mxu0 %v609
        %v722 = vpop.f32.mrf.mxu0
        %v723 = vadd.f32 0.0, %v722
        %v724 = vpop.f32.mrf.mxu0
        %725 = vdwg.mxu0
        %726 = vmatpush.bf16.msra.mxu0 0
        %727 = vmatpush.bf16.msra.mxu0 0
        %728 = vmatpush.bf16.msra.mxu0 0
        %729 = vmatpush.bf16.msra.mxu0 0
        %730 = vmatpush.bf16.msra.mxu0 0
        %731 = vmatpush.bf16.msra.mxu0 0
        %732 = vmatpush.bf16.msra.mxu0 0
        %733 = vmatpush.bf16.msra.mxu0 %v633
        %734 = vmatmul.bf16.gmra.mxu0 %v609
        %v735 = vpop.f32.mrf.mxu0
        %v736 = vadd.f32 0.0, %v735
        %v737 = vpop.f32.mrf.mxu0
        %738 = vdwg.mxu0
        %v739 = vadd.f32 %v469, %v645
        %v740 = vadd.f32 %v482, %v658
        %v741 = vadd.f32 %v495, %v671
        %v742 = vadd.f32 %v508, %v684
        %v743 = vadd.f32 %v521, %v697
        %v744 = vadd.f32 %v534, %v710
        %v745 = vadd.f32 %v547, %v723
        %v746 = vadd.f32 %v560, %v736
        %s747 = scalar_lea.vmem %s1, 12
        %v748 = vld [vmem:[%s747] sm:$0x7]
        %749 = vst [vmem:[#allocation1] ss:$4 sm:$0xff] %v243
        %s750 = scalar_lea.vmem [#allocation1], 32
        %751 = vst [vmem:[%s750] ss:$4 sm:$0xff] %v244
        %v752 = vld.sshfl [vmem:[#allocation1] sm:$0xff pattern:$0x73625140]
        %v754 = vld.sshfl [vmem:[#allocation1 + $0x8] sm:$0xff pattern:$0x73625140]
        %v756 = vld.sshfl [vmem:[#allocation1 + $0x10] sm:$0xff pattern:$0x73625140]
        %v758 = vld.sshfl [vmem:[#allocation1 + $0x18] sm:$0xff pattern:$0x73625140]
        %v760 = vld.sshfl [vmem:[#allocation1 + $0x20] sm:$0xff pattern:$0x73625140]
        %v762 = vld.sshfl [vmem:[#allocation1 + $0x28] sm:$0xff pattern:$0x73625140]
        %v764 = vld.sshfl [vmem:[#allocation1 + $0x30] sm:$0xff pattern:$0x73625140]
        %v766 = vld.sshfl [vmem:[#allocation1 + $0x38] sm:$0xff pattern:$0x73625140]
        %768 = vrot.lane.b32.xlu0 %v752, 96
        %v769 = vpop.permute.xlu0 %768
        %770 = vrot.lane.b32.xlu0 %v754, 96
        %v771 = vpop.permute.xlu0 %770
        %772 = vrot.lane.b32.xlu0 %v756, 96
        %v773 = vpop.permute.xlu0 %772
        %774 = vrot.lane.b32.xlu0 %v758, 96
        %v775 = vpop.permute.xlu0 %774
        %776 = vrot.lane.b32.xlu0 %v760, 96
        %v777 = vpop.permute.xlu0 %776
        %778 = vrot.lane.b32.xlu0 %v762, 96
        %v779 = vpop.permute.xlu0 %778
        %780 = vrot.lane.b32.xlu0 %v764, 96
        %v781 = vpop.permute.xlu0 %780
        %782 = vrot.lane.b32.xlu0 %v766, 96
        %v783 = vpop.permute.xlu0 %782
        %vm784 = vcmask 785408
        %v785 = vsel %vm784, %v769, %v771
        %v786 = vsel %vm784, %v771, %v773
        %v787 = vsel %vm784, %v773, %v775
        %v788 = vsel %vm784, %v775, %v777
        %v789 = vsel %vm784, %v777, %v779
        %v790 = vsel %vm784, %v779, %v781
        %v791 = vsel %vm784, %v781, %v783
        %v793 = vsel %vm293, %v748, 0
        %v796 = vand.u32 %v785, %v300
        %v799 = vand.u32 %v786, %v300
        %v802 = vand.u32 %v787, %v300
        %v805 = vand.u32 %v788, %v300
        %v808 = vand.u32 %v789, %v300
        %v811 = vand.u32 %v790, %v300
        %v814 = vand.u32 %v791, %v300
        %v817 = vand.u32 %v783, %v300
        %819 = vmatpush.bf16.msra.mxu0 0
        %820 = vmatpush.bf16.msra.mxu0 0
        %821 = vmatpush.bf16.msra.mxu0 0
        %822 = vmatpush.bf16.msra.mxu0 0
        %823 = vmatpush.bf16.msra.mxu0 0
        %824 = vmatpush.bf16.msra.mxu0 0
        %825 = vmatpush.bf16.msra.mxu0 0
        %826 = vmatpush.bf16.msra.mxu0 %v796
        %827 = vmatmul.bf16.gmra.mxu0 %v793
        %v828 = vpop.f32.mrf.mxu0
        %v829 = vadd.f32 0.0, %v828
        %v830 = vpop.f32.mrf.mxu0
        %831 = vdwg.mxu0
        %832 = vmatpush.bf16.msra.mxu0 0
        %833 = vmatpush.bf16.msra.mxu0 0
        %834 = vmatpush.bf16.msra.mxu0 0
        %835 = vmatpush.bf16.msra.mxu0 0
        %836 = vmatpush.bf16.msra.mxu0 0
        %837 = vmatpush.bf16.msra.mxu0 0
        %838 = vmatpush.bf16.msra.mxu0 0
        %839 = vmatpush.bf16.msra.mxu0 %v799
        %840 = vmatmul.bf16.gmra.mxu0 %v793
        %v841 = vpop.f32.mrf.mxu0
        %v842 = vadd.f32 0.0, %v841
        %v843 = vpop.f32.mrf.mxu0
        %844 = vdwg.mxu0
        %845 = vmatpush.bf16.msra.mxu0 0
        %846 = vmatpush.bf16.msra.mxu0 0
        %847 = vmatpush.bf16.msra.mxu0 0
        %848 = vmatpush.bf16.msra.mxu0 0
        %849 = vmatpush.bf16.msra.mxu0 0
        %850 = vmatpush.bf16.msra.mxu0 0
        %851 = vmatpush.bf16.msra.mxu0 0
        %852 = vmatpush.bf16.msra.mxu0 %v802
        %853 = vmatmul.bf16.gmra.mxu0 %v793
        %v854 = vpop.f32.mrf.mxu0
        %v855 = vadd.f32 0.0, %v854
        %v856 = vpop.f32.mrf.mxu0
        %857 = vdwg.mxu0
        %858 = vmatpush.bf16.msra.mxu0 0
        %859 = vmatpush.bf16.msra.mxu0 0
        %860 = vmatpush.bf16.msra.mxu0 0
        %861 = vmatpush.bf16.msra.mxu0 0
        %862 = vmatpush.bf16.msra.mxu0 0
        %863 = vmatpush.bf16.msra.mxu0 0
        %864 = vmatpush.bf16.msra.mxu0 0
        %865 = vmatpush.bf16.msra.mxu0 %v805
        %866 = vmatmul.bf16.gmra.mxu0 %v793
        %v867 = vpop.f32.mrf.mxu0
        %v868 = vadd.f32 0.0, %v867
        %v869 = vpop.f32.mrf.mxu0
        %870 = vdwg.mxu0
        %871 = vmatpush.bf16.msra.mxu0 0
        %872 = vmatpush.bf16.msra.mxu0 0
        %873 = vmatpush.bf16.msra.mxu0 0
        %874 = vmatpush.bf16.msra.mxu0 0
        %875 = vmatpush.bf16.msra.mxu0 0
        %876 = vmatpush.bf16.msra.mxu0 0
        %877 = vmatpush.bf16.msra.mxu0 0
        %878 = vmatpush.bf16.msra.mxu0 %v808
        %879 = vmatmul.bf16.gmra.mxu0 %v793
        %v880 = vpop.f32.mrf.mxu0
        %v881 = vadd.f32 0.0, %v880
        %v882 = vpop.f32.mrf.mxu0
        %883 = vdwg.mxu0
        %884 = vmatpush.bf16.msra.mxu0 0
        %885 = vmatpush.bf16.msra.mxu0 0
        %886 = vmatpush.bf16.msra.mxu0 0
        %887 = vmatpush.bf16.msra.mxu0 0
        %888 = vmatpush.bf16.msra.mxu0 0
        %889 = vmatpush.bf16.msra.mxu0 0
        %890 = vmatpush.bf16.msra.mxu0 0
        %891 = vmatpush.bf16.msra.mxu0 %v811
        %892 = vmatmul.bf16.gmra.mxu0 %v793
        %v893 = vpop.f32.mrf.mxu0
        %v894 = vadd.f32 0.0, %v893
        %v895 = vpop.f32.mrf.mxu0
        %896 = vdwg.mxu0
        %897 = vmatpush.bf16.msra.mxu0 0
        %898 = vmatpush.bf16.msra.mxu0 0
        %899 = vmatpush.bf16.msra.mxu0 0
        %900 = vmatpush.bf16.msra.mxu0 0
        %901 = vmatpush.bf16.msra.mxu0 0
        %902 = vmatpush.bf16.msra.mxu0 0
        %903 = vmatpush.bf16.msra.mxu0 0
        %904 = vmatpush.bf16.msra.mxu0 %v814
        %905 = vmatmul.bf16.gmra.mxu0 %v793
        %v906 = vpop.f32.mrf.mxu0
        %v907 = vadd.f32 0.0, %v906
        %v908 = vpop.f32.mrf.mxu0
        %909 = vdwg.mxu0
        %910 = vmatpush.bf16.msra.mxu0 0
        %911 = vmatpush.bf16.msra.mxu0 0
        %912 = vmatpush.bf16.msra.mxu0 0
        %913 = vmatpush.bf16.msra.mxu0 0
        %914 = vmatpush.bf16.msra.mxu0 0
        %915 = vmatpush.bf16.msra.mxu0 0
        %916 = vmatpush.bf16.msra.mxu0 0
        %917 = vmatpush.bf16.msra.mxu0 %v817
        %918 = vmatmul.bf16.gmra.mxu0 %v793
        %v919 = vpop.f32.mrf.mxu0
        %v920 = vadd.f32 0.0, %v919
        %v921 = vpop.f32.mrf.mxu0
        %922 = vdwg.mxu0
        %v923 = vadd.f32 %v739, %v829
        %v924 = vadd.f32 %v740, %v842
        %v925 = vadd.f32 %v741, %v855
        %v926 = vadd.f32 %v742, %v868
        %v927 = vadd.f32 %v743, %v881
        %v928 = vadd.f32 %v744, %v894
        %v929 = vadd.f32 %v745, %v907
        %v930 = vadd.f32 %v746, %v920
        %s931 = scalar_lea.vmem %s1, 16
        %v932 = vld [vmem:[%s931] sm:$0x7]
        %933 = vst [vmem:[#allocation1] ss:$4 sm:$0xff] %v243
        %s934 = scalar_lea.vmem [#allocation1], 32
        %935 = vst [vmem:[%s934] ss:$4 sm:$0xff] %v244
        %v936 = vld.sshfl [vmem:[#allocation1] sm:$0xff pattern:$0x73625140]
        %v938 = vld.sshfl [vmem:[#allocation1 + $0x8] sm:$0xff pattern:$0x73625140]
        %v940 = vld.sshfl [vmem:[#allocation1 + $0x10] sm:$0xff pattern:$0x73625140]
        %v942 = vld.sshfl [vmem:[#allocation1 + $0x18] sm:$0xff pattern:$0x73625140]
        %v944 = vld.sshfl [vmem:[#allocation1 + $0x20] sm:$0xff pattern:$0x73625140]
        %v946 = vld.sshfl [vmem:[#allocation1 + $0x28] sm:$0xff pattern:$0x73625140]
        %v948 = vld.sshfl [vmem:[#allocation1 + $0x30] sm:$0xff pattern:$0x73625140]
        %v950 = vld.sshfl [vmem:[#allocation1 + $0x38] sm:$0xff pattern:$0x73625140]
        %952 = vrot.lane.b32.xlu0 %v936, 95
        %v953 = vpop.permute.xlu0 %952
        %954 = vrot.lane.b32.xlu0 %v938, 95
        %v955 = vpop.permute.xlu0 %954
        %956 = vrot.lane.b32.xlu0 %v940, 95
        %v957 = vpop.permute.xlu0 %956
        %958 = vrot.lane.b32.xlu0 %v942, 95
        %v959 = vpop.permute.xlu0 %958
        %960 = vrot.lane.b32.xlu0 %v944, 95
        %v961 = vpop.permute.xlu0 %960
        %962 = vrot.lane.b32.xlu0 %v946, 95
        %v963 = vpop.permute.xlu0 %962
        %964 = vrot.lane.b32.xlu0 %v948, 95
        %v965 = vpop.permute.xlu0 %964
        %966 = vrot.lane.b32.xlu0 %v950, 95
        %v967 = vpop.permute.xlu0 %966
        %vm968 = vcmask 777216
        %v969 = vsel %vm968, %v953, %v955
        %v970 = vsel %vm968, %v955, %v957
        %v971 = vsel %vm968, %v957, %v959
        %v972 = vsel %vm968, %v959, %v961
        %v973 = vsel %vm968, %v961, %v963
        %v974 = vsel %vm968, %v963, %v965
        %v975 = vsel %vm968, %v965, %v967
        %v977 = vsel %vm293, %v932, 0
        %v980 = vand.u32 %v969, %v300
        %v983 = vand.u32 %v970, %v300
        %v986 = vand.u32 %v971, %v300
        %v989 = vand.u32 %v972, %v300
        %v992 = vand.u32 %v973, %v300
        %v995 = vand.u32 %v974, %v300
        %v998 = vand.u32 %v975, %v300
        %v1001 = vand.u32 %v967, %v300
        %1003 = vmatpush.bf16.msra.mxu0 0
        %1004 = vmatpush.bf16.msra.mxu0 0
        %1005 = vmatpush.bf16.msra.mxu0 0
        %1006 = vmatpush.bf16.msra.mxu0 0
        %1007 = vmatpush.bf16.msra.mxu0 0
        %1008 = vmatpush.bf16.msra.mxu0 0
        %1009 = vmatpush.bf16.msra.mxu0 0
        %1010 = vmatpush.bf16.msra.mxu0 %v980
        %1011 = vmatmul.bf16.gmra.mxu0 %v977
        %v1012 = vpop.f32.mrf.mxu0
        %v1013 = vadd.f32 0.0, %v1012
        %v1014 = vpop.f32.mrf.mxu0
        %1015 = vdwg.mxu0
        %1016 = vmatpush.bf16.msra.mxu0 0
        %1017 = vmatpush.bf16.msra.mxu0 0
        %1018 = vmatpush.bf16.msra.mxu0 0
        %1019 = vmatpush.bf16.msra.mxu0 0
        %1020 = vmatpush.bf16.msra.mxu0 0
        %1021 = vmatpush.bf16.msra.mxu0 0
        %1022 = vmatpush.bf16.msra.mxu0 0
        %1023 = vmatpush.bf16.msra.mxu0 %v983
        %1024 = vmatmul.bf16.gmra.mxu0 %v977
        %v1025 = vpop.f32.mrf.mxu0
        %v1026 = vadd.f32 0.0, %v1025
        %v1027 = vpop.f32.mrf.mxu0
        %1028 = vdwg.mxu0
        %1029 = vmatpush.bf16.msra.mxu0 0
        %1030 = vmatpush.bf16.msra.mxu0 0
        %1031 = vmatpush.bf16.msra.mxu0 0
        %1032 = vmatpush.bf16.msra.mxu0 0
        %1033 = vmatpush.bf16.msra.mxu0 0
        %1034 = vmatpush.bf16.msra.mxu0 0
        %1035 = vmatpush.bf16.msra.mxu0 0
        %1036 = vmatpush.bf16.msra.mxu0 %v986
        %1037 = vmatmul.bf16.gmra.mxu0 %v977
        %v1038 = vpop.f32.mrf.mxu0
        %v1039 = vadd.f32 0.0, %v1038
        %v1040 = vpop.f32.mrf.mxu0
        %1041 = vdwg.mxu0
        %1042 = vmatpush.bf16.msra.mxu0 0
        %1043 = vmatpush.bf16.msra.mxu0 0
        %1044 = vmatpush.bf16.msra.mxu0 0
        %1045 = vmatpush.bf16.msra.mxu0 0
        %1046 = vmatpush.bf16.msra.mxu0 0
        %1047 = vmatpush.bf16.msra.mxu0 0
        %1048 = vmatpush.bf16.msra.mxu0 0
        %1049 = vmatpush.bf16.msra.mxu0 %v989
        %1050 = vmatmul.bf16.gmra.mxu0 %v977
        %v1051 = vpop.f32.mrf.mxu0
        %v1052 = vadd.f32 0.0, %v1051
        %v1053 = vpop.f32.mrf.mxu0
        %1054 = vdwg.mxu0
        %1055 = vmatpush.bf16.msra.mxu0 0
        %1056 = vmatpush.bf16.msra.mxu0 0
        %1057 = vmatpush.bf16.msra.mxu0 0
        %1058 = vmatpush.bf16.msra.mxu0 0
        %1059 = vmatpush.bf16.msra.mxu0 0
        %1060 = vmatpush.bf16.msra.mxu0 0
        %1061 = vmatpush.bf16.msra.mxu0 0
        %1062 = vmatpush.bf16.msra.mxu0 %v992
        %1063 = vmatmul.bf16.gmra.mxu0 %v977
        %v1064 = vpop.f32.mrf.mxu0
        %v1065 = vadd.f32 0.0, %v1064
        %v1066 = vpop.f32.mrf.mxu0
        %1067 = vdwg.mxu0
        %1068 = vmatpush.bf16.msra.mxu0 0
        %1069 = vmatpush.bf16.msra.mxu0 0
        %1070 = vmatpush.bf16.msra.mxu0 0
        %1071 = vmatpush.bf16.msra.mxu0 0
        %1072 = vmatpush.bf16.msra.mxu0 0
        %1073 = vmatpush.bf16.msra.mxu0 0
        %1074 = vmatpush.bf16.msra.mxu0 0
        %1075 = vmatpush.bf16.msra.mxu0 %v995
        %1076 = vmatmul.bf16.gmra.mxu0 %v977
        %v1077 = vpop.f32.mrf.mxu0
        %v1078 = vadd.f32 0.0, %v1077
        %v1079 = vpop.f32.mrf.mxu0
        %1080 = vdwg.mxu0
        %1081 = vmatpush.bf16.msra.mxu0 0
        %1082 = vmatpush.bf16.msra.mxu0 0
        %1083 = vmatpush.bf16.msra.mxu0 0
        %1084 = vmatpush.bf16.msra.mxu0 0
        %1085 = vmatpush.bf16.msra.mxu0 0
        %1086 = vmatpush.bf16.msra.mxu0 0
        %1087 = vmatpush.bf16.msra.mxu0 0
        %1088 = vmatpush.bf16.msra.mxu0 %v998
        %1089 = vmatmul.bf16.gmra.mxu0 %v977
        %v1090 = vpop.f32.mrf.mxu0
        %v1091 = vadd.f32 0.0, %v1090
        %v1092 = vpop.f32.mrf.mxu0
        %1093 = vdwg.mxu0
        %1094 = vmatpush.bf16.msra.mxu0 0
        %1095 = vmatpush.bf16.msra.mxu0 0
        %1096 = vmatpush.bf16.msra.mxu0 0
        %1097 = vmatpush.bf16.msra.mxu0 0
        %1098 = vmatpush.bf16.msra.mxu0 0
        %1099 = vmatpush.bf16.msra.mxu0 0
        %1100 = vmatpush.bf16.msra.mxu0 0
        %1101 = vmatpush.bf16.msra.mxu0 %v1001
        %1102 = vmatmul.bf16.gmra.mxu0 %v977
        %v1103 = vpop.f32.mrf.mxu0
        %v1104 = vadd.f32 0.0, %v1103
        %v1105 = vpop.f32.mrf.mxu0
        %1106 = vdwg.mxu0
        %v1107 = vadd.f32 %v923, %v1013
        %v1108 = vadd.f32 %v924, %v1026
        %v1109 = vadd.f32 %v925, %v1039
        %v1110 = vadd.f32 %v926, %v1052
        %v1111 = vadd.f32 %v927, %v1065
        %v1112 = vadd.f32 %v928, %v1078
        %v1113 = vadd.f32 %v929, %v1091
        %v1114 = vadd.f32 %v930, %v1104
        %s1115 = scalar_lea.vmem %s1, 20
        %v1116 = vld [vmem:[%s1115] sm:$0x7]
        %1117 = vst [vmem:[#allocation1] ss:$4 sm:$0xff] %v243
        %s1118 = scalar_lea.vmem [#allocation1], 32
        %1119 = vst [vmem:[%s1118] ss:$4 sm:$0xff] %v244
        %v1120 = vld.sshfl [vmem:[#allocation1] sm:$0xff pattern:$0x73625140]
        %v1122 = vld.sshfl [vmem:[#allocation1 + $0x8] sm:$0xff pattern:$0x73625140]
        %v1124 = vld.sshfl [vmem:[#allocation1 + $0x10] sm:$0xff pattern:$0x73625140]
        %v1126 = vld.sshfl [vmem:[#allocation1 + $0x18] sm:$0xff pattern:$0x73625140]
        %v1128 = vld.sshfl [vmem:[#allocation1 + $0x20] sm:$0xff pattern:$0x73625140]
        %v1130 = vld.sshfl [vmem:[#allocation1 + $0x28] sm:$0xff pattern:$0x73625140]
        %v1132 = vld.sshfl [vmem:[#allocation1 + $0x30] sm:$0xff pattern:$0x73625140]
        %v1134 = vld.sshfl [vmem:[#allocation1 + $0x38] sm:$0xff pattern:$0x73625140]
        %1136 = vrot.lane.b32.xlu0 %v1120, 94
        %v1137 = vpop.permute.xlu0 %1136
        %1138 = vrot.lane.b32.xlu0 %v1122, 94
        %v1139 = vpop.permute.xlu0 %1138
        %1140 = vrot.lane.b32.xlu0 %v1124, 94
        %v1141 = vpop.permute.xlu0 %1140
        %1142 = vrot.lane.b32.xlu0 %v1126, 94
        %v1143 = vpop.permute.xlu0 %1142
        %1144 = vrot.lane.b32.xlu0 %v1128, 94
        %v1145 = vpop.permute.xlu0 %1144
        %1146 = vrot.lane.b32.xlu0 %v1130, 94
        %v1147 = vpop.permute.xlu0 %1146
        %1148 = vrot.lane.b32.xlu0 %v1132, 94
        %v1149 = vpop.permute.xlu0 %1148
        %1150 = vrot.lane.b32.xlu0 %v1134, 94
        %v1151 = vpop.permute.xlu0 %1150
        %vm1152 = vcmask 769024
        %v1153 = vsel %vm1152, %v1137, %v1139
        %v1154 = vsel %vm1152, %v1139, %v1141
        %v1155 = vsel %vm1152, %v1141, %v1143
        %v1156 = vsel %vm1152, %v1143, %v1145
        %v1157 = vsel %vm1152, %v1145, %v1147
        %v1158 = vsel %vm1152, %v1147, %v1149
        %v1159 = vsel %vm1152, %v1149, %v1151
        %v1161 = vsel %vm293, %v1116, 0
        %v1164 = vand.u32 %v1153, %v300
        %v1167 = vand.u32 %v1154, %v300
        %v1170 = vand.u32 %v1155, %v300
        %v1173 = vand.u32 %v1156, %v300
        %v1176 = vand.u32 %v1157, %v300
        %v1179 = vand.u32 %v1158, %v300
        %v1182 = vand.u32 %v1159, %v300
        %v1185 = vand.u32 %v1151, %v300
        %1187 = vmatpush.bf16.msra.mxu0 0
        %1188 = vmatpush.bf16.msra.mxu0 0
        %1189 = vmatpush.bf16.msra.mxu0 0
        %1190 = vmatpush.bf16.msra.mxu0 0
        %1191 = vmatpush.bf16.msra.mxu0 0
        %1192 = vmatpush.bf16.msra.mxu0 0
        %1193 = vmatpush.bf16.msra.mxu0 0
        %1194 = vmatpush.bf16.msra.mxu0 %v1164
        %1195 = vmatmul.bf16.gmra.mxu0 %v1161
        %v1196 = vpop.f32.mrf.mxu0
        %v1197 = vadd.f32 0.0, %v1196
        %v1198 = vpop.f32.mrf.mxu0
        %1199 = vdwg.mxu0
        %1200 = vmatpush.bf16.msra.mxu0 0
        %1201 = vmatpush.bf16.msra.mxu0 0
        %1202 = vmatpush.bf16.msra.mxu0 0
        %1203 = vmatpush.bf16.msra.mxu0 0
        %1204 = vmatpush.bf16.msra.mxu0 0
        %1205 = vmatpush.bf16.msra.mxu0 0
        %1206 = vmatpush.bf16.msra.mxu0 0
        %1207 = vmatpush.bf16.msra.mxu0 %v1167
        %1208 = vmatmul.bf16.gmra.mxu0 %v1161
        %v1209 = vpop.f32.mrf.mxu0
        %v1210 = vadd.f32 0.0, %v1209
        %v1211 = vpop.f32.mrf.mxu0
        %1212 = vdwg.mxu0
        %1213 = vmatpush.bf16.msra.mxu0 0
        %1214 = vmatpush.bf16.msra.mxu0 0
        %1215 = vmatpush.bf16.msra.mxu0 0
        %1216 = vmatpush.bf16.msra.mxu0 0
        %1217 = vmatpush.bf16.msra.mxu0 0
        %1218 = vmatpush.bf16.msra.mxu0 0
        %1219 = vmatpush.bf16.msra.mxu0 0
        %1220 = vmatpush.bf16.msra.mxu0 %v1170
        %1221 = vmatmul.bf16.gmra.mxu0 %v1161
        %v1222 = vpop.f32.mrf.mxu0
        %v1223 = vadd.f32 0.0, %v1222
        %v1224 = vpop.f32.mrf.mxu0
        %1225 = vdwg.mxu0
        %1226 = vmatpush.bf16.msra.mxu0 0
        %1227 = vmatpush.bf16.msra.mxu0 0
        %1228 = vmatpush.bf16.msra.mxu0 0
        %1229 = vmatpush.bf16.msra.mxu0 0
        %1230 = vmatpush.bf16.msra.mxu0 0
        %1231 = vmatpush.bf16.msra.mxu0 0
        %1232 = vmatpush.bf16.msra.mxu0 0
        %1233 = vmatpush.bf16.msra.mxu0 %v1173
        %1234 = vmatmul.bf16.gmra.mxu0 %v1161
        %v1235 = vpop.f32.mrf.mxu0
        %v1236 = vadd.f32 0.0, %v1235
        %v1237 = vpop.f32.mrf.mxu0
        %1238 = vdwg.mxu0
        %1239 = vmatpush.bf16.msra.mxu0 0
        %1240 = vmatpush.bf16.msra.mxu0 0
        %1241 = vmatpush.bf16.msra.mxu0 0
        %1242 = vmatpush.bf16.msra.mxu0 0
        %1243 = vmatpush.bf16.msra.mxu0 0
        %1244 = vmatpush.bf16.msra.mxu0 0
        %1245 = vmatpush.bf16.msra.mxu0 0
        %1246 = vmatpush.bf16.msra.mxu0 %v1176
        %1247 = vmatmul.bf16.gmra.mxu0 %v1161
        %v1248 = vpop.f32.mrf.mxu0
        %v1249 = vadd.f32 0.0, %v1248
        %v1250 = vpop.f32.mrf.mxu0
        %1251 = vdwg.mxu0
        %1252 = vmatpush.bf16.msra.mxu0 0
        %1253 = vmatpush.bf16.msra.mxu0 0
        %1254 = vmatpush.bf16.msra.mxu0 0
        %1255 = vmatpush.bf16.msra.mxu0 0
        %1256 = vmatpush.bf16.msra.mxu0 0
        %1257 = vmatpush.bf16.msra.mxu0 0
        %1258 = vmatpush.bf16.msra.mxu0 0
        %1259 = vmatpush.bf16.msra.mxu0 %v1179
        %1260 = vmatmul.bf16.gmra.mxu0 %v1161
        %v1261 = vpop.f32.mrf.mxu0
        %v1262 = vadd.f32 0.0, %v1261
        %v1263 = vpop.f32.mrf.mxu0
        %1264 = vdwg.mxu0
        %1265 = vmatpush.bf16.msra.mxu0 0
        %1266 = vmatpush.bf16.msra.mxu0 0
        %1267 = vmatpush.bf16.msra.mxu0 0
        %1268 = vmatpush.bf16.msra.mxu0 0
        %1269 = vmatpush.bf16.msra.mxu0 0
        %1270 = vmatpush.bf16.msra.mxu0 0
        %1271 = vmatpush.bf16.msra.mxu0 0
        %1272 = vmatpush.bf16.msra.mxu0 %v1182
        %1273 = vmatmul.bf16.gmra.mxu0 %v1161
        %v1274 = vpop.f32.mrf.mxu0
        %v1275 = vadd.f32 0.0, %v1274
        %v1276 = vpop.f32.mrf.mxu0
        %1277 = vdwg.mxu0
        %1278 = vmatpush.bf16.msra.mxu0 0
        %1279 = vmatpush.bf16.msra.mxu0 0
        %1280 = vmatpush.bf16.msra.mxu0 0
        %1281 = vmatpush.bf16.msra.mxu0 0
        %1282 = vmatpush.bf16.msra.mxu0 0
        %1283 = vmatpush.bf16.msra.mxu0 0
        %1284 = vmatpush.bf16.msra.mxu0 0
        %1285 = vmatpush.bf16.msra.mxu0 %v1185
        %1286 = vmatmul.bf16.gmra.mxu0 %v1161
        %v1287 = vpop.f32.mrf.mxu0
        %v1288 = vadd.f32 0.0, %v1287
        %v1289 = vpop.f32.mrf.mxu0
        %1290 = vdwg.mxu0
        %v1291 = vadd.f32 %v1107, %v1197
        %v1292 = vadd.f32 %v1108, %v1210
        %v1293 = vadd.f32 %v1109, %v1223
        %v1294 = vadd.f32 %v1110, %v1236
        %v1295 = vadd.f32 %v1111, %v1249
        %v1296 = vadd.f32 %v1112, %v1262
        %v1297 = vadd.f32 %v1113, %v1275
        %v1298 = vadd.f32 %v1114, %v1288
        %s1299 = scalar_lea.vmem %s1, 24
        %v1300 = vld [vmem:[%s1299] sm:$0x7]
        %1301 = vst [vmem:[#allocation1] ss:$4 sm:$0xff] %v243
        %s1302 = scalar_lea.vmem [#allocation1], 32
        %1303 = vst [vmem:[%s1302] ss:$4 sm:$0xff] %v244
        %v1304 = vld.sshfl [vmem:[#allocation1] sm:$0xff pattern:$0x73625140]
        %v1306 = vld.sshfl [vmem:[#allocation1 + $0x8] sm:$0xff pattern:$0x73625140]
        %v1308 = vld.sshfl [vmem:[#allocation1 + $0x10] sm:$0xff pattern:$0x73625140]
        %v1310 = vld.sshfl [vmem:[#allocation1 + $0x18] sm:$0xff pattern:$0x73625140]
        %v1312 = vld.sshfl [vmem:[#allocation1 + $0x20] sm:$0xff pattern:$0x73625140]
        %v1314 = vld.sshfl [vmem:[#allocation1 + $0x28] sm:$0xff pattern:$0x73625140]
        %v1316 = vld.sshfl [vmem:[#allocation1 + $0x30] sm:$0xff pattern:$0x73625140]
        %v1318 = vld.sshfl [vmem:[#allocation1 + $0x38] sm:$0xff pattern:$0x73625140]
        %1320 = vrot.lane.b32.xlu0 %v1304, 64
        %v1321 = vpop.permute.xlu0 %1320
        %1322 = vrot.lane.b32.xlu0 %v1306, 64
        %v1323 = vpop.permute.xlu0 %1322
        %1324 = vrot.lane.b32.xlu0 %v1308, 64
        %v1325 = vpop.permute.xlu0 %1324
        %1326 = vrot.lane.b32.xlu0 %v1310, 64
        %v1327 = vpop.permute.xlu0 %1326
        %1328 = vrot.lane.b32.xlu0 %v1312, 64
        %v1329 = vpop.permute.xlu0 %1328
        %1330 = vrot.lane.b32.xlu0 %v1314, 64
        %v1331 = vpop.permute.xlu0 %1330
        %1332 = vrot.lane.b32.xlu0 %v1316, 64
        %v1333 = vpop.permute.xlu0 %1332
        %1334 = vrot.lane.b32.xlu0 %v1318, 64
        %v1335 = vpop.permute.xlu0 %1334
        %vm1336 = vcmask 523264
        %v1337 = vsel %vm1336, %v1321, %v1323
        %v1338 = vsel %vm1336, %v1323, %v1325
        %v1339 = vsel %vm1336, %v1325, %v1327
        %v1340 = vsel %vm1336, %v1327, %v1329
        %v1341 = vsel %vm1336, %v1329, %v1331
        %v1342 = vsel %vm1336, %v1331, %v1333
        %v1343 = vsel %vm1336, %v1333, %v1335
        %v1345 = vsel %vm293, %v1300, 0
        %v1348 = vand.u32 %v1337, %v300
        %v1351 = vand.u32 %v1338, %v300
        %v1354 = vand.u32 %v1339, %v300
        %v1357 = vand.u32 %v1340, %v300
        %v1360 = vand.u32 %v1341, %v300
        %v1363 = vand.u32 %v1342, %v300
        %v1366 = vand.u32 %v1343, %v300
        %v1369 = vand.u32 %v1335, %v300
        %1371 = vmatpush.bf16.msra.mxu0 0
        %1372 = vmatpush.bf16.msra.mxu0 0
        %1373 = vmatpush.bf16.msra.mxu0 0
        %1374 = vmatpush.bf16.msra.mxu0 0
        %1375 = vmatpush.bf16.msra.mxu0 0
        %1376 = vmatpush.bf16.msra.mxu0 0
        %1377 = vmatpush.bf16.msra.mxu0 0
        %1378 = vmatpush.bf16.msra.mxu0 %v1348
        %1379 = vmatmul.bf16.gmra.mxu0 %v1345
        %v1380 = vpop.f32.mrf.mxu0
        %v1381 = vadd.f32 0.0, %v1380
        %v1382 = vpop.f32.mrf.mxu0
        %1383 = vdwg.mxu0
        %1384 = vmatpush.bf16.msra.mxu0 0
        %1385 = vmatpush.bf16.msra.mxu0 0
        %1386 = vmatpush.bf16.msra.mxu0 0
        %1387 = vmatpush.bf16.msra.mxu0 0
        %1388 = vmatpush.bf16.msra.mxu0 0
        %1389 = vmatpush.bf16.msra.mxu0 0
        %1390 = vmatpush.bf16.msra.mxu0 0
        %1391 = vmatpush.bf16.msra.mxu0 %v1351
        %1392 = vmatmul.bf16.gmra.mxu0 %v1345
        %v1393 = vpop.f32.mrf.mxu0
        %v1394 = vadd.f32 0.0, %v1393
        %v1395 = vpop.f32.mrf.mxu0
        %1396 = vdwg.mxu0
        %1397 = vmatpush.bf16.msra.mxu0 0
        %1398 = vmatpush.bf16.msra.mxu0 0
        %1399 = vmatpush.bf16.msra.mxu0 0
        %1400 = vmatpush.bf16.msra.mxu0 0
        %1401 = vmatpush.bf16.msra.mxu0 0
        %1402 = vmatpush.bf16.msra.mxu0 0
        %1403 = vmatpush.bf16.msra.mxu0 0
        %1404 = vmatpush.bf16.msra.mxu0 %v1354
        %1405 = vmatmul.bf16.gmra.mxu0 %v1345
        %v1406 = vpop.f32.mrf.mxu0
        %v1407 = vadd.f32 0.0, %v1406
        %v1408 = vpop.f32.mrf.mxu0
        %1409 = vdwg.mxu0
        %1410 = vmatpush.bf16.msra.mxu0 0
        %1411 = vmatpush.bf16.msra.mxu0 0
        %1412 = vmatpush.bf16.msra.mxu0 0
        %1413 = vmatpush.bf16.msra.mxu0 0
        %1414 = vmatpush.bf16.msra.mxu0 0
        %1415 = vmatpush.bf16.msra.mxu0 0
        %1416 = vmatpush.bf16.msra.mxu0 0
        %1417 = vmatpush.bf16.msra.mxu0 %v1357
        %1418 = vmatmul.bf16.gmra.mxu0 %v1345
        %v1419 = vpop.f32.mrf.mxu0
        %v1420 = vadd.f32 0.0, %v1419
        %v1421 = vpop.f32.mrf.mxu0
        %1422 = vdwg.mxu0
        %1423 = vmatpush.bf16.msra.mxu0 0
        %1424 = vmatpush.bf16.msra.mxu0 0
        %1425 = vmatpush.bf16.msra.mxu0 0
        %1426 = vmatpush.bf16.msra.mxu0 0
        %1427 = vmatpush.bf16.msra.mxu0 0
        %1428 = vmatpush.bf16.msra.mxu0 0
        %1429 = vmatpush.bf16.msra.mxu0 0
        %1430 = vmatpush.bf16.msra.mxu0 %v1360
        %1431 = vmatmul.bf16.gmra.mxu0 %v1345
        %v1432 = vpop.f32.mrf.mxu0
        %v1433 = vadd.f32 0.0, %v1432
        %v1434 = vpop.f32.mrf.mxu0
        %1435 = vdwg.mxu0
        %1436 = vmatpush.bf16.msra.mxu0 0
        %1437 = vmatpush.bf16.msra.mxu0 0
        %1438 = vmatpush.bf16.msra.mxu0 0
        %1439 = vmatpush.bf16.msra.mxu0 0
        %1440 = vmatpush.bf16.msra.mxu0 0
        %1441 = vmatpush.bf16.msra.mxu0 0
        %1442 = vmatpush.bf16.msra.mxu0 0
        %1443 = vmatpush.bf16.msra.mxu0 %v1363
        %1444 = vmatmul.bf16.gmra.mxu0 %v1345
        %v1445 = vpop.f32.mrf.mxu0
        %v1446 = vadd.f32 0.0, %v1445
        %v1447 = vpop.f32.mrf.mxu0
        %1448 = vdwg.mxu0
        %1449 = vmatpush.bf16.msra.mxu0 0
        %1450 = vmatpush.bf16.msra.mxu0 0
        %1451 = vmatpush.bf16.msra.mxu0 0
        %1452 = vmatpush.bf16.msra.mxu0 0
        %1453 = vmatpush.bf16.msra.mxu0 0
        %1454 = vmatpush.bf16.msra.mxu0 0
        %1455 = vmatpush.bf16.msra.mxu0 0
        %1456 = vmatpush.bf16.msra.mxu0 %v1366
        %1457 = vmatmul.bf16.gmra.mxu0 %v1345
        %v1458 = vpop.f32.mrf.mxu0
        %v1459 = vadd.f32 0.0, %v1458
        %v1460 = vpop.f32.mrf.mxu0
        %1461 = vdwg.mxu0
        %1462 = vmatpush.bf16.msra.mxu0 0
        %1463 = vmatpush.bf16.msra.mxu0 0
        %1464 = vmatpush.bf16.msra.mxu0 0
        %1465 = vmatpush.bf16.msra.mxu0 0
        %1466 = vmatpush.bf16.msra.mxu0 0
        %1467 = vmatpush.bf16.msra.mxu0 0
        %1468 = vmatpush.bf16.msra.mxu0 0
        %1469 = vmatpush.bf16.msra.mxu0 %v1369
        %1470 = vmatmul.bf16.gmra.mxu0 %v1345
        %v1471 = vpop.f32.mrf.mxu0
        %v1472 = vadd.f32 0.0, %v1471
        %v1473 = vpop.f32.mrf.mxu0
        %1474 = vdwg.mxu0
        %v1475 = vadd.f32 %v1291, %v1381
        %v1476 = vadd.f32 %v1292, %v1394
        %v1477 = vadd.f32 %v1293, %v1407
        %v1478 = vadd.f32 %v1294, %v1420
        %v1479 = vadd.f32 %v1295, %v1433
        %v1480 = vadd.f32 %v1296, %v1446
        %v1481 = vadd.f32 %v1297, %v1459
        %v1482 = vadd.f32 %v1298, %v1472
        %s1483 = scalar_lea.vmem %s1, 28
        %v1484 = vld [vmem:[%s1483] sm:$0x7]
        %1485 = vst [vmem:[#allocation1] ss:$4 sm:$0xff] %v243
        %s1486 = scalar_lea.vmem [#allocation1], 32
        %1487 = vst [vmem:[%s1486] ss:$4 sm:$0xff] %v244
        %v1488 = vld.sshfl [vmem:[#allocation1] sm:$0xff pattern:$0x73625140]
        %v1490 = vld.sshfl [vmem:[#allocation1 + $0x8] sm:$0xff pattern:$0x73625140]
        %v1492 = vld.sshfl [vmem:[#allocation1 + $0x10] sm:$0xff pattern:$0x73625140]
        %v1494 = vld.sshfl [vmem:[#allocation1 + $0x18] sm:$0xff pattern:$0x73625140]
        %v1496 = vld.sshfl [vmem:[#allocation1 + $0x20] sm:$0xff pattern:$0x73625140]
        %v1498 = vld.sshfl [vmem:[#allocation1 + $0x28] sm:$0xff pattern:$0x73625140]
        %v1500 = vld.sshfl [vmem:[#allocation1 + $0x30] sm:$0xff pattern:$0x73625140]
        %v1502 = vld.sshfl [vmem:[#allocation1 + $0x38] sm:$0xff pattern:$0x73625140]
        %1504 = vrot.lane.b32.xlu0 %v1488, 63
        %v1505 = vpop.permute.xlu0 %1504
        %1506 = vrot.lane.b32.xlu0 %v1490, 63
        %v1507 = vpop.permute.xlu0 %1506
        %1508 = vrot.lane.b32.xlu0 %v1492, 63
        %v1509 = vpop.permute.xlu0 %1508
        %1510 = vrot.lane.b32.xlu0 %v1494, 63
        %v1511 = vpop.permute.xlu0 %1510
        %1512 = vrot.lane.b32.xlu0 %v1496, 63
        %v1513 = vpop.permute.xlu0 %1512
        %1514 = vrot.lane.b32.xlu0 %v1498, 63
        %v1515 = vpop.permute.xlu0 %1514
        %1516 = vrot.lane.b32.xlu0 %v1500, 63
        %v1517 = vpop.permute.xlu0 %1516
        %1518 = vrot.lane.b32.xlu0 %v1502, 63
        %v1519 = vpop.permute.xlu0 %1518
        %vm1520 = vcmask 515072
        %v1521 = vsel %vm1520, %v1505, %v1507
        %v1522 = vsel %vm1520, %v1507, %v1509
        %v1523 = vsel %vm1520, %v1509, %v1511
        %v1524 = vsel %vm1520, %v1511, %v1513
        %v1525 = vsel %vm1520, %v1513, %v1515
        %v1526 = vsel %vm1520, %v1515, %v1517
        %v1527 = vsel %vm1520, %v1517, %v1519
        %v1529 = vsel %vm293, %v1484, 0
        %v1532 = vand.u32 %v1521, %v300
        %v1535 = vand.u32 %v1522, %v300
        %v1538 = vand.u32 %v1523, %v300
        %v1541 = vand.u32 %v1524, %v300
        %v1544 = vand.u32 %v1525, %v300
        %v1547 = vand.u32 %v1526, %v300
        %v1550 = vand.u32 %v1527, %v300
        %v1553 = vand.u32 %v1519, %v300
        %1555 = vmatpush.bf16.msra.mxu0 0
        %1556 = vmatpush.bf16.msra.mxu0 0
        %1557 = vmatpush.bf16.msra.mxu0 0
        %1558 = vmatpush.bf16.msra.mxu0 0
        %1559 = vmatpush.bf16.msra.mxu0 0
        %1560 = vmatpush.bf16.msra.mxu0 0
        %1561 = vmatpush.bf16.msra.mxu0 0
        %1562 = vmatpush.bf16.msra.mxu0 %v1532
        %1563 = vmatmul.bf16.gmra.mxu0 %v1529
        %v1564 = vpop.f32.mrf.mxu0
        %v1565 = vadd.f32 0.0, %v1564
        %v1566 = vpop.f32.mrf.mxu0
        %1567 = vdwg.mxu0
        %1568 = vmatpush.bf16.msra.mxu0 0
        %1569 = vmatpush.bf16.msra.mxu0 0
        %1570 = vmatpush.bf16.msra.mxu0 0
        %1571 = vmatpush.bf16.msra.mxu0 0
        %1572 = vmatpush.bf16.msra.mxu0 0
        %1573 = vmatpush.bf16.msra.mxu0 0
        %1574 = vmatpush.bf16.msra.mxu0 0
        %1575 = vmatpush.bf16.msra.mxu0 %v1535
        %1576 = vmatmul.bf16.gmra.mxu0 %v1529
        %v1577 = vpop.f32.mrf.mxu0
        %v1578 = vadd.f32 0.0, %v1577
        %v1579 = vpop.f32.mrf.mxu0
        %1580 = vdwg.mxu0
        %1581 = vmatpush.bf16.msra.mxu0 0
        %1582 = vmatpush.bf16.msra.mxu0 0
        %1583 = vmatpush.bf16.msra.mxu0 0
        %1584 = vmatpush.bf16.msra.mxu0 0
        %1585 = vmatpush.bf16.msra.mxu0 0
        %1586 = vmatpush.bf16.msra.mxu0 0
        %1587 = vmatpush.bf16.msra.mxu0 0
        %1588 = vmatpush.bf16.msra.mxu0 %v1538
        %1589 = vmatmul.bf16.gmra.mxu0 %v1529
        %v1590 = vpop.f32.mrf.mxu0
        %v1591 = vadd.f32 0.0, %v1590
        %v1592 = vpop.f32.mrf.mxu0
        %1593 = vdwg.mxu0
        %1594 = vmatpush.bf16.msra.mxu0 0
        %1595 = vmatpush.bf16.msra.mxu0 0
        %1596 = vmatpush.bf16.msra.mxu0 0
        %1597 = vmatpush.bf16.msra.mxu0 0
        %1598 = vmatpush.bf16.msra.mxu0 0
        %1599 = vmatpush.bf16.msra.mxu0 0
        %1600 = vmatpush.bf16.msra.mxu0 0
        %1601 = vmatpush.bf16.msra.mxu0 %v1541
        %1602 = vmatmul.bf16.gmra.mxu0 %v1529
        %v1603 = vpop.f32.mrf.mxu0
        %v1604 = vadd.f32 0.0, %v1603
        %v1605 = vpop.f32.mrf.mxu0
        %1606 = vdwg.mxu0
        %1607 = vmatpush.bf16.msra.mxu0 0
        %1608 = vmatpush.bf16.msra.mxu0 0
        %1609 = vmatpush.bf16.msra.mxu0 0
        %1610 = vmatpush.bf16.msra.mxu0 0
        %1611 = vmatpush.bf16.msra.mxu0 0
        %1612 = vmatpush.bf16.msra.mxu0 0
        %1613 = vmatpush.bf16.msra.mxu0 0
        %1614 = vmatpush.bf16.msra.mxu0 %v1544
        %1615 = vmatmul.bf16.gmra.mxu0 %v1529
        %v1616 = vpop.f32.mrf.mxu0
        %v1617 = vadd.f32 0.0, %v1616
        %v1618 = vpop.f32.mrf.mxu0
        %1619 = vdwg.mxu0
        %1620 = vmatpush.bf16.msra.mxu0 0
        %1621 = vmatpush.bf16.msra.mxu0 0
        %1622 = vmatpush.bf16.msra.mxu0 0
        %1623 = vmatpush.bf16.msra.mxu0 0
        %1624 = vmatpush.bf16.msra.mxu0 0
        %1625 = vmatpush.bf16.msra.mxu0 0
        %1626 = vmatpush.bf16.msra.mxu0 0
        %1627 = vmatpush.bf16.msra.mxu0 %v1547
        %1628 = vmatmul.bf16.gmra.mxu0 %v1529
        %v1629 = vpop.f32.mrf.mxu0
        %v1630 = vadd.f32 0.0, %v1629
        %v1631 = vpop.f32.mrf.mxu0
        %1632 = vdwg.mxu0
        %1633 = vmatpush.bf16.msra.mxu0 0
        %1634 = vmatpush.bf16.msra.mxu0 0
        %1635 = vmatpush.bf16.msra.mxu0 0
        %1636 = vmatpush.bf16.msra.mxu0 0
        %1637 = vmatpush.bf16.msra.mxu0 0
        %1638 = vmatpush.bf16.msra.mxu0 0
        %1639 = vmatpush.bf16.msra.mxu0 0
        %1640 = vmatpush.bf16.msra.mxu0 %v1550
        %1641 = vmatmul.bf16.gmra.mxu0 %v1529
        %v1642 = vpop.f32.mrf.mxu0
        %v1643 = vadd.f32 0.0, %v1642
        %v1644 = vpop.f32.mrf.mxu0
        %1645 = vdwg.mxu0
        %1646 = vmatpush.bf16.msra.mxu0 0
        %1647 = vmatpush.bf16.msra.mxu0 0
        %1648 = vmatpush.bf16.msra.mxu0 0
        %1649 = vmatpush.bf16.msra.mxu0 0
        %1650 = vmatpush.bf16.msra.mxu0 0
        %1651 = vmatpush.bf16.msra.mxu0 0
        %1652 = vmatpush.bf16.msra.mxu0 0
        %1653 = vmatpush.bf16.msra.mxu0 %v1553
        %1654 = vmatmul.bf16.gmra.mxu0 %v1529
        %v1655 = vpop.f32.mrf.mxu0
        %v1656 = vadd.f32 0.0, %v1655
        %v1657 = vpop.f32.mrf.mxu0
        %1658 = vdwg.mxu0
        %v1659 = vadd.f32 %v1475, %v1565
        %v1660 = vadd.f32 %v1476, %v1578
        %v1661 = vadd.f32 %v1477, %v1591
        %v1662 = vadd.f32 %v1478, %v1604
        %v1663 = vadd.f32 %v1479, %v1617
        %v1664 = vadd.f32 %v1480, %v1630
        %v1665 = vadd.f32 %v1481, %v1643
        %v1666 = vadd.f32 %v1482, %v1656
        %s1667 = scalar_lea.vmem %s1, 32
        %v1668 = vld [vmem:[%s1667] sm:$0x7]
        %1669 = vst [vmem:[#allocation1] ss:$4 sm:$0xff] %v243
        %s1670 = scalar_lea.vmem [#allocation1], 32
        %1671 = vst [vmem:[%s1670] ss:$4 sm:$0xff] %v244
        %v1672 = vld.sshfl [vmem:[#allocation1] sm:$0xff pattern:$0x73625140]
        %v1674 = vld.sshfl [vmem:[#allocation1 + $0x8] sm:$0xff pattern:$0x73625140]
        %v1676 = vld.sshfl [vmem:[#allocation1 + $0x10] sm:$0xff pattern:$0x73625140]
        %v1678 = vld.sshfl [vmem:[#allocation1 + $0x18] sm:$0xff pattern:$0x73625140]
        %v1680 = vld.sshfl [vmem:[#allocation1 + $0x20] sm:$0xff pattern:$0x73625140]
        %v1682 = vld.sshfl [vmem:[#allocation1 + $0x28] sm:$0xff pattern:$0x73625140]
        %v1684 = vld.sshfl [vmem:[#allocation1 + $0x30] sm:$0xff pattern:$0x73625140]
        %v1686 = vld.sshfl [vmem:[#allocation1 + $0x38] sm:$0xff pattern:$0x73625140]
        %1688 = vrot.lane.b32.xlu0 %v1672, 62
        %v1689 = vpop.permute.xlu0 %1688
        %1690 = vrot.lane.b32.xlu0 %v1674, 62
        %v1691 = vpop.permute.xlu0 %1690
        %1692 = vrot.lane.b32.xlu0 %v1676, 62
        %v1693 = vpop.permute.xlu0 %1692
        %1694 = vrot.lane.b32.xlu0 %v1678, 62
        %v1695 = vpop.permute.xlu0 %1694
        %1696 = vrot.lane.b32.xlu0 %v1680, 62
        %v1697 = vpop.permute.xlu0 %1696
        %1698 = vrot.lane.b32.xlu0 %v1682, 62
        %v1699 = vpop.permute.xlu0 %1698
        %1700 = vrot.lane.b32.xlu0 %v1684, 62
        %v1701 = vpop.permute.xlu0 %1700
        %1702 = vrot.lane.b32.xlu0 %v1686, 62
        %v1703 = vpop.permute.xlu0 %1702
        %vm1704 = vcmask 506880
        %v1705 = vsel %vm1704, %v1689, %v1691
        %v1706 = vsel %vm1704, %v1691, %v1693
        %v1707 = vsel %vm1704, %v1693, %v1695
        %v1708 = vsel %vm1704, %v1695, %v1697
        %v1709 = vsel %vm1704, %v1697, %v1699
        %v1710 = vsel %vm1704, %v1699, %v1701
        %v1711 = vsel %vm1704, %v1701, %v1703
        %v1713 = vsel %vm293, %v1668, 0
        %v1716 = vand.u32 %v1705, %v300
        %v1719 = vand.u32 %v1706, %v300
        %v1722 = vand.u32 %v1707, %v300
        %v1725 = vand.u32 %v1708, %v300
        %v1728 = vand.u32 %v1709, %v300
        %v1731 = vand.u32 %v1710, %v300
        %v1734 = vand.u32 %v1711, %v300
        %v1737 = vand.u32 %v1703, %v300
        %1739 = vmatpush.bf16.msra.mxu0 0
        %1740 = vmatpush.bf16.msra.mxu0 0
        %1741 = vmatpush.bf16.msra.mxu0 0
        %1742 = vmatpush.bf16.msra.mxu0 0
        %1743 = vmatpush.bf16.msra.mxu0 0
        %1744 = vmatpush.bf16.msra.mxu0 0
        %1745 = vmatpush.bf16.msra.mxu0 0
        %1746 = vmatpush.bf16.msra.mxu0 %v1716
        %1747 = vmatmul.bf16.gmra.mxu0 %v1713
        %v1748 = vpop.f32.mrf.mxu0
        %v1749 = vadd.f32 0.0, %v1748
        %v1750 = vpop.f32.mrf.mxu0
        %1751 = vdwg.mxu0
        %1752 = vmatpush.bf16.msra.mxu0 0
        %1753 = vmatpush.bf16.msra.mxu0 0
        %1754 = vmatpush.bf16.msra.mxu0 0
        %1755 = vmatpush.bf16.msra.mxu0 0
        %1756 = vmatpush.bf16.msra.mxu0 0
        %1757 = vmatpush.bf16.msra.mxu0 0
        %1758 = vmatpush.bf16.msra.mxu0 0
        %1759 = vmatpush.bf16.msra.mxu0 %v1719
        %1760 = vmatmul.bf16.gmra.mxu0 %v1713
        %v1761 = vpop.f32.mrf.mxu0
        %v1762 = vadd.f32 0.0, %v1761
        %v1763 = vpop.f32.mrf.mxu0
        %1764 = vdwg.mxu0
        %1765 = vmatpush.bf16.msra.mxu0 0
        %1766 = vmatpush.bf16.msra.mxu0 0
        %1767 = vmatpush.bf16.msra.mxu0 0
        %1768 = vmatpush.bf16.msra.mxu0 0
        %1769 = vmatpush.bf16.msra.mxu0 0
        %1770 = vmatpush.bf16.msra.mxu0 0
        %1771 = vmatpush.bf16.msra.mxu0 0
        %1772 = vmatpush.bf16.msra.mxu0 %v1722
        %1773 = vmatmul.bf16.gmra.mxu0 %v1713
        %v1774 = vpop.f32.mrf.mxu0
        %v1775 = vadd.f32 0.0, %v1774
        %v1776 = vpop.f32.mrf.mxu0
        %1777 = vdwg.mxu0
        %1778 = vmatpush.bf16.msra.mxu0 0
        %1779 = vmatpush.bf16.msra.mxu0 0
        %1780 = vmatpush.bf16.msra.mxu0 0
        %1781 = vmatpush.bf16.msra.mxu0 0
        %1782 = vmatpush.bf16.msra.mxu0 0
        %1783 = vmatpush.bf16.msra.mxu0 0
        %1784 = vmatpush.bf16.msra.mxu0 0
        %1785 = vmatpush.bf16.msra.mxu0 %v1725
        %1786 = vmatmul.bf16.gmra.mxu0 %v1713
        %v1787 = vpop.f32.mrf.mxu0
        %v1788 = vadd.f32 0.0, %v1787
        %v1789 = vpop.f32.mrf.mxu0
        %1790 = vdwg.mxu0
        %1791 = vmatpush.bf16.msra.mxu0 0
        %1792 = vmatpush.bf16.msra.mxu0 0
        %1793 = vmatpush.bf16.msra.mxu0 0
        %1794 = vmatpush.bf16.msra.mxu0 0
        %1795 = vmatpush.bf16.msra.mxu0 0
        %1796 = vmatpush.bf16.msra.mxu0 0
        %1797 = vmatpush.bf16.msra.mxu0 0
        %1798 = vmatpush.bf16.msra.mxu0 %v1728
        %1799 = vmatmul.bf16.gmra.mxu0 %v1713
        %v1800 = vpop.f32.mrf.mxu0
        %v1801 = vadd.f32 0.0, %v1800
        %v1802 = vpop.f32.mrf.mxu0
        %1803 = vdwg.mxu0
        %1804 = vmatpush.bf16.msra.mxu0 0
        %1805 = vmatpush.bf16.msra.mxu0 0
        %1806 = vmatpush.bf16.msra.mxu0 0
        %1807 = vmatpush.bf16.msra.mxu0 0
        %1808 = vmatpush.bf16.msra.mxu0 0
        %1809 = vmatpush.bf16.msra.mxu0 0
        %1810 = vmatpush.bf16.msra.mxu0 0
        %1811 = vmatpush.bf16.msra.mxu0 %v1731
        %1812 = vmatmul.bf16.gmra.mxu0 %v1713
        %v1813 = vpop.f32.mrf.mxu0
        %v1814 = vadd.f32 0.0, %v1813
        %v1815 = vpop.f32.mrf.mxu0
        %1816 = vdwg.mxu0
        %1817 = vmatpush.bf16.msra.mxu0 0
        %1818 = vmatpush.bf16.msra.mxu0 0
        %1819 = vmatpush.bf16.msra.mxu0 0
        %1820 = vmatpush.bf16.msra.mxu0 0
        %1821 = vmatpush.bf16.msra.mxu0 0
        %1822 = vmatpush.bf16.msra.mxu0 0
        %1823 = vmatpush.bf16.msra.mxu0 0
        %1824 = vmatpush.bf16.msra.mxu0 %v1734
        %1825 = vmatmul.bf16.gmra.mxu0 %v1713
        %v1826 = vpop.f32.mrf.mxu0
        %v1827 = vadd.f32 0.0, %v1826
        %v1828 = vpop.f32.mrf.mxu0
        %1829 = vdwg.mxu0
        %1830 = vmatpush.bf16.msra.mxu0 0
        %1831 = vmatpush.bf16.msra.mxu0 0
        %1832 = vmatpush.bf16.msra.mxu0 0
        %1833 = vmatpush.bf16.msra.mxu0 0
        %1834 = vmatpush.bf16.msra.mxu0 0
        %1835 = vmatpush.bf16.msra.mxu0 0
        %1836 = vmatpush.bf16.msra.mxu0 0
        %1837 = vmatpush.bf16.msra.mxu0 %v1737
        %1838 = vmatmul.bf16.gmra.mxu0 %v1713
        %v1839 = vpop.f32.mrf.mxu0
        %v1840 = vadd.f32 0.0, %v1839
        %v1841 = vpop.f32.mrf.mxu0
        %1842 = vdwg.mxu0
        %v1843 = vadd.f32 %v1659, %v1749
        %v1844 = vadd.f32 %v1660, %v1762
        %v1845 = vadd.f32 %v1661, %v1775
        %v1846 = vadd.f32 %v1662, %v1788
        %v1847 = vadd.f32 %v1663, %v1801
        %v1848 = vadd.f32 %v1664, %v1814
        %v1849 = vadd.f32 %v1665, %v1827
        %v1850 = vadd.f32 %v1666, %v1840
        %v1851 = vld [vmem:[%s2] sm:$0x3f]
        %1853 = vset.pattern.permute.xlu0 0
        %1854 = vperm.xlu0 %1853, %v1851
        %v1855 = vpop.permute.xlu0 %1854
        %v1857 = vadd.f32 %v1843, %v1855
        %v1858 = vadd.f32 %v1844, %v1855
        %v1859 = vadd.f32 %v1845, %v1855
        %v1860 = vadd.f32 %v1846, %v1855
        %v1861 = vadd.f32 %v1847, %v1855
        %v1862 = vadd.f32 %v1848, %v1855
        %v1863 = vadd.f32 %v1849, %v1855
        %v1864 = vadd.f32 %v1850, %v1855
        %v1865 = vmax.f32 %v1857, 0.0
        %v1866 = vmax.f32 %v1858, 0.0
        %v1867 = vmax.f32 %v1859, 0.0
        %v1868 = vmax.f32 %v1860, 0.0
        %v1869 = vmax.f32 %v1861, 0.0
        %v1870 = vmax.f32 %v1862, 0.0
        %v1871 = vmax.f32 %v1863, 0.0
        %v1872 = vmax.f32 %v1864, 0.0
        %1881 = vrot.lane.b32.xlu0 %v1865, 127
        %v1882 = vpop.permute.xlu0 %1881
        %1883 = vrot.lane.b32.xlu0 %v1866, 127
        %v1884 = vpop.permute.xlu0 %1883
        %1885 = vrot.lane.b32.xlu0 %v1867, 127
        %v1886 = vpop.permute.xlu0 %1885
        %1887 = vrot.lane.b32.xlu0 %v1868, 127
        %v1888 = vpop.permute.xlu0 %1887
        %1889 = vrot.lane.b32.xlu0 %v1869, 127
        %v1890 = vpop.permute.xlu0 %1889
        %1891 = vrot.lane.b32.xlu0 %v1870, 127
        %v1892 = vpop.permute.xlu0 %1891
        %1893 = vrot.lane.b32.xlu0 %v1871, 127
        %v1894 = vpop.permute.xlu0 %1893
        %1895 = vrot.lane.b32.xlu0 %v1872, 127
        %v1896 = vpop.permute.xlu0 %1895
        %vm1897 = vcmask 1039360
        %v1898 = vsel %vm1897, %v1882, %v1884
        %v1899 = vsel %vm1897, %v1884, %v1886
        %v1900 = vsel %vm1897, %v1886, %v1888
        %v1901 = vsel %vm1897, %v1888, %v1890
        %v1902 = vsel %vm1897, %v1890, %v1892
        %v1903 = vsel %vm1897, %v1892, %v1894
        %v1904 = vsel %vm1897, %v1894, %v1896
        %v1913 = vmax.f32 %v1865, %v1898
        %v1914 = vmax.f32 %v1866, %v1899
        %v1915 = vmax.f32 %v1867, %v1900
        %v1916 = vmax.f32 %v1868, %v1901
        %v1917 = vmax.f32 %v1869, %v1902
        %v1918 = vmax.f32 %v1870, %v1903
        %v1919 = vmax.f32 %v1871, %v1904
        %v1920 = vmax.f32 %v1872, %v1896
        %1921 = vrot.lane.b32.xlu0 %v1865, 96
        %v1922 = vpop.permute.xlu0 %1921
        %1923 = vrot.lane.b32.xlu0 %v1866, 96
        %v1924 = vpop.permute.xlu0 %1923
        %1925 = vrot.lane.b32.xlu0 %v1867, 96
        %v1926 = vpop.permute.xlu0 %1925
        %1927 = vrot.lane.b32.xlu0 %v1868, 96
        %v1928 = vpop.permute.xlu0 %1927
        %1929 = vrot.lane.b32.xlu0 %v1869, 96
        %v1930 = vpop.permute.xlu0 %1929
        %1931 = vrot.lane.b32.xlu0 %v1870, 96
        %v1932 = vpop.permute.xlu0 %1931
        %1933 = vrot.lane.b32.xlu0 %v1871, 96
        %v1934 = vpop.permute.xlu0 %1933
        %1935 = vrot.lane.b32.xlu0 %v1872, 96
        %v1936 = vpop.permute.xlu0 %1935
        %vm1937 = vcmask 785408
        %v1938 = vsel %vm1937, %v1922, %v1924
        %v1939 = vsel %vm1937, %v1924, %v1926
        %v1940 = vsel %vm1937, %v1926, %v1928
        %v1941 = vsel %vm1937, %v1928, %v1930
        %v1942 = vsel %vm1937, %v1930, %v1932
        %v1943 = vsel %vm1937, %v1932, %v1934
        %v1944 = vsel %vm1937, %v1934, %v1936
        %v1953 = vmax.f32 %v1913, %v1938
        %v1954 = vmax.f32 %v1914, %v1939
        %v1955 = vmax.f32 %v1915, %v1940
        %v1956 = vmax.f32 %v1916, %v1941
        %v1957 = vmax.f32 %v1917, %v1942
        %v1958 = vmax.f32 %v1918, %v1943
        %v1959 = vmax.f32 %v1919, %v1944
        %v1960 = vmax.f32 %v1920, %v1936
        %1961 = vrot.lane.b32.xlu0 %v1865, 95
        %v1962 = vpop.permute.xlu0 %1961
        %1963 = vrot.lane.b32.xlu0 %v1866, 95
        %v1964 = vpop.permute.xlu0 %1963
        %1965 = vrot.lane.b32.xlu0 %v1867, 95
        %v1966 = vpop.permute.xlu0 %1965
        %1967 = vrot.lane.b32.xlu0 %v1868, 95
        %v1968 = vpop.permute.xlu0 %1967
        %1969 = vrot.lane.b32.xlu0 %v1869, 95
        %v1970 = vpop.permute.xlu0 %1969
        %1971 = vrot.lane.b32.xlu0 %v1870, 95
        %v1972 = vpop.permute.xlu0 %1971
        %1973 = vrot.lane.b32.xlu0 %v1871, 95
        %v1974 = vpop.permute.xlu0 %1973
        %1975 = vrot.lane.b32.xlu0 %v1872, 95
        %v1976 = vpop.permute.xlu0 %1975
        %vm1977 = vcmask 777216
        %v1978 = vsel %vm1977, %v1962, %v1964
        %v1979 = vsel %vm1977, %v1964, %v1966
        %v1980 = vsel %vm1977, %v1966, %v1968
        %v1981 = vsel %vm1977, %v1968, %v1970
        %v1982 = vsel %vm1977, %v1970, %v1972
        %v1983 = vsel %vm1977, %v1972, %v1974
        %v1984 = vsel %vm1977, %v1974, %v1976
        %v1993 = vmax.f32 %v1953, %v1978
        %v1994 = vmax.f32 %v1954, %v1979
        %v1995 = vmax.f32 %v1955, %v1980
        %v1996 = vmax.f32 %v1956, %v1981
        %v1997 = vmax.f32 %v1957, %v1982
        %v1998 = vmax.f32 %v1958, %v1983
        %v1999 = vmax.f32 %v1959, %v1984
        %v2000 = vmax.f32 %v1960, %v1976
        %v2001 = vpack.c.bf16 %v1994, %v1993
        %v2002 = vpack.c.bf16 %v1996, %v1995
        %v2003 = vpack.c.bf16 %v1998, %v1997
        %v2004 = vpack.c.bf16 %v2000, %v1999
        %v2005 = vld [vmem:[%s3] sm:$0xf]
        %v2006 = vld [vmem:[%s3 + $0x4] sm:$0xf]
        %s2007 = scalar_lea.vmem %s3, 8
        %v2008 = vld [vmem:[%s2007] sm:$0xf]
        %v2009 = vld [vmem:[%s2007 + $0x4] sm:$0xf]
        %v2012 = vunpack.c.l.b16 %v2008
        %v2013 = vunpack.c.l.b16 %v2009
        %v2014 = vpack.c.b16 %v2013, %v2012
        %v2019 = vunpack.c.l.b16 %v2001
        %v2020 = vunpack.c.h.b16 %v2001
        %v2021 = vunpack.c.l.b16 %v2002
        %v2022 = vunpack.c.h.b16 %v2002
        %v2023 = vunpack.c.l.b16 %v2003
        %v2024 = vunpack.c.h.b16 %v2003
        %v2025 = vunpack.c.l.b16 %v2004
        %v2026 = vpack.c.b16 %v2019, %v2019
        %v2027 = vpack.c.b16 %v2020, %v2020
        %v2028 = vpack.c.b16 %v2021, %v2021
        %v2029 = vpack.c.b16 %v2022, %v2022
        %v2030 = vpack.c.b16 %v2023, %v2023
        %v2031 = vpack.c.b16 %v2024, %v2024
        %v2032 = vpack.c.b16 %v2025, %v2025
        %2033 = vrot.lane.b32.xlu0 %v2026, 126
        %v2034 = vpop.permute.xlu0 %2033
        %2035 = vrot.lane.b32.xlu0 %v2027, 126
        %v2036 = vpop.permute.xlu0 %2035
        %2037 = vrot.lane.b32.xlu0 %v2028, 126
        %v2038 = vpop.permute.xlu0 %2037
        %2039 = vrot.lane.b32.xlu0 %v2029, 126
        %v2040 = vpop.permute.xlu0 %2039
        %2041 = vrot.lane.b32.xlu0 %v2030, 126
        %v2042 = vpop.permute.xlu0 %2041
        %2043 = vrot.lane.b32.xlu0 %v2031, 126
        %v2044 = vpop.permute.xlu0 %2043
        %2045 = vrot.lane.b32.xlu0 %v2032, 126
        %v2046 = vpop.permute.xlu0 %2045
        %v2047 = vsel %vm600, %v2034, %v2036
        %v2048 = vsel %vm600, %v2036, %v2038
        %v2049 = vsel %vm600, %v2038, %v2040
        %v2050 = vsel %vm600, %v2040, %v2042
        %v2051 = vsel %vm600, %v2042, %v2044
        %v2052 = vsel %vm600, %v2044, %v2046
        %vm2053 = vcmask 48128
        %v2055 = vsel %vm2053, %v2014, 0
        %vm2057 = vcmask 1042432
        %v2059 = vsel %vm2057, %v2047, 0
        %v2062 = vsel %vm2057, %v2048, 0
        %v2065 = vsel %vm2057, %v2049, 0
        %v2068 = vsel %vm2057, %v2050, 0
        %v2071 = vsel %vm2057, %v2051, 0
        %v2074 = vsel %vm2057, %v2052, 0
        %2076 = vmatpush.bf16.msra.mxu0 0
        %2077 = vmatpush.bf16.msra.mxu0 0
        %2078 = vmatpush.bf16.msra.mxu0 0
        %2079 = vmatpush.bf16.msra.mxu0 0
        %2080 = vmatpush.bf16.msra.mxu0 0
        %2081 = vmatpush.bf16.msra.mxu0 0
        %2082 = vmatpush.bf16.msra.mxu0 0
        %2083 = vmatpush.bf16.msra.mxu0 %v2059
        %2084 = vmatmul.bf16.gmra.mxu0 %v2055
        %v2085 = vpop.f32.mrf.mxu0
        %v2086 = vadd.f32 0.0, %v2085
        %v2087 = vpop.f32.mrf.mxu0
        %v2088 = vadd.f32 0.0, %v2087
        %2089 = vdwg.mxu0
        %2090 = vmatpush.bf16.msra.mxu0 0
        %2091 = vmatpush.bf16.msra.mxu0 0
        %2092 = vmatpush.bf16.msra.mxu0 0
        %2093 = vmatpush.bf16.msra.mxu0 0
        %2094 = vmatpush.bf16.msra.mxu0 0
        %2095 = vmatpush.bf16.msra.mxu0 0
        %2096 = vmatpush.bf16.msra.mxu0 0
        %2097 = vmatpush.bf16.msra.mxu0 %v2062
        %2098 = vmatmul.bf16.gmra.mxu0 %v2055
        %v2099 = vpop.f32.mrf.mxu0
        %v2100 = vadd.f32 0.0, %v2099
        %v2101 = vpop.f32.mrf.mxu0
        %v2102 = vadd.f32 0.0, %v2101
        %2103 = vdwg.mxu0
        %2104 = vmatpush.bf16.msra.mxu0 0
        %2105 = vmatpush.bf16.msra.mxu0 0
        %2106 = vmatpush.bf16.msra.mxu0 0
        %2107 = vmatpush.bf16.msra.mxu0 0
        %2108 = vmatpush.bf16.msra.mxu0 0
        %2109 = vmatpush.bf16.msra.mxu0 0
        %2110 = vmatpush.bf16.msra.mxu0 0
        %2111 = vmatpush.bf16.msra.mxu0 %v2065
        %2112 = vmatmul.bf16.gmra.mxu0 %v2055
        %v2113 = vpop.f32.mrf.mxu0
        %v2114 = vadd.f32 0.0, %v2113
        %v2115 = vpop.f32.mrf.mxu0
        %v2116 = vadd.f32 0.0, %v2115
        %2117 = vdwg.mxu0
        %2118 = vmatpush.bf16.msra.mxu0 0
        %2119 = vmatpush.bf16.msra.mxu0 0
        %2120 = vmatpush.bf16.msra.mxu0 0
        %2121 = vmatpush.bf16.msra.mxu0 0
        %2122 = vmatpush.bf16.msra.mxu0 0
        %2123 = vmatpush.bf16.msra.mxu0 0
        %2124 = vmatpush.bf16.msra.mxu0 0
        %2125 = vmatpush.bf16.msra.mxu0 %v2068
        %2126 = vmatmul.bf16.gmra.mxu0 %v2055
        %v2127 = vpop.f32.mrf.mxu0
        %v2128 = vadd.f32 0.0, %v2127
        %v2129 = vpop.f32.mrf.mxu0
        %v2130 = vadd.f32 0.0, %v2129
        %2131 = vdwg.mxu0
        %2132 = vmatpush.bf16.msra.mxu0 0
        %2133 = vmatpush.bf16.msra.mxu0 0
        %2134 = vmatpush.bf16.msra.mxu0 0
        %2135 = vmatpush.bf16.msra.mxu0 0
        %2136 = vmatpush.bf16.msra.mxu0 0
        %2137 = vmatpush.bf16.msra.mxu0 0
        %2138 = vmatpush.bf16.msra.mxu0 0
        %2139 = vmatpush.bf16.msra.mxu0 %v2071
        %2140 = vmatmul.bf16.gmra.mxu0 %v2055
        %v2141 = vpop.f32.mrf.mxu0
        %v2142 = vadd.f32 0.0, %v2141
        %v2143 = vpop.f32.mrf.mxu0
        %v2144 = vadd.f32 0.0, %v2143
        %2145 = vdwg.mxu0
        %2146 = vmatpush.bf16.msra.mxu0 0
        %2147 = vmatpush.bf16.msra.mxu0 0
        %2148 = vmatpush.bf16.msra.mxu0 0
        %2149 = vmatpush.bf16.msra.mxu0 0
        %2150 = vmatpush.bf16.msra.mxu0 0
        %2151 = vmatpush.bf16.msra.mxu0 0
        %2152 = vmatpush.bf16.msra.mxu0 0
        %2153 = vmatpush.bf16.msra.mxu0 %v2074
        %2154 = vmatmul.bf16.gmra.mxu0 %v2055
        %v2155 = vpop.f32.mrf.mxu0
        %v2156 = vadd.f32 0.0, %v2155
        %v2157 = vpop.f32.mrf.mxu0
        %v2158 = vadd.f32 0.0, %v2157
        %2159 = vdwg.mxu0
        %v2162 = vunpack.c.l.b16 %v2005
        %v2163 = vunpack.c.l.b16 %v2006
        %v2164 = vpack.c.b16 %v2163, %v2162
        %v2166 = vsel %vm2053, %v2164, 0
        %v2169 = vsel %vm2057, %v2026, 0
        %v2172 = vsel %vm2057, %v2027, 0
        %v2175 = vsel %vm2057, %v2028, 0
        %v2178 = vsel %vm2057, %v2029, 0
        %v2181 = vsel %vm2057, %v2030, 0
        %v2184 = vsel %vm2057, %v2031, 0
        %2186 = vmatpush.bf16.msra.mxu0 0
        %2187 = vmatpush.bf16.msra.mxu0 0
        %2188 = vmatpush.bf16.msra.mxu0 0
        %2189 = vmatpush.bf16.msra.mxu0 0
        %2190 = vmatpush.bf16.msra.mxu0 0
        %2191 = vmatpush.bf16.msra.mxu0 0
        %2192 = vmatpush.bf16.msra.mxu0 0
        %2193 = vmatpush.bf16.msra.mxu0 %v2169
        %2194 = vmatmul.bf16.gmra.mxu0 %v2166
        %v2195 = vpop.f32.mrf.mxu0
        %v2196 = vadd.f32 %v2086, %v2195
        %v2197 = vpop.f32.mrf.mxu0
        %v2198 = vadd.f32 %v2088, %v2197
        %2199 = vdwg.mxu0
        %2200 = vmatpush.bf16.msra.mxu0 0
        %2201 = vmatpush.bf16.msra.mxu0 0
        %2202 = vmatpush.bf16.msra.mxu0 0
        %2203 = vmatpush.bf16.msra.mxu0 0
        %2204 = vmatpush.bf16.msra.mxu0 0
        %2205 = vmatpush.bf16.msra.mxu0 0
        %2206 = vmatpush.bf16.msra.mxu0 0
        %2207 = vmatpush.bf16.msra.mxu0 %v2172
        %2208 = vmatmul.bf16.gmra.mxu0 %v2166
        %v2209 = vpop.f32.mrf.mxu0
        %v2210 = vadd.f32 %v2100, %v2209
        %v2211 = vpop.f32.mrf.mxu0
        %v2212 = vadd.f32 %v2102, %v2211
        %2213 = vdwg.mxu0
        %2214 = vmatpush.bf16.msra.mxu0 0
        %2215 = vmatpush.bf16.msra.mxu0 0
        %2216 = vmatpush.bf16.msra.mxu0 0
        %2217 = vmatpush.bf16.msra.mxu0 0
        %2218 = vmatpush.bf16.msra.mxu0 0
        %2219 = vmatpush.bf16.msra.mxu0 0
        %2220 = vmatpush.bf16.msra.mxu0 0
        %2221 = vmatpush.bf16.msra.mxu0 %v2175
        %2222 = vmatmul.bf16.gmra.mxu0 %v2166
        %v2223 = vpop.f32.mrf.mxu0
        %v2224 = vadd.f32 %v2114, %v2223
        %v2225 = vpop.f32.mrf.mxu0
        %v2226 = vadd.f32 %v2116, %v2225
        %2227 = vdwg.mxu0
        %2228 = vmatpush.bf16.msra.mxu0 0
        %2229 = vmatpush.bf16.msra.mxu0 0
        %2230 = vmatpush.bf16.msra.mxu0 0
        %2231 = vmatpush.bf16.msra.mxu0 0
        %2232 = vmatpush.bf16.msra.mxu0 0
        %2233 = vmatpush.bf16.msra.mxu0 0
        %2234 = vmatpush.bf16.msra.mxu0 0
        %2235 = vmatpush.bf16.msra.mxu0 %v2178
        %2236 = vmatmul.bf16.gmra.mxu0 %v2166
        %v2237 = vpop.f32.mrf.mxu0
        %v2238 = vadd.f32 %v2128, %v2237
        %v2239 = vpop.f32.mrf.mxu0
        %v2240 = vadd.f32 %v2130, %v2239
        %2241 = vdwg.mxu0
        %2242 = vmatpush.bf16.msra.mxu0 0
        %2243 = vmatpush.bf16.msra.mxu0 0
        %2244 = vmatpush.bf16.msra.mxu0 0
        %2245 = vmatpush.bf16.msra.mxu0 0
        %2246 = vmatpush.bf16.msra.mxu0 0
        %2247 = vmatpush.bf16.msra.mxu0 0
        %2248 = vmatpush.bf16.msra.mxu0 0
        %2249 = vmatpush.bf16.msra.mxu0 %v2181
        %2250 = vmatmul.bf16.gmra.mxu0 %v2166
        %v2251 = vpop.f32.mrf.mxu0
        %v2252 = vadd.f32 %v2142, %v2251
        %v2253 = vpop.f32.mrf.mxu0
        %v2254 = vadd.f32 %v2144, %v2253
        %2255 = vdwg.mxu0
        %2256 = vmatpush.bf16.msra.mxu0 0
        %2257 = vmatpush.bf16.msra.mxu0 0
        %2258 = vmatpush.bf16.msra.mxu0 0
        %2259 = vmatpush.bf16.msra.mxu0 0
        %2260 = vmatpush.bf16.msra.mxu0 0
        %2261 = vmatpush.bf16.msra.mxu0 0
        %2262 = vmatpush.bf16.msra.mxu0 0
        %2263 = vmatpush.bf16.msra.mxu0 %v2184
        %2264 = vmatmul.bf16.gmra.mxu0 %v2166
        %v2265 = vpop.f32.mrf.mxu0
        %v2266 = vadd.f32 %v2156, %v2265
        %v2267 = vpop.f32.mrf.mxu0
        %v2268 = vadd.f32 %v2158, %v2267
        %2269 = vdwg.mxu0
        %s2270 = scalar_lea.vmem %s3, 16
        %v2271 = vld [vmem:[%s2270] sm:$0xf]
        %v2272 = vld [vmem:[%s2270 + $0x4] sm:$0xf]
        %v2275 = vunpack.c.l.b16 %v2271
        %v2276 = vunpack.c.l.b16 %v2272
        %v2277 = vpack.c.b16 %v2276, %v2275
        %2278 = vrot.lane.b32.xlu0 %v2026, 124
        %v2279 = vpop.permute.xlu0 %2278
        %2280 = vrot.lane.b32.xlu0 %v2027, 124
        %v2281 = vpop.permute.xlu0 %2280
        %2282 = vrot.lane.b32.xlu0 %v2028, 124
        %v2283 = vpop.permute.xlu0 %2282
        %2284 = vrot.lane.b32.xlu0 %v2029, 124
        %v2285 = vpop.permute.xlu0 %2284
        %2286 = vrot.lane.b32.xlu0 %v2030, 124
        %v2287 = vpop.permute.xlu0 %2286
        %2288 = vrot.lane.b32.xlu0 %v2031, 124
        %v2289 = vpop.permute.xlu0 %2288
        %2290 = vrot.lane.b32.xlu0 %v2032, 124
        %v2291 = vpop.permute.xlu0 %2290
        %vm2292 = vcmask 1014784
        %v2293 = vsel %vm2292, %v2279, %v2281
        %v2294 = vsel %vm2292, %v2281, %v2283
        %v2295 = vsel %vm2292, %v2283, %v2285
        %v2296 = vsel %vm2292, %v2285, %v2287
        %v2297 = vsel %vm2292, %v2287, %v2289
        %v2298 = vsel %vm2292, %v2289, %v2291
        %v2300 = vsel %vm2053, %v2277, 0
        %v2303 = vsel %vm2057, %v2293, 0
        %v2306 = vsel %vm2057, %v2294, 0
        %v2309 = vsel %vm2057, %v2295, 0
        %v2312 = vsel %vm2057, %v2296, 0
        %v2315 = vsel %vm2057, %v2297, 0
        %v2318 = vsel %vm2057, %v2298, 0
        %2320 = vmatpush.bf16.msra.mxu0 0
        %2321 = vmatpush.bf16.msra.mxu0 0
        %2322 = vmatpush.bf16.msra.mxu0 0
        %2323 = vmatpush.bf16.msra.mxu0 0
        %2324 = vmatpush.bf16.msra.mxu0 0
        %2325 = vmatpush.bf16.msra.mxu0 0
        %2326 = vmatpush.bf16.msra.mxu0 0
        %2327 = vmatpush.bf16.msra.mxu0 %v2303
        %2328 = vmatmul.bf16.gmra.mxu0 %v2300
        %v2329 = vpop.f32.mrf.mxu0
        %v2330 = vadd.f32 0.0, %v2329
        %v2331 = vpop.f32.mrf.mxu0
        %v2332 = vadd.f32 0.0, %v2331
        %2333 = vdwg.mxu0
        %2334 = vmatpush.bf16.msra.mxu0 0
        %2335 = vmatpush.bf16.msra.mxu0 0
        %2336 = vmatpush.bf16.msra.mxu0 0
        %2337 = vmatpush.bf16.msra.mxu0 0
        %2338 = vmatpush.bf16.msra.mxu0 0
        %2339 = vmatpush.bf16.msra.mxu0 0
        %2340 = vmatpush.bf16.msra.mxu0 0
        %2341 = vmatpush.bf16.msra.mxu0 %v2306
        %2342 = vmatmul.bf16.gmra.mxu0 %v2300
        %v2343 = vpop.f32.mrf.mxu0
        %v2344 = vadd.f32 0.0, %v2343
        %v2345 = vpop.f32.mrf.mxu0
        %v2346 = vadd.f32 0.0, %v2345
        %2347 = vdwg.mxu0
        %2348 = vmatpush.bf16.msra.mxu0 0
        %2349 = vmatpush.bf16.msra.mxu0 0
        %2350 = vmatpush.bf16.msra.mxu0 0
        %2351 = vmatpush.bf16.msra.mxu0 0
        %2352 = vmatpush.bf16.msra.mxu0 0
        %2353 = vmatpush.bf16.msra.mxu0 0
        %2354 = vmatpush.bf16.msra.mxu0 0
        %2355 = vmatpush.bf16.msra.mxu0 %v2309
        %2356 = vmatmul.bf16.gmra.mxu0 %v2300
        %v2357 = vpop.f32.mrf.mxu0
        %v2358 = vadd.f32 0.0, %v2357
        %v2359 = vpop.f32.mrf.mxu0
        %v2360 = vadd.f32 0.0, %v2359
        %2361 = vdwg.mxu0
        %2362 = vmatpush.bf16.msra.mxu0 0
        %2363 = vmatpush.bf16.msra.mxu0 0
        %2364 = vmatpush.bf16.msra.mxu0 0
        %2365 = vmatpush.bf16.msra.mxu0 0
        %2366 = vmatpush.bf16.msra.mxu0 0
        %2367 = vmatpush.bf16.msra.mxu0 0
        %2368 = vmatpush.bf16.msra.mxu0 0
        %2369 = vmatpush.bf16.msra.mxu0 %v2312
        %2370 = vmatmul.bf16.gmra.mxu0 %v2300
        %v2371 = vpop.f32.mrf.mxu0
        %v2372 = vadd.f32 0.0, %v2371
        %v2373 = vpop.f32.mrf.mxu0
        %v2374 = vadd.f32 0.0, %v2373
        %2375 = vdwg.mxu0
        %2376 = vmatpush.bf16.msra.mxu0 0
        %2377 = vmatpush.bf16.msra.mxu0 0
        %2378 = vmatpush.bf16.msra.mxu0 0
        %2379 = vmatpush.bf16.msra.mxu0 0
        %2380 = vmatpush.bf16.msra.mxu0 0
        %2381 = vmatpush.bf16.msra.mxu0 0
        %2382 = vmatpush.bf16.msra.mxu0 0
        %2383 = vmatpush.bf16.msra.mxu0 %v2315
        %2384 = vmatmul.bf16.gmra.mxu0 %v2300
        %v2385 = vpop.f32.mrf.mxu0
        %v2386 = vadd.f32 0.0, %v2385
        %v2387 = vpop.f32.mrf.mxu0
        %v2388 = vadd.f32 0.0, %v2387
        %2389 = vdwg.mxu0
        %2390 = vmatpush.bf16.msra.mxu0 0
        %2391 = vmatpush.bf16.msra.mxu0 0
        %2392 = vmatpush.bf16.msra.mxu0 0
        %2393 = vmatpush.bf16.msra.mxu0 0
        %2394 = vmatpush.bf16.msra.mxu0 0
        %2395 = vmatpush.bf16.msra.mxu0 0
        %2396 = vmatpush.bf16.msra.mxu0 0
        %2397 = vmatpush.bf16.msra.mxu0 %v2318
        %2398 = vmatmul.bf16.gmra.mxu0 %v2300
        %v2399 = vpop.f32.mrf.mxu0
        %v2400 = vadd.f32 0.0, %v2399
        %v2401 = vpop.f32.mrf.mxu0
        %v2402 = vadd.f32 0.0, %v2401
        %2403 = vdwg.mxu0
        %v2404 = vadd.f32 %v2196, %v2330
        %v2405 = vadd.f32 %v2210, %v2344
        %v2406 = vadd.f32 %v2224, %v2358
        %v2407 = vadd.f32 %v2238, %v2372
        %v2408 = vadd.f32 %v2252, %v2386
        %v2409 = vadd.f32 %v2266, %v2400
        %v2410 = vadd.f32 %v2198, %v2332
        %v2411 = vadd.f32 %v2212, %v2346
        %v2412 = vadd.f32 %v2226, %v2360
        %v2413 = vadd.f32 %v2240, %v2374
        %v2414 = vadd.f32 %v2254, %v2388
        %v2415 = vadd.f32 %v2268, %v2402
        %s2416 = scalar_lea.vmem %s3, 24
        %v2417 = vld [vmem:[%s2416] sm:$0xf]
        %v2418 = vld [vmem:[%s2416 + $0x4] sm:$0xf]
        %v2421 = vunpack.c.l.b16 %v2417
        %v2422 = vunpack.c.l.b16 %v2418
        %v2423 = vpack.c.b16 %v2422, %v2421
        %2424 = vrot.lane.b32.xlu0 %v2026, 64
        %v2425 = vpop.permute.xlu0 %2424
        %2426 = vrot.lane.b32.xlu0 %v2027, 64
        %v2427 = vpop.permute.xlu0 %2426
        %2428 = vrot.lane.b32.xlu0 %v2028, 64
        %v2429 = vpop.permute.xlu0 %2428
        %2430 = vrot.lane.b32.xlu0 %v2029, 64
        %v2431 = vpop.permute.xlu0 %2430
        %2432 = vrot.lane.b32.xlu0 %v2030, 64
        %v2433 = vpop.permute.xlu0 %2432
        %2434 = vrot.lane.b32.xlu0 %v2031, 64
        %v2435 = vpop.permute.xlu0 %2434
        %2436 = vrot.lane.b32.xlu0 %v2032, 64
        %v2437 = vpop.permute.xlu0 %2436
        %v2438 = vsel %vm1336, %v2425, %v2427
        %v2439 = vsel %vm1336, %v2427, %v2429
        %v2440 = vsel %vm1336, %v2429, %v2431
        %v2441 = vsel %vm1336, %v2431, %v2433
        %v2442 = vsel %vm1336, %v2433, %v2435
        %v2443 = vsel %vm1336, %v2435, %v2437
        %v2445 = vsel %vm2053, %v2423, 0
        %v2448 = vsel %vm2057, %v2438, 0
        %v2451 = vsel %vm2057, %v2439, 0
        %v2454 = vsel %vm2057, %v2440, 0
        %v2457 = vsel %vm2057, %v2441, 0
        %v2460 = vsel %vm2057, %v2442, 0
        %v2463 = vsel %vm2057, %v2443, 0
        %2465 = vmatpush.bf16.msra.mxu0 0
        %2466 = vmatpush.bf16.msra.mxu0 0
        %2467 = vmatpush.bf16.msra.mxu0 0
        %2468 = vmatpush.bf16.msra.mxu0 0
        %2469 = vmatpush.bf16.msra.mxu0 0
        %2470 = vmatpush.bf16.msra.mxu0 0
        %2471 = vmatpush.bf16.msra.mxu0 0
        %2472 = vmatpush.bf16.msra.mxu0 %v2448
        %2473 = vmatmul.bf16.gmra.mxu0 %v2445
        %v2474 = vpop.f32.mrf.mxu0
        %v2475 = vadd.f32 0.0, %v2474
        %v2476 = vpop.f32.mrf.mxu0
        %v2477 = vadd.f32 0.0, %v2476
        %2478 = vdwg.mxu0
        %2479 = vmatpush.bf16.msra.mxu0 0
        %2480 = vmatpush.bf16.msra.mxu0 0
        %2481 = vmatpush.bf16.msra.mxu0 0
        %2482 = vmatpush.bf16.msra.mxu0 0
        %2483 = vmatpush.bf16.msra.mxu0 0
        %2484 = vmatpush.bf16.msra.mxu0 0
        %2485 = vmatpush.bf16.msra.mxu0 0
        %2486 = vmatpush.bf16.msra.mxu0 %v2451
        %2487 = vmatmul.bf16.gmra.mxu0 %v2445
        %v2488 = vpop.f32.mrf.mxu0
        %v2489 = vadd.f32 0.0, %v2488
        %v2490 = vpop.f32.mrf.mxu0
        %v2491 = vadd.f32 0.0, %v2490
        %2492 = vdwg.mxu0
        %2493 = vmatpush.bf16.msra.mxu0 0
        %2494 = vmatpush.bf16.msra.mxu0 0
        %2495 = vmatpush.bf16.msra.mxu0 0
        %2496 = vmatpush.bf16.msra.mxu0 0
        %2497 = vmatpush.bf16.msra.mxu0 0
        %2498 = vmatpush.bf16.msra.mxu0 0
        %2499 = vmatpush.bf16.msra.mxu0 0
        %2500 = vmatpush.bf16.msra.mxu0 %v2454
        %2501 = vmatmul.bf16.gmra.mxu0 %v2445
        %v2502 = vpop.f32.mrf.mxu0
        %v2503 = vadd.f32 0.0, %v2502
        %v2504 = vpop.f32.mrf.mxu0
        %v2505 = vadd.f32 0.0, %v2504
        %2506 = vdwg.mxu0
        %2507 = vmatpush.bf16.msra.mxu0 0
        %2508 = vmatpush.bf16.msra.mxu0 0
        %2509 = vmatpush.bf16.msra.mxu0 0
        %2510 = vmatpush.bf16.msra.mxu0 0
        %2511 = vmatpush.bf16.msra.mxu0 0
        %2512 = vmatpush.bf16.msra.mxu0 0
        %2513 = vmatpush.bf16.msra.mxu0 0
        %2514 = vmatpush.bf16.msra.mxu0 %v2457
        %2515 = vmatmul.bf16.gmra.mxu0 %v2445
        %v2516 = vpop.f32.mrf.mxu0
        %v2517 = vadd.f32 0.0, %v2516
        %v2518 = vpop.f32.mrf.mxu0
        %v2519 = vadd.f32 0.0, %v2518
        %2520 = vdwg.mxu0
        %2521 = vmatpush.bf16.msra.mxu0 0
        %2522 = vmatpush.bf16.msra.mxu0 0
        %2523 = vmatpush.bf16.msra.mxu0 0
        %2524 = vmatpush.bf16.msra.mxu0 0
        %2525 = vmatpush.bf16.msra.mxu0 0
        %2526 = vmatpush.bf16.msra.mxu0 0
        %2527 = vmatpush.bf16.msra.mxu0 0
        %2528 = vmatpush.bf16.msra.mxu0 %v2460
        %2529 = vmatmul.bf16.gmra.mxu0 %v2445
        %v2530 = vpop.f32.mrf.mxu0
        %v2531 = vadd.f32 0.0, %v2530
        %v2532 = vpop.f32.mrf.mxu0
        %v2533 = vadd.f32 0.0, %v2532
        %2534 = vdwg.mxu0
        %2535 = vmatpush.bf16.msra.mxu0 0
        %2536 = vmatpush.bf16.msra.mxu0 0
        %2537 = vmatpush.bf16.msra.mxu0 0
        %2538 = vmatpush.bf16.msra.mxu0 0
        %2539 = vmatpush.bf16.msra.mxu0 0
        %2540 = vmatpush.bf16.msra.mxu0 0
        %2541 = vmatpush.bf16.msra.mxu0 0
        %2542 = vmatpush.bf16.msra.mxu0 %v2463
        %2543 = vmatmul.bf16.gmra.mxu0 %v2445
        %v2544 = vpop.f32.mrf.mxu0
        %v2545 = vadd.f32 0.0, %v2544
        %v2546 = vpop.f32.mrf.mxu0
        %v2547 = vadd.f32 0.0, %v2546
        %2548 = vdwg.mxu0
        %v2549 = vadd.f32 %v2404, %v2475
        %v2550 = vadd.f32 %v2405, %v2489
        %v2551 = vadd.f32 %v2406, %v2503
        %v2552 = vadd.f32 %v2407, %v2517
        %v2553 = vadd.f32 %v2408, %v2531
        %v2554 = vadd.f32 %v2409, %v2545
        %v2555 = vadd.f32 %v2410, %v2477
        %v2556 = vadd.f32 %v2411, %v2491
        %v2557 = vadd.f32 %v2412, %v2505
        %v2558 = vadd.f32 %v2413, %v2519
        %v2559 = vadd.f32 %v2414, %v2533
        %v2560 = vadd.f32 %v2415, %v2547
        %s2561 = scalar_lea.vmem %s3, 32
        %v2562 = vld [vmem:[%s2561] sm:$0xf]
        %v2563 = vld [vmem:[%s2561 + $0x4] sm:$0xf]
        %v2566 = vunpack.c.l.b16 %v2562
        %v2567 = vunpack.c.l.b16 %v2563
        %v2568 = vpack.c.b16 %v2567, %v2566
        %2569 = vrot.lane.b32.xlu0 %v2026, 62
        %v2570 = vpop.permute.xlu0 %2569
        %2571 = vrot.lane.b32.xlu0 %v2027, 62
        %v2572 = vpop.permute.xlu0 %2571
        %2573 = vrot.lane.b32.xlu0 %v2028, 62
        %v2574 = vpop.permute.xlu0 %2573
        %2575 = vrot.lane.b32.xlu0 %v2029, 62
        %v2576 = vpop.permute.xlu0 %2575
        %2577 = vrot.lane.b32.xlu0 %v2030, 62
        %v2578 = vpop.permute.xlu0 %2577
        %2579 = vrot.lane.b32.xlu0 %v2031, 62
        %v2580 = vpop.permute.xlu0 %2579
        %2581 = vrot.lane.b32.xlu0 %v2032, 62
        %v2582 = vpop.permute.xlu0 %2581
        %v2583 = vsel %vm1704, %v2570, %v2572
        %v2584 = vsel %vm1704, %v2572, %v2574
        %v2585 = vsel %vm1704, %v2574, %v2576
        %v2586 = vsel %vm1704, %v2576, %v2578
        %v2587 = vsel %vm1704, %v2578, %v2580
        %v2588 = vsel %vm1704, %v2580, %v2582
        %v2590 = vsel %vm2053, %v2568, 0
        %v2593 = vsel %vm2057, %v2583, 0
        %v2596 = vsel %vm2057, %v2584, 0
        %v2599 = vsel %vm2057, %v2585, 0
        %v2602 = vsel %vm2057, %v2586, 0
        %v2605 = vsel %vm2057, %v2587, 0
        %v2608 = vsel %vm2057, %v2588, 0
        %2610 = vmatpush.bf16.msra.mxu0 0
        %2611 = vmatpush.bf16.msra.mxu0 0
        %2612 = vmatpush.bf16.msra.mxu0 0
        %2613 = vmatpush.bf16.msra.mxu0 0
        %2614 = vmatpush.bf16.msra.mxu0 0
        %2615 = vmatpush.bf16.msra.mxu0 0
        %2616 = vmatpush.bf16.msra.mxu0 0
        %2617 = vmatpush.bf16.msra.mxu0 %v2593
        %2618 = vmatmul.bf16.gmra.mxu0 %v2590
        %v2619 = vpop.f32.mrf.mxu0
        %v2620 = vadd.f32 0.0, %v2619
        %v2621 = vpop.f32.mrf.mxu0
        %v2622 = vadd.f32 0.0, %v2621
        %2623 = vdwg.mxu0
        %2624 = vmatpush.bf16.msra.mxu0 0
        %2625 = vmatpush.bf16.msra.mxu0 0
        %2626 = vmatpush.bf16.msra.mxu0 0
        %2627 = vmatpush.bf16.msra.mxu0 0
        %2628 = vmatpush.bf16.msra.mxu0 0
        %2629 = vmatpush.bf16.msra.mxu0 0
        %2630 = vmatpush.bf16.msra.mxu0 0
        %2631 = vmatpush.bf16.msra.mxu0 %v2596
        %2632 = vmatmul.bf16.gmra.mxu0 %v2590
        %v2633 = vpop.f32.mrf.mxu0
        %v2634 = vadd.f32 0.0, %v2633
        %v2635 = vpop.f32.mrf.mxu0
        %v2636 = vadd.f32 0.0, %v2635
        %2637 = vdwg.mxu0
        %2638 = vmatpush.bf16.msra.mxu0 0
        %2639 = vmatpush.bf16.msra.mxu0 0
        %2640 = vmatpush.bf16.msra.mxu0 0
        %2641 = vmatpush.bf16.msra.mxu0 0
        %2642 = vmatpush.bf16.msra.mxu0 0
        %2643 = vmatpush.bf16.msra.mxu0 0
        %2644 = vmatpush.bf16.msra.mxu0 0
        %2645 = vmatpush.bf16.msra.mxu0 %v2599
        %2646 = vmatmul.bf16.gmra.mxu0 %v2590
        %v2647 = vpop.f32.mrf.mxu0
        %v2648 = vadd.f32 0.0, %v2647
        %v2649 = vpop.f32.mrf.mxu0
        %v2650 = vadd.f32 0.0, %v2649
        %2651 = vdwg.mxu0
        %2652 = vmatpush.bf16.msra.mxu0 0
        %2653 = vmatpush.bf16.msra.mxu0 0
        %2654 = vmatpush.bf16.msra.mxu0 0
        %2655 = vmatpush.bf16.msra.mxu0 0
        %2656 = vmatpush.bf16.msra.mxu0 0
        %2657 = vmatpush.bf16.msra.mxu0 0
        %2658 = vmatpush.bf16.msra.mxu0 0
        %2659 = vmatpush.bf16.msra.mxu0 %v2602
        %2660 = vmatmul.bf16.gmra.mxu0 %v2590
        %v2661 = vpop.f32.mrf.mxu0
        %v2662 = vadd.f32 0.0, %v2661
        %v2663 = vpop.f32.mrf.mxu0
        %v2664 = vadd.f32 0.0, %v2663
        %2665 = vdwg.mxu0
        %2666 = vmatpush.bf16.msra.mxu0 0
        %2667 = vmatpush.bf16.msra.mxu0 0
        %2668 = vmatpush.bf16.msra.mxu0 0
        %2669 = vmatpush.bf16.msra.mxu0 0
        %2670 = vmatpush.bf16.msra.mxu0 0
        %2671 = vmatpush.bf16.msra.mxu0 0
        %2672 = vmatpush.bf16.msra.mxu0 0
        %2673 = vmatpush.bf16.msra.mxu0 %v2605
        %2674 = vmatmul.bf16.gmra.mxu0 %v2590
        %v2675 = vpop.f32.mrf.mxu0
        %v2676 = vadd.f32 0.0, %v2675
        %v2677 = vpop.f32.mrf.mxu0
        %v2678 = vadd.f32 0.0, %v2677
        %2679 = vdwg.mxu0
        %2680 = vmatpush.bf16.msra.mxu0 0
        %2681 = vmatpush.bf16.msra.mxu0 0
        %2682 = vmatpush.bf16.msra.mxu0 0
        %2683 = vmatpush.bf16.msra.mxu0 0
        %2684 = vmatpush.bf16.msra.mxu0 0
        %2685 = vmatpush.bf16.msra.mxu0 0
        %2686 = vmatpush.bf16.msra.mxu0 0
        %2687 = vmatpush.bf16.msra.mxu0 %v2608
        %2688 = vmatmul.bf16.gmra.mxu0 %v2590
        %v2689 = vpop.f32.mrf.mxu0
        %v2690 = vadd.f32 0.0, %v2689
        %v2691 = vpop.f32.mrf.mxu0
        %v2692 = vadd.f32 0.0, %v2691
        %2693 = vdwg.mxu0
        %v2694 = vadd.f32 %v2549, %v2620
        %v2695 = vadd.f32 %v2550, %v2634
        %v2696 = vadd.f32 %v2551, %v2648
        %v2697 = vadd.f32 %v2552, %v2662
        %v2698 = vadd.f32 %v2553, %v2676
        %v2699 = vadd.f32 %v2554, %v2690
        %v2700 = vadd.f32 %v2555, %v2622
        %v2701 = vadd.f32 %v2556, %v2636
        %v2702 = vadd.f32 %v2557, %v2650
        %v2703 = vadd.f32 %v2558, %v2664
        %v2704 = vadd.f32 %v2559, %v2678
        %v2705 = vadd.f32 %v2560, %v2692
        %s2706 = scalar_lea.vmem %s3, 40
        %v2707 = vld [vmem:[%s2706] sm:$0xf]
        %v2708 = vld [vmem:[%s2706 + $0x4] sm:$0xf]
        %v2711 = vunpack.c.l.b16 %v2707
        %v2712 = vunpack.c.l.b16 %v2708
        %v2713 = vpack.c.b16 %v2712, %v2711
        %2714 = vrot.lane.b32.xlu0 %v2026, 60
        %v2715 = vpop.permute.xlu0 %2714
        %2716 = vrot.lane.b32.xlu0 %v2027, 60
        %v2717 = vpop.permute.xlu0 %2716
        %2718 = vrot.lane.b32.xlu0 %v2028, 60
        %v2719 = vpop.permute.xlu0 %2718
        %2720 = vrot.lane.b32.xlu0 %v2029, 60
        %v2721 = vpop.permute.xlu0 %2720
        %2722 = vrot.lane.b32.xlu0 %v2030, 60
        %v2723 = vpop.permute.xlu0 %2722
        %2724 = vrot.lane.b32.xlu0 %v2031, 60
        %v2725 = vpop.permute.xlu0 %2724
        %2726 = vrot.lane.b32.xlu0 %v2032, 60
        %v2727 = vpop.permute.xlu0 %2726
        %vm2728 = vcmask 490496
        %v2729 = vsel %vm2728, %v2715, %v2717
        %v2730 = vsel %vm2728, %v2717, %v2719
        %v2731 = vsel %vm2728, %v2719, %v2721
        %v2732 = vsel %vm2728, %v2721, %v2723
        %v2733 = vsel %vm2728, %v2723, %v2725
        %v2734 = vsel %vm2728, %v2725, %v2727
        %v2736 = vsel %vm2053, %v2713, 0
        %v2739 = vsel %vm2057, %v2729, 0
        %v2742 = vsel %vm2057, %v2730, 0
        %v2745 = vsel %vm2057, %v2731, 0
        %v2748 = vsel %vm2057, %v2732, 0
        %v2751 = vsel %vm2057, %v2733, 0
        %v2754 = vsel %vm2057, %v2734, 0
        %2756 = vmatpush.bf16.msra.mxu0 0
        %2757 = vmatpush.bf16.msra.mxu0 0
        %2758 = vmatpush.bf16.msra.mxu0 0
        %2759 = vmatpush.bf16.msra.mxu0 0
        %2760 = vmatpush.bf16.msra.mxu0 0
        %2761 = vmatpush.bf16.msra.mxu0 0
        %2762 = vmatpush.bf16.msra.mxu0 0
        %2763 = vmatpush.bf16.msra.mxu0 %v2739
        %2764 = vmatmul.bf16.gmra.mxu0 %v2736
        %v2765 = vpop.f32.mrf.mxu0
        %v2766 = vadd.f32 0.0, %v2765
        %v2767 = vpop.f32.mrf.mxu0
        %v2768 = vadd.f32 0.0, %v2767
        %2769 = vdwg.mxu0
        %2770 = vmatpush.bf16.msra.mxu0 0
        %2771 = vmatpush.bf16.msra.mxu0 0
        %2772 = vmatpush.bf16.msra.mxu0 0
        %2773 = vmatpush.bf16.msra.mxu0 0
        %2774 = vmatpush.bf16.msra.mxu0 0
        %2775 = vmatpush.bf16.msra.mxu0 0
        %2776 = vmatpush.bf16.msra.mxu0 0
        %2777 = vmatpush.bf16.msra.mxu0 %v2742
        %2778 = vmatmul.bf16.gmra.mxu0 %v2736
        %v2779 = vpop.f32.mrf.mxu0
        %v2780 = vadd.f32 0.0, %v2779
        %v2781 = vpop.f32.mrf.mxu0
        %v2782 = vadd.f32 0.0, %v2781
        %2783 = vdwg.mxu0
        %2784 = vmatpush.bf16.msra.mxu0 0
        %2785 = vmatpush.bf16.msra.mxu0 0
        %2786 = vmatpush.bf16.msra.mxu0 0
        %2787 = vmatpush.bf16.msra.mxu0 0
        %2788 = vmatpush.bf16.msra.mxu0 0
        %2789 = vmatpush.bf16.msra.mxu0 0
        %2790 = vmatpush.bf16.msra.mxu0 0
        %2791 = vmatpush.bf16.msra.mxu0 %v2745
        %2792 = vmatmul.bf16.gmra.mxu0 %v2736
        %v2793 = vpop.f32.mrf.mxu0
        %v2794 = vadd.f32 0.0, %v2793
        %v2795 = vpop.f32.mrf.mxu0
        %v2796 = vadd.f32 0.0, %v2795
        %2797 = vdwg.mxu0
        %2798 = vmatpush.bf16.msra.mxu0 0
        %2799 = vmatpush.bf16.msra.mxu0 0
        %2800 = vmatpush.bf16.msra.mxu0 0
        %2801 = vmatpush.bf16.msra.mxu0 0
        %2802 = vmatpush.bf16.msra.mxu0 0
        %2803 = vmatpush.bf16.msra.mxu0 0
        %2804 = vmatpush.bf16.msra.mxu0 0
        %2805 = vmatpush.bf16.msra.mxu0 %v2748
        %2806 = vmatmul.bf16.gmra.mxu0 %v2736
        %v2807 = vpop.f32.mrf.mxu0
        %v2808 = vadd.f32 0.0, %v2807
        %v2809 = vpop.f32.mrf.mxu0
        %v2810 = vadd.f32 0.0, %v2809
        %2811 = vdwg.mxu0
        %2812 = vmatpush.bf16.msra.mxu0 0
        %2813 = vmatpush.bf16.msra.mxu0 0
        %2814 = vmatpush.bf16.msra.mxu0 0
        %2815 = vmatpush.bf16.msra.mxu0 0
        %2816 = vmatpush.bf16.msra.mxu0 0
        %2817 = vmatpush.bf16.msra.mxu0 0
        %2818 = vmatpush.bf16.msra.mxu0 0
        %2819 = vmatpush.bf16.msra.mxu0 %v2751
        %2820 = vmatmul.bf16.gmra.mxu0 %v2736
        %v2821 = vpop.f32.mrf.mxu0
        %v2822 = vadd.f32 0.0, %v2821
        %v2823 = vpop.f32.mrf.mxu0
        %v2824 = vadd.f32 0.0, %v2823
        %2825 = vdwg.mxu0
        %2826 = vmatpush.bf16.msra.mxu0 0
        %2827 = vmatpush.bf16.msra.mxu0 0
        %2828 = vmatpush.bf16.msra.mxu0 0
        %2829 = vmatpush.bf16.msra.mxu0 0
        %2830 = vmatpush.bf16.msra.mxu0 0
        %2831 = vmatpush.bf16.msra.mxu0 0
        %2832 = vmatpush.bf16.msra.mxu0 0
        %2833 = vmatpush.bf16.msra.mxu0 %v2754
        %2834 = vmatmul.bf16.gmra.mxu0 %v2736
        %v2835 = vpop.f32.mrf.mxu0
        %v2836 = vadd.f32 0.0, %v2835
        %v2837 = vpop.f32.mrf.mxu0
        %v2838 = vadd.f32 0.0, %v2837
        %2839 = vdwg.mxu0
        %v2840 = vadd.f32 %v2694, %v2766
        %v2841 = vadd.f32 %v2695, %v2780
        %v2842 = vadd.f32 %v2696, %v2794
        %v2843 = vadd.f32 %v2697, %v2808
        %v2844 = vadd.f32 %v2698, %v2822
        %v2845 = vadd.f32 %v2699, %v2836
        %v2846 = vadd.f32 %v2700, %v2768
        %v2847 = vadd.f32 %v2701, %v2782
        %v2848 = vadd.f32 %v2702, %v2796
        %v2849 = vadd.f32 %v2703, %v2810
        %v2850 = vadd.f32 %v2704, %v2824
        %v2851 = vadd.f32 %v2705, %v2838
        %s2852 = scalar_lea.vmem %s3, 48
        %v2853 = vld [vmem:[%s2852] sm:$0xf]
        %v2854 = vld [vmem:[%s2852 + $0x4] sm:$0xf]
        %v2857 = vunpack.c.l.b16 %v2853
        %v2858 = vunpack.c.l.b16 %v2854
        %v2859 = vpack.c.b16 %v2858, %v2857
        %v2861 = vsel %vm2053, %v2859, 0
        %v2864 = vsel %vm2057, %v2032, 0
        %2866 = vmatpush.bf16.msra.mxu0 0
        %2867 = vmatpush.bf16.msra.mxu0 0
        %2868 = vmatpush.bf16.msra.mxu0 0
        %2869 = vmatpush.bf16.msra.mxu0 0
        %2870 = vmatpush.bf16.msra.mxu0 0
        %2871 = vmatpush.bf16.msra.mxu0 0
        %2872 = vmatpush.bf16.msra.mxu0 0
        %2873 = vmatpush.bf16.msra.mxu0 %v2172
        %2874 = vmatmul.bf16.gmra.mxu0 %v2861
        %v2875 = vpop.f32.mrf.mxu0
        %v2876 = vadd.f32 0.0, %v2875
        %v2877 = vpop.f32.mrf.mxu0
        %v2878 = vadd.f32 0.0, %v2877
        %2879 = vdwg.mxu0
        %2880 = vmatpush.bf16.msra.mxu0 0
        %2881 = vmatpush.bf16.msra.mxu0 0
        %2882 = vmatpush.bf16.msra.mxu0 0
        %2883 = vmatpush.bf16.msra.mxu0 0
        %2884 = vmatpush.bf16.msra.mxu0 0
        %2885 = vmatpush.bf16.msra.mxu0 0
        %2886 = vmatpush.bf16.msra.mxu0 0
        %2887 = vmatpush.bf16.msra.mxu0 %v2175
        %2888 = vmatmul.bf16.gmra.mxu0 %v2861
        %v2889 = vpop.f32.mrf.mxu0
        %v2890 = vadd.f32 0.0, %v2889
        %v2891 = vpop.f32.mrf.mxu0
        %v2892 = vadd.f32 0.0, %v2891
        %2893 = vdwg.mxu0
        %2894 = vmatpush.bf16.msra.mxu0 0
        %2895 = vmatpush.bf16.msra.mxu0 0
        %2896 = vmatpush.bf16.msra.mxu0 0
        %2897 = vmatpush.bf16.msra.mxu0 0
        %2898 = vmatpush.bf16.msra.mxu0 0
        %2899 = vmatpush.bf16.msra.mxu0 0
        %2900 = vmatpush.bf16.msra.mxu0 0
        %2901 = vmatpush.bf16.msra.mxu0 %v2178
        %2902 = vmatmul.bf16.gmra.mxu0 %v2861
        %v2903 = vpop.f32.mrf.mxu0
        %v2904 = vadd.f32 0.0, %v2903
        %v2905 = vpop.f32.mrf.mxu0
        %v2906 = vadd.f32 0.0, %v2905
        %2907 = vdwg.mxu0
        %2908 = vmatpush.bf16.msra.mxu0 0
        %2909 = vmatpush.bf16.msra.mxu0 0
        %2910 = vmatpush.bf16.msra.mxu0 0
        %2911 = vmatpush.bf16.msra.mxu0 0
        %2912 = vmatpush.bf16.msra.mxu0 0
        %2913 = vmatpush.bf16.msra.mxu0 0
        %2914 = vmatpush.bf16.msra.mxu0 0
        %2915 = vmatpush.bf16.msra.mxu0 %v2181
        %2916 = vmatmul.bf16.gmra.mxu0 %v2861
        %v2917 = vpop.f32.mrf.mxu0
        %v2918 = vadd.f32 0.0, %v2917
        %v2919 = vpop.f32.mrf.mxu0
        %v2920 = vadd.f32 0.0, %v2919
        %2921 = vdwg.mxu0
        %2922 = vmatpush.bf16.msra.mxu0 0
        %2923 = vmatpush.bf16.msra.mxu0 0
        %2924 = vmatpush.bf16.msra.mxu0 0
        %2925 = vmatpush.bf16.msra.mxu0 0
        %2926 = vmatpush.bf16.msra.mxu0 0
        %2927 = vmatpush.bf16.msra.mxu0 0
        %2928 = vmatpush.bf16.msra.mxu0 0
        %2929 = vmatpush.bf16.msra.mxu0 %v2184
        %2930 = vmatmul.bf16.gmra.mxu0 %v2861
        %v2931 = vpop.f32.mrf.mxu0
        %v2932 = vadd.f32 0.0, %v2931
        %v2933 = vpop.f32.mrf.mxu0
        %v2934 = vadd.f32 0.0, %v2933
        %2935 = vdwg.mxu0
        %2936 = vmatpush.bf16.msra.mxu0 0
        %2937 = vmatpush.bf16.msra.mxu0 0
        %2938 = vmatpush.bf16.msra.mxu0 0
        %2939 = vmatpush.bf16.msra.mxu0 0
        %2940 = vmatpush.bf16.msra.mxu0 0
        %2941 = vmatpush.bf16.msra.mxu0 0
        %2942 = vmatpush.bf16.msra.mxu0 0
        %2943 = vmatpush.bf16.msra.mxu0 %v2864
        %2944 = vmatmul.bf16.gmra.mxu0 %v2861
        %v2945 = vpop.f32.mrf.mxu0
        %v2946 = vadd.f32 0.0, %v2945
        %v2947 = vpop.f32.mrf.mxu0
        %v2948 = vadd.f32 0.0, %v2947
        %2949 = vdwg.mxu0
        %v2950 = vadd.f32 %v2840, %v2876
        %v2951 = vadd.f32 %v2841, %v2890
        %v2952 = vadd.f32 %v2842, %v2904
        %v2953 = vadd.f32 %v2843, %v2918
        %v2954 = vadd.f32 %v2844, %v2932
        %v2955 = vadd.f32 %v2845, %v2946
        %v2956 = vadd.f32 %v2846, %v2878
        %v2957 = vadd.f32 %v2847, %v2892
        %v2958 = vadd.f32 %v2848, %v2906
        %v2959 = vadd.f32 %v2849, %v2920
        %v2960 = vadd.f32 %v2850, %v2934
        %v2961 = vadd.f32 %v2851, %v2948
        %s2962 = scalar_lea.vmem %s3, 56
        %v2963 = vld [vmem:[%s2962] sm:$0xf]
        %v2964 = vld [vmem:[%s2962 + $0x4] sm:$0xf]
        %v2967 = vunpack.c.l.b16 %v2963
        %v2968 = vunpack.c.l.b16 %v2964
        %v2969 = vpack.c.b16 %v2968, %v2967
        %v2970 = vunpack.c.h.b16 %v2004
        %v2971 = vpack.c.b16 %v2970, %v2970
        %2972 = vrot.lane.b32.xlu0 %v2971, 126
        %v2973 = vpop.permute.xlu0 %2972
        %v2974 = vsel %vm600, %v2046, %v2973
        %v2976 = vsel %vm2053, %v2969, 0
        %v2979 = vsel %vm2057, %v2974, 0
        %2981 = vmatpush.bf16.msra.mxu0 0
        %2982 = vmatpush.bf16.msra.mxu0 0
        %2983 = vmatpush.bf16.msra.mxu0 0
        %2984 = vmatpush.bf16.msra.mxu0 0
        %2985 = vmatpush.bf16.msra.mxu0 0
        %2986 = vmatpush.bf16.msra.mxu0 0
        %2987 = vmatpush.bf16.msra.mxu0 0
        %2988 = vmatpush.bf16.msra.mxu0 %v2062
        %2989 = vmatmul.bf16.gmra.mxu0 %v2976
        %v2990 = vpop.f32.mrf.mxu0
        %v2991 = vadd.f32 0.0, %v2990
        %v2992 = vpop.f32.mrf.mxu0
        %v2993 = vadd.f32 0.0, %v2992
        %2994 = vdwg.mxu0
        %2995 = vmatpush.bf16.msra.mxu0 0
        %2996 = vmatpush.bf16.msra.mxu0 0
        %2997 = vmatpush.bf16.msra.mxu0 0
        %2998 = vmatpush.bf16.msra.mxu0 0
        %2999 = vmatpush.bf16.msra.mxu0 0
        %3000 = vmatpush.bf16.msra.mxu0 0
        %3001 = vmatpush.bf16.msra.mxu0 0
        %3002 = vmatpush.bf16.msra.mxu0 %v2065
        %3003 = vmatmul.bf16.gmra.mxu0 %v2976
        %v3004 = vpop.f32.mrf.mxu0
        %v3005 = vadd.f32 0.0, %v3004
        %v3006 = vpop.f32.mrf.mxu0
        %v3007 = vadd.f32 0.0, %v3006
        %3008 = vdwg.mxu0
        %3009 = vmatpush.bf16.msra.mxu0 0
        %3010 = vmatpush.bf16.msra.mxu0 0
        %3011 = vmatpush.bf16.msra.mxu0 0
        %3012 = vmatpush.bf16.msra.mxu0 0
        %3013 = vmatpush.bf16.msra.mxu0 0
        %3014 = vmatpush.bf16.msra.mxu0 0
        %3015 = vmatpush.bf16.msra.mxu0 0
        %3016 = vmatpush.bf16.msra.mxu0 %v2068
        %3017 = vmatmul.bf16.gmra.mxu0 %v2976
        %v3018 = vpop.f32.mrf.mxu0
        %v3019 = vadd.f32 0.0, %v3018
        %v3020 = vpop.f32.mrf.mxu0
        %v3021 = vadd.f32 0.0, %v3020
        %3022 = vdwg.mxu0
        %3023 = vmatpush.bf16.msra.mxu0 0
        %3024 = vmatpush.bf16.msra.mxu0 0
        %3025 = vmatpush.bf16.msra.mxu0 0
        %3026 = vmatpush.bf16.msra.mxu0 0
        %3027 = vmatpush.bf16.msra.mxu0 0
        %3028 = vmatpush.bf16.msra.mxu0 0
        %3029 = vmatpush.bf16.msra.mxu0 0
        %3030 = vmatpush.bf16.msra.mxu0 %v2071
        %3031 = vmatmul.bf16.gmra.mxu0 %v2976
        %v3032 = vpop.f32.mrf.mxu0
        %v3033 = vadd.f32 0.0, %v3032
        %v3034 = vpop.f32.mrf.mxu0
        %v3035 = vadd.f32 0.0, %v3034
        %3036 = vdwg.mxu0
        %3037 = vmatpush.bf16.msra.mxu0 0
        %3038 = vmatpush.bf16.msra.mxu0 0
        %3039 = vmatpush.bf16.msra.mxu0 0
        %3040 = vmatpush.bf16.msra.mxu0 0
        %3041 = vmatpush.bf16.msra.mxu0 0
        %3042 = vmatpush.bf16.msra.mxu0 0
        %3043 = vmatpush.bf16.msra.mxu0 0
        %3044 = vmatpush.bf16.msra.mxu0 %v2074
        %3045 = vmatmul.bf16.gmra.mxu0 %v2976
        %v3046 = vpop.f32.mrf.mxu0
        %v3047 = vadd.f32 0.0, %v3046
        %v3048 = vpop.f32.mrf.mxu0
        %v3049 = vadd.f32 0.0, %v3048
        %3050 = vdwg.mxu0
        %3051 = vmatpush.bf16.msra.mxu0 0
        %3052 = vmatpush.bf16.msra.mxu0 0
        %3053 = vmatpush.bf16.msra.mxu0 0
        %3054 = vmatpush.bf16.msra.mxu0 0
        %3055 = vmatpush.bf16.msra.mxu0 0
        %3056 = vmatpush.bf16.msra.mxu0 0
        %3057 = vmatpush.bf16.msra.mxu0 0
        %3058 = vmatpush.bf16.msra.mxu0 %v2979
        %3059 = vmatmul.bf16.gmra.mxu0 %v2976
        %v3060 = vpop.f32.mrf.mxu0
        %v3061 = vadd.f32 0.0, %v3060
        %v3062 = vpop.f32.mrf.mxu0
        %v3063 = vadd.f32 0.0, %v3062
        %3064 = vdwg.mxu0
        %v3065 = vadd.f32 %v2950, %v2991
        %v3066 = vadd.f32 %v2951, %v3005
        %v3067 = vadd.f32 %v2952, %v3019
        %v3068 = vadd.f32 %v2953, %v3033
        %v3069 = vadd.f32 %v2954, %v3047
        %v3070 = vadd.f32 %v2955, %v3061
        %v3071 = vadd.f32 %v2956, %v2993
        %v3072 = vadd.f32 %v2957, %v3007
        %v3073 = vadd.f32 %v2958, %v3021
        %v3074 = vadd.f32 %v2959, %v3035
        %v3075 = vadd.f32 %v2960, %v3049
        %v3076 = vadd.f32 %v2961, %v3063
        %s3077 = scalar_lea.vmem %s3, 64
        %v3078 = vld [vmem:[%s3077] sm:$0xf]
        %v3079 = vld [vmem:[%s3077 + $0x4] sm:$0xf]
        %v3082 = vunpack.c.l.b16 %v3078
        %v3083 = vunpack.c.l.b16 %v3079
        %v3084 = vpack.c.b16 %v3083, %v3082
        %3085 = vrot.lane.b32.xlu0 %v2971, 124
        %v3086 = vpop.permute.xlu0 %3085
        %v3087 = vsel %vm2292, %v2291, %v3086
        %v3089 = vsel %vm2053, %v3084, 0
        %v3092 = vsel %vm2057, %v3087, 0
        %3094 = vmatpush.bf16.msra.mxu0 0
        %3095 = vmatpush.bf16.msra.mxu0 0
        %3096 = vmatpush.bf16.msra.mxu0 0
        %3097 = vmatpush.bf16.msra.mxu0 0
        %3098 = vmatpush.bf16.msra.mxu0 0
        %3099 = vmatpush.bf16.msra.mxu0 0
        %3100 = vmatpush.bf16.msra.mxu0 0
        %3101 = vmatpush.bf16.msra.mxu0 %v2306
        %3102 = vmatmul.bf16.gmra.mxu0 %v3089
        %v3103 = vpop.f32.mrf.mxu0
        %v3104 = vadd.f32 0.0, %v3103
        %v3105 = vpop.f32.mrf.mxu0
        %v3106 = vadd.f32 0.0, %v3105
        %3107 = vdwg.mxu0
        %3108 = vmatpush.bf16.msra.mxu0 0
        %3109 = vmatpush.bf16.msra.mxu0 0
        %3110 = vmatpush.bf16.msra.mxu0 0
        %3111 = vmatpush.bf16.msra.mxu0 0
        %3112 = vmatpush.bf16.msra.mxu0 0
        %3113 = vmatpush.bf16.msra.mxu0 0
        %3114 = vmatpush.bf16.msra.mxu0 0
        %3115 = vmatpush.bf16.msra.mxu0 %v2309
        %3116 = vmatmul.bf16.gmra.mxu0 %v3089
        %v3117 = vpop.f32.mrf.mxu0
        %v3118 = vadd.f32 0.0, %v3117
        %v3119 = vpop.f32.mrf.mxu0
        %v3120 = vadd.f32 0.0, %v3119
        %3121 = vdwg.mxu0
        %3122 = vmatpush.bf16.msra.mxu0 0
        %3123 = vmatpush.bf16.msra.mxu0 0
        %3124 = vmatpush.bf16.msra.mxu0 0
        %3125 = vmatpush.bf16.msra.mxu0 0
        %3126 = vmatpush.bf16.msra.mxu0 0
        %3127 = vmatpush.bf16.msra.mxu0 0
        %3128 = vmatpush.bf16.msra.mxu0 0
        %3129 = vmatpush.bf16.msra.mxu0 %v2312
        %3130 = vmatmul.bf16.gmra.mxu0 %v3089
        %v3131 = vpop.f32.mrf.mxu0
        %v3132 = vadd.f32 0.0, %v3131
        %v3133 = vpop.f32.mrf.mxu0
        %v3134 = vadd.f32 0.0, %v3133
        %3135 = vdwg.mxu0
        %3136 = vmatpush.bf16.msra.mxu0 0
        %3137 = vmatpush.bf16.msra.mxu0 0
        %3138 = vmatpush.bf16.msra.mxu0 0
        %3139 = vmatpush.bf16.msra.mxu0 0
        %3140 = vmatpush.bf16.msra.mxu0 0
        %3141 = vmatpush.bf16.msra.mxu0 0
        %3142 = vmatpush.bf16.msra.mxu0 0
        %3143 = vmatpush.bf16.msra.mxu0 %v2315
        %3144 = vmatmul.bf16.gmra.mxu0 %v3089
        %v3145 = vpop.f32.mrf.mxu0
        %v3146 = vadd.f32 0.0, %v3145
        %v3147 = vpop.f32.mrf.mxu0
        %v3148 = vadd.f32 0.0, %v3147
        %3149 = vdwg.mxu0
        %3150 = vmatpush.bf16.msra.mxu0 0
        %3151 = vmatpush.bf16.msra.mxu0 0
        %3152 = vmatpush.bf16.msra.mxu0 0
        %3153 = vmatpush.bf16.msra.mxu0 0
        %3154 = vmatpush.bf16.msra.mxu0 0
        %3155 = vmatpush.bf16.msra.mxu0 0
        %3156 = vmatpush.bf16.msra.mxu0 0
        %3157 = vmatpush.bf16.msra.mxu0 %v2318
        %3158 = vmatmul.bf16.gmra.mxu0 %v3089
        %v3159 = vpop.f32.mrf.mxu0
        %v3160 = vadd.f32 0.0, %v3159
        %v3161 = vpop.f32.mrf.mxu0
        %v3162 = vadd.f32 0.0, %v3161
        %3163 = vdwg.mxu0
        %3164 = vmatpush.bf16.msra.mxu0 0
        %3165 = vmatpush.bf16.msra.mxu0 0
        %3166 = vmatpush.bf16.msra.mxu0 0
        %3167 = vmatpush.bf16.msra.mxu0 0
        %3168 = vmatpush.bf16.msra.mxu0 0
        %3169 = vmatpush.bf16.msra.mxu0 0
        %3170 = vmatpush.bf16.msra.mxu0 0
        %3171 = vmatpush.bf16.msra.mxu0 %v3092
        %3172 = vmatmul.bf16.gmra.mxu0 %v3089
        %v3173 = vpop.f32.mrf.mxu0
        %v3174 = vadd.f32 0.0, %v3173
        %v3175 = vpop.f32.mrf.mxu0
        %v3176 = vadd.f32 0.0, %v3175
        %3177 = vdwg.mxu0
        %v3178 = vadd.f32 %v3065, %v3104
        %v3179 = vadd.f32 %v3066, %v3118
        %v3180 = vadd.f32 %v3067, %v3132
        %v3181 = vadd.f32 %v3068, %v3146
        %v3182 = vadd.f32 %v3069, %v3160
        %v3183 = vadd.f32 %v3070, %v3174
        %v3184 = vadd.f32 %v3071, %v3106
        %v3185 = vadd.f32 %v3072, %v3120
        %v3186 = vadd.f32 %v3073, %v3134
        %v3187 = vadd.f32 %v3074, %v3148
        %v3188 = vadd.f32 %v3075, %v3162
        %v3189 = vadd.f32 %v3076, %v3176
        %v3190 = vld [vmem:[%s4] sm:$0xff]
        %v3191 = vld [vmem:[%s4 + $0x8] sm:$0xff]
        %3193 = vset.pattern.permute.xlu0 0
        %3194 = vperm.xlu0 %3193, %v3190
        %v3195 = vpop.permute.xlu0 %3194
        %3198 = vset.pattern.permute.xlu0 0
        %3199 = vperm.xlu0 %3198, %v3191
        %v3200 = vpop.permute.xlu0 %3199
        %v3202 = vadd.f32 %v3178, %v3195
        %v3203 = vadd.f32 %v3179, %v3195
        %v3204 = vadd.f32 %v3180, %v3195
        %v3205 = vadd.f32 %v3181, %v3195
        %v3206 = vadd.f32 %v3182, %v3195
        %v3207 = vadd.f32 %v3183, %v3195
        %v3208 = vadd.f32 %v3184, %v3200
        %v3209 = vadd.f32 %v3185, %v3200
        %v3210 = vadd.f32 %v3186, %v3200
        %v3211 = vadd.f32 %v3187, %v3200
        %v3212 = vadd.f32 %v3188, %v3200
        %v3213 = vadd.f32 %v3189, %v3200
        %v3214 = vmax.f32 %v3202, 0.0
        %v3215 = vmax.f32 %v3203, 0.0
        %v3216 = vmax.f32 %v3204, 0.0
        %v3217 = vmax.f32 %v3205, 0.0
        %v3218 = vmax.f32 %v3206, 0.0
        %v3219 = vmax.f32 %v3207, 0.0
        %v3220 = vmax.f32 %v3208, 0.0
        %v3221 = vmax.f32 %v3209, 0.0
        %v3222 = vmax.f32 %v3210, 0.0
        %v3223 = vmax.f32 %v3211, 0.0
        %v3224 = vmax.f32 %v3212, 0.0
        %v3225 = vmax.f32 %v3213, 0.0
        %3238 = vrot.lane.b32.xlu0 %v3214, 126
        %v3239 = vpop.permute.xlu0 %3238
        %3240 = vrot.lane.b32.xlu0 %v3215, 126
        %v3241 = vpop.permute.xlu0 %3240
        %3242 = vrot.lane.b32.xlu0 %v3216, 126
        %v3243 = vpop.permute.xlu0 %3242
        %3244 = vrot.lane.b32.xlu0 %v3217, 126
        %v3245 = vpop.permute.xlu0 %3244
        %3246 = vrot.lane.b32.xlu0 %v3218, 126
        %v3247 = vpop.permute.xlu0 %3246
        %3248 = vrot.lane.b32.xlu0 %v3219, 126
        %v3249 = vpop.permute.xlu0 %3248
        %3250 = vrot.lane.b32.xlu0 %v3220, 126
        %v3251 = vpop.permute.xlu0 %3250
        %3252 = vrot.lane.b32.xlu0 %v3221, 126
        %v3253 = vpop.permute.xlu0 %3252
        %3254 = vrot.lane.b32.xlu0 %v3222, 126
        %v3255 = vpop.permute.xlu0 %3254
        %3256 = vrot.lane.b32.xlu0 %v3223, 126
        %v3257 = vpop.permute.xlu0 %3256
        %3258 = vrot.lane.b32.xlu0 %v3224, 126
        %v3259 = vpop.permute.xlu0 %3258
        %3260 = vrot.lane.b32.xlu0 %v3225, 126
        %v3261 = vpop.permute.xlu0 %3260
        %vm3262 = vcmask 1031168
        %v3263 = vsel %vm3262, %v3239, %v3241
        %v3264 = vsel %vm3262, %v3241, %v3243
        %v3265 = vsel %vm3262, %v3243, %v3245
        %v3266 = vsel %vm3262, %v3245, %v3247
        %v3267 = vsel %vm3262, %v3247, %v3249
        %v3268 = vsel %vm3262, %v3251, %v3253
        %v3269 = vsel %vm3262, %v3253, %v3255
        %v3270 = vsel %vm3262, %v3255, %v3257
        %v3271 = vsel %vm3262, %v3257, %v3259
        %v3272 = vsel %vm3262, %v3259, %v3261
        %v3285 = vmax.f32 %v3214, %v3263
        %v3286 = vmax.f32 %v3215, %v3264
        %v3287 = vmax.f32 %v3216, %v3265
        %v3288 = vmax.f32 %v3217, %v3266
        %v3289 = vmax.f32 %v3218, %v3267
        %v3290 = vmax.f32 %v3219, %v3249
        %v3291 = vmax.f32 %v3220, %v3268
        %v3292 = vmax.f32 %v3221, %v3269
        %v3293 = vmax.f32 %v3222, %v3270
        %v3294 = vmax.f32 %v3223, %v3271
        %v3295 = vmax.f32 %v3224, %v3272
        %v3296 = vmax.f32 %v3225, %v3261
        %3297 = vrot.lane.b32.xlu0 %v3214, 64
        %v3298 = vpop.permute.xlu0 %3297
        %3299 = vrot.lane.b32.xlu0 %v3215, 64
        %v3300 = vpop.permute.xlu0 %3299
        %3301 = vrot.lane.b32.xlu0 %v3216, 64
        %v3302 = vpop.permute.xlu0 %3301
        %3303 = vrot.lane.b32.xlu0 %v3217, 64
        %v3304 = vpop.permute.xlu0 %3303
        %3305 = vrot.lane.b32.xlu0 %v3218, 64
        %v3306 = vpop.permute.xlu0 %3305
        %3307 = vrot.lane.b32.xlu0 %v3219, 64
        %v3308 = vpop.permute.xlu0 %3307
        %3309 = vrot.lane.b32.xlu0 %v3220, 64
        %v3310 = vpop.permute.xlu0 %3309
        %3311 = vrot.lane.b32.xlu0 %v3221, 64
        %v3312 = vpop.permute.xlu0 %3311
        %3313 = vrot.lane.b32.xlu0 %v3222, 64
        %v3314 = vpop.permute.xlu0 %3313
        %3315 = vrot.lane.b32.xlu0 %v3223, 64
        %v3316 = vpop.permute.xlu0 %3315
        %3317 = vrot.lane.b32.xlu0 %v3224, 64
        %v3318 = vpop.permute.xlu0 %3317
        %3319 = vrot.lane.b32.xlu0 %v3225, 64
        %v3320 = vpop.permute.xlu0 %3319
        %vm3321 = vcmask 523264
        %v3322 = vsel %vm3321, %v3298, %v3300
        %v3323 = vsel %vm3321, %v3300, %v3302
        %v3324 = vsel %vm3321, %v3302, %v3304
        %v3325 = vsel %vm3321, %v3304, %v3306
        %v3326 = vsel %vm3321, %v3306, %v3308
        %v3327 = vsel %vm3321, %v3310, %v3312
        %v3328 = vsel %vm3321, %v3312, %v3314
        %v3329 = vsel %vm3321, %v3314, %v3316
        %v3330 = vsel %vm3321, %v3316, %v3318
        %v3331 = vsel %vm3321, %v3318, %v3320
        %v3344 = vmax.f32 %v3285, %v3322
        %v3345 = vmax.f32 %v3286, %v3323
        %v3346 = vmax.f32 %v3287, %v3324
        %v3347 = vmax.f32 %v3288, %v3325
        %v3348 = vmax.f32 %v3289, %v3326
        %v3349 = vmax.f32 %v3290, %v3308
        %v3350 = vmax.f32 %v3291, %v3327
        %v3351 = vmax.f32 %v3292, %v3328
        %v3352 = vmax.f32 %v3293, %v3329
        %v3353 = vmax.f32 %v3294, %v3330
        %v3354 = vmax.f32 %v3295, %v3331
        %v3355 = vmax.f32 %v3296, %v3320
        %3356 = vrot.lane.b32.xlu0 %v3214, 62
        %v3357 = vpop.permute.xlu0 %3356
        %3358 = vrot.lane.b32.xlu0 %v3215, 62
        %v3359 = vpop.permute.xlu0 %3358
        %3360 = vrot.lane.b32.xlu0 %v3216, 62
        %v3361 = vpop.permute.xlu0 %3360
        %3362 = vrot.lane.b32.xlu0 %v3217, 62
        %v3363 = vpop.permute.xlu0 %3362
        %3364 = vrot.lane.b32.xlu0 %v3218, 62
        %v3365 = vpop.permute.xlu0 %3364
        %3366 = vrot.lane.b32.xlu0 %v3219, 62
        %v3367 = vpop.permute.xlu0 %3366
        %3368 = vrot.lane.b32.xlu0 %v3220, 62
        %v3369 = vpop.permute.xlu0 %3368
        %3370 = vrot.lane.b32.xlu0 %v3221, 62
        %v3371 = vpop.permute.xlu0 %3370
        %3372 = vrot.lane.b32.xlu0 %v3222, 62
        %v3373 = vpop.permute.xlu0 %3372
        %3374 = vrot.lane.b32.xlu0 %v3223, 62
        %v3375 = vpop.permute.xlu0 %3374
        %3376 = vrot.lane.b32.xlu0 %v3224, 62
        %v3377 = vpop.permute.xlu0 %3376
        %3378 = vrot.lane.b32.xlu0 %v3225, 62
        %v3379 = vpop.permute.xlu0 %3378
        %vm3380 = vcmask 506880
        %v3381 = vsel %vm3380, %v3357, %v3359
        %v3382 = vsel %vm3380, %v3359, %v3361
        %v3383 = vsel %vm3380, %v3361, %v3363
        %v3384 = vsel %vm3380, %v3363, %v3365
        %v3385 = vsel %vm3380, %v3365, %v3367
        %v3386 = vsel %vm3380, %v3369, %v3371
        %v3387 = vsel %vm3380, %v3371, %v3373
        %v3388 = vsel %vm3380, %v3373, %v3375
        %v3389 = vsel %vm3380, %v3375, %v3377
        %v3390 = vsel %vm3380, %v3377, %v3379
        %v3403 = vmax.f32 %v3344, %v3381
        %v3404 = vmax.f32 %v3345, %v3382
        %v3405 = vmax.f32 %v3346, %v3383
        %v3406 = vmax.f32 %v3347, %v3384
        %v3407 = vmax.f32 %v3348, %v3385
        %v3408 = vmax.f32 %v3349, %v3367
        %v3409 = vmax.f32 %v3350, %v3386
        %v3410 = vmax.f32 %v3351, %v3387
        %v3411 = vmax.f32 %v3352, %v3388
        %v3412 = vmax.f32 %v3353, %v3389
        %v3413 = vmax.f32 %v3354, %v3390
        %v3414 = vmax.f32 %v3355, %v3379
        %v3415 = vpack.c.bf16 %v3404, %v3403
        %v3416 = vpack.c.bf16 %v3406, %v3405
        %v3417 = vpack.c.bf16 %v3408, %v3407
        %v3418 = vpack.c.bf16 %v3410, %v3409
        %v3419 = vpack.c.bf16 %v3412, %v3411
        %v3420 = vpack.c.bf16 %v3414, %v3413
        %s3421 = smul.u32 %s235, 12
        %s3422 = smul.addr %s3421, 4
        %s3423 = scalar_lea.vmem %s231, %s3422
        %3424 = vst [vmem:[%s3423] sm:$0xff] %v3415
        %3425 = vst [vmem:[%s3423 + $0x8] sm:$0xff] %v3416
        %vm3426 = vcmask 1043456
        %vm3427 = vcmask 171012
        %vm3428 = vmor %vm3427, %vm3426
        %3429 = vst.msk [vmem:[%s3423 + $0x10] sm:$0xff] %vm3428, %v3417
        %3430 = vst [vmem:[%s3423 + $0x18] sm:$0xff] %v3418
        %3431 = vst [vmem:[%s3423 + $0x20] sm:$0xff] %v3419
        %3432 = vst.msk [vmem:[%s3423 + $0x28] sm:$0xff] %vm3428, %v3420
      $region45: #{lenet_forward.2} parent=39 // loop_footer
        %s239 = sadd.s32 1, %s235
      $region46: #{lenet_forward.2} parent=39 // loop_footer_branch
        %234 = sbr.rel target = $region42
      $region47: #{lenet_forward.2} parent=39 // loop_exit
        _
      %s3433 = smul.u32 32, %s16
      %p3434 = scmp.lt.s32.totalorder %s3433, 63
      %s3435 = scalar_select %p3434, %s3433, 63
      %s3436 = smul.addr %s3435, 12
      %s3437 = smul.addr %s3436, 4
      %s3438 = scalar_lea.vmem %s5, %s3437
      // Predicated region
      $region48: #{lenet_forward.2} parent=39 // pred_check
        %p3439 = pneg %p144
      $region49: #{lenet_forward.2} parent=39 // pred_check_branch
        %3441 = sbr.rel (%p3439) target = $region51
      $region50: #{lenet_forward.2} parent=39 // pred_region
        %s3442 = smul.u32 32, %s16
      $region51: #{lenet_forward.2} parent=39 // pred_fallthru
        _
    $region40: #{lenet_forward.2} parent=5 // pred_fallthru
      _
    %p3443 = scmp.le.s32.totalorder 2, %s11
    // Predicated region
    $region52: #{lenet_forward.2} parent=5 // pred_check
      %p3444 = pneg %p3443
    $region53: #{lenet_forward.2} parent=5 // pred_check_branch
      %3446 = sbr.rel (%p3444) target = $region55
    $region54: #{lenet_forward.2} parent=5 // pred_region
      %s3447 = ssub.s32 %s11, 2
      // Predicated region
      $region56: #{lenet_forward.2} parent=54 // pred_check
        %p3448 = pneg %p150
      $region57: #{lenet_forward.2} parent=54 // pred_check_branch
        %3450 = sbr.rel (%p3448) target = $region59
      $region58: #{lenet_forward.2} parent=54 // pred_region
        %s3451 = smul.u32 32, %s17
        %p3452 = scmp.lt.s32.totalorder %s3451, 63
        %s3453 = scalar_select %p3452, %s3451, 63
        %s3454 = smul.addr %s3453, 12
        %s3455 = smul.addr %s3454, 4
        %s3456 = scalar_lea.vmem %s5, %s3455
      $region59: #{lenet_forward.2} parent=54 // pred_fallthru
        _
    $region55: #{lenet_forward.2} parent=5 // pred_fallthru
      _
  $region6: #{lenet_forward.2} parent=0 // loop_footer
    %s15 = sadd.s32 1, %s11
  $region7: #{lenet_forward.2} parent=0 // loop_footer_branch
    %10 = sbr.rel target = $region3
  $region8: #{lenet_forward.2} parent=0 // loop_exit
    _

// kernel: lenet_forward.3
$region0: #{lenet_forward.3}
  #allocation0 [shape = 'u32[]', space=smem, size = 0x4, offset = 0x4, fixed_abs, tag = 'smem constant byte address 0x4 - core index']
  #allocation1 [shape = 'u32[72,128]{1,0:T(1,128)}', space=vmem, size = 0x9000, scoped, tag = 'internal scratch']
  %s0 = inlined_call_operand.vmem [shape: bf16[64,576], index: 0, kind: input, shape index: {}]
  %s1 = inlined_call_operand.vmem [shape: bf16[576,120], index: 1, kind: input, shape index: {}]
  %s2 = inlined_call_operand.vmem [shape: f32[1,120], index: 2, kind: input, shape index: {}]
  %s3 = inlined_call_operand.vmem [shape: bf16[120,84], index: 3, kind: input, shape index: {}]
  %s4 = inlined_call_operand.vmem [shape: f32[1,84], index: 4, kind: input, shape index: {}]
  %s5 = inlined_call_operand.vmem [shape: bf16[84,128], index: 5, kind: input, shape index: {}]
  %s6 = inlined_call_operand.vmem [shape: f32[1,128], index: 6, kind: input, shape index: {}]
  %s7 = inlined_call_operand.vmem [shape: f32[64,128], index: 7, kind: output, shape index: {}]
  %s8 = sld [smem:[#allocation0]]
  $region61: #{lenet_forward.3} parent=0
    _
  %s10 = ssub.s32 1, %s8
  %s11 = scalar_select 0, %s10, %s8
  loop: start=0, step=1, limit=4
  $region2: #{lenet_forward.3} parent=0 // loop_pre_header
    _
  $region3: #{lenet_forward.3} parent=0 // loop_header
    %s13 = sphi 0, %s17
    %p14 = scmp.ge.s32.totalorder %s13, 4
    %s23 = sphi 0, %s25
    %s26 = sphi 0, %s23
    %s27 = sphi 0, %s26
    %s43 = sphi 0, %s27
    %s47 = sphi 0, %s47
    %s49 = sphi 0, %s47
    %s50 = sphi 0, %s49
    %s64 = sphi 0, %s50
    %s68 = sphi 0, %s68
    %s70 = sphi 0, %s68
    %s71 = sphi 0, %s70
    %s85 = sphi 0, %s71
    %s89 = sphi 0, %s89
    %s91 = sphi 0, %s89
    %s92 = sphi 0, %s91
    %s106 = sphi 0, %s92
    %s110 = sphi 0, %s110
    %s112 = sphi 0, %s110
    %s113 = sphi 0, %s112
    %s127 = sphi 0, %s113
    %s131 = sphi 0, %s131
    %s133 = sphi 0, %s131
    %s134 = sphi 0, %s133
    %s148 = sphi 0, %s134
    %s152 = sphi 0, %s152
    %s154 = sphi 0, %s152
    %s155 = sphi 0, %s154
    %s169 = sphi 0, %s155
    %s175 = sphi 0, %s177
    %s178 = sphi 0, %s175
    %s179 = sphi 0, %s178
    %s195 = sphi 0, %s179
  $region4: #{lenet_forward.3} parent=0 // loop_header_branch
    %16 = sbr.rel (%p14) target = $region8
  $region5: #{lenet_forward.3} parent=0 // loop_body
    %s18 = ssub.s32 %s13, 1
    %s19 = ssub.s32 %s13, 2
    %s20 = sadd.s32 %s13, 1
    %s21 = ssub.s32 %s13, %s20
    %p22 = scmp.eq.s32.totalorder %s21, 0
    %s24 = sadd.s32 %s23, 1
    %s25 = scalar_select %p22, %s23, %s24
    %p28 = pneg %p22
    %p29 = scmp.eq.s32.totalorder %s13, 1
    %p30 = por %p28, %p29
    %p31 = scmp.ne.s32.totalorder %s23, %s26
    %p32 = scmp.eq.s32.totalorder %s13, 0
    %p33 = por %p31, %p32
    %p34 = scmp.ne.s32.totalorder %s23, %s26
    %p35 = scmp.eq.s32.totalorder %s18, 1
    %p36 = por %p34, %p35
    %p37 = scmp.ne.s32.totalorder %s26, %s27
    %p38 = scmp.eq.s32.totalorder %s18, 0
    %p39 = por %p37, %p38
    %p40 = scmp.ne.s32.totalorder %s26, %s27
    %p41 = scmp.eq.s32.totalorder %s19, 1
    %p42 = por %p40, %p41
    %p44 = scmp.ne.s32.totalorder %s27, %s43
    %p45 = scmp.eq.s32.totalorder %s19, 0
    %p46 = por %p44, %p45
    %s48 = sadd.s32 %s47, 1
    %p51 = scmp.eq.s32.totalorder %s13, 1
    %p52 = scmp.ne.s32.totalorder %s47, %s49
    %p53 = scmp.eq.s32.totalorder %s13, 0
    %p54 = por %p52, %p53
    %p55 = scmp.ne.s32.totalorder %s47, %s49
    %p56 = scmp.eq.s32.totalorder %s18, 1
    %p57 = por %p55, %p56
    %p58 = scmp.ne.s32.totalorder %s49, %s50
    %p59 = scmp.eq.s32.totalorder %s18, 0
    %p60 = por %p58, %p59
    %p61 = scmp.ne.s32.totalorder %s49, %s50
    %p62 = scmp.eq.s32.totalorder %s19, 1
    %p63 = por %p61, %p62
    %p65 = scmp.ne.s32.totalorder %s50, %s64
    %p66 = scmp.eq.s32.totalorder %s19, 0
    %p67 = por %p65, %p66
    %s69 = sadd.s32 %s68, 1
    %p72 = scmp.eq.s32.totalorder %s13, 1
    %p73 = scmp.ne.s32.totalorder %s68, %s70
    %p74 = scmp.eq.s32.totalorder %s13, 0
    %p75 = por %p73, %p74
    %p76 = scmp.ne.s32.totalorder %s68, %s70
    %p77 = scmp.eq.s32.totalorder %s18, 1
    %p78 = por %p76, %p77
    %p79 = scmp.ne.s32.totalorder %s70, %s71
    %p80 = scmp.eq.s32.totalorder %s18, 0
    %p81 = por %p79, %p80
    %p82 = scmp.ne.s32.totalorder %s70, %s71
    %p83 = scmp.eq.s32.totalorder %s19, 1
    %p84 = por %p82, %p83
    %p86 = scmp.ne.s32.totalorder %s71, %s85
    %p87 = scmp.eq.s32.totalorder %s19, 0
    %p88 = por %p86, %p87
    %s90 = sadd.s32 %s89, 1
    %p93 = scmp.eq.s32.totalorder %s13, 1
    %p94 = scmp.ne.s32.totalorder %s89, %s91
    %p95 = scmp.eq.s32.totalorder %s13, 0
    %p96 = por %p94, %p95
    %p97 = scmp.ne.s32.totalorder %s89, %s91
    %p98 = scmp.eq.s32.totalorder %s18, 1
    %p99 = por %p97, %p98
    %p100 = scmp.ne.s32.totalorder %s91, %s92
    %p101 = scmp.eq.s32.totalorder %s18, 0
    %p102 = por %p100, %p101
    %p103 = scmp.ne.s32.totalorder %s91, %s92
    %p104 = scmp.eq.s32.totalorder %s19, 1
    %p105 = por %p103, %p104
    %p107 = scmp.ne.s32.totalorder %s92, %s106
    %p108 = scmp.eq.s32.totalorder %s19, 0
    %p109 = por %p107, %p108
    %s111 = sadd.s32 %s110, 1
    %p114 = scmp.eq.s32.totalorder %s13, 1
    %p115 = scmp.ne.s32.totalorder %s110, %s112
    %p116 = scmp.eq.s32.totalorder %s13, 0
    %p117 = por %p115, %p116
    %p118 = scmp.ne.s32.totalorder %s110, %s112
    %p119 = scmp.eq.s32.totalorder %s18, 1
    %p120 = por %p118, %p119
    %p121 = scmp.ne.s32.totalorder %s112, %s113
    %p122 = scmp.eq.s32.totalorder %s18, 0
    %p123 = por %p121, %p122
    %p124 = scmp.ne.s32.totalorder %s112, %s113
    %p125 = scmp.eq.s32.totalorder %s19, 1
    %p126 = por %p124, %p125
    %p128 = scmp.ne.s32.totalorder %s113, %s127
    %p129 = scmp.eq.s32.totalorder %s19, 0
    %p130 = por %p128, %p129
    %s132 = sadd.s32 %s131, 1
    %p135 = scmp.eq.s32.totalorder %s13, 1
    %p136 = scmp.ne.s32.totalorder %s131, %s133
    %p137 = scmp.eq.s32.totalorder %s13, 0
    %p138 = por %p136, %p137
    %p139 = scmp.ne.s32.totalorder %s131, %s133
    %p140 = scmp.eq.s32.totalorder %s18, 1
    %p141 = por %p139, %p140
    %p142 = scmp.ne.s32.totalorder %s133, %s134
    %p143 = scmp.eq.s32.totalorder %s18, 0
    %p144 = por %p142, %p143
    %p145 = scmp.ne.s32.totalorder %s133, %s134
    %p146 = scmp.eq.s32.totalorder %s19, 1
    %p147 = por %p145, %p146
    %p149 = scmp.ne.s32.totalorder %s134, %s148
    %p150 = scmp.eq.s32.totalorder %s19, 0
    %p151 = por %p149, %p150
    %s153 = sadd.s32 %s152, 1
    %p156 = scmp.eq.s32.totalorder %s13, 1
    %p157 = scmp.ne.s32.totalorder %s152, %s154
    %p158 = scmp.eq.s32.totalorder %s13, 0
    %p159 = por %p157, %p158
    %p160 = scmp.ne.s32.totalorder %s152, %s154
    %p161 = scmp.eq.s32.totalorder %s18, 1
    %p162 = por %p160, %p161
    %p163 = scmp.ne.s32.totalorder %s154, %s155
    %p164 = scmp.eq.s32.totalorder %s18, 0
    %p165 = por %p163, %p164
    %p166 = scmp.ne.s32.totalorder %s154, %s155
    %p167 = scmp.eq.s32.totalorder %s19, 1
    %p168 = por %p166, %p167
    %p170 = scmp.ne.s32.totalorder %s155, %s169
    %p171 = scmp.eq.s32.totalorder %s19, 0
    %p172 = por %p170, %p171
    %s173 = ssub.s32 %s13, %s20
    %p174 = scmp.eq.s32.totalorder %s173, 0
    %s176 = sadd.s32 %s175, 1
    %s177 = scalar_select %p174, %s175, %s176
    %p180 = pneg %p174
    %p181 = scmp.eq.s32.totalorder %s13, 1
    %p182 = por %p180, %p181
    %p183 = scmp.ne.s32.totalorder %s175, %s178
    %p184 = scmp.eq.s32.totalorder %s13, 0
    %p185 = por %p183, %p184
    %p186 = scmp.ne.s32.totalorder %s175, %s178
    %p187 = scmp.eq.s32.totalorder %s18, 1
    %p188 = por %p186, %p187
    %p189 = scmp.ne.s32.totalorder %s178, %s179
    %p190 = scmp.eq.s32.totalorder %s18, 0
    %p191 = por %p189, %p190
    %p192 = scmp.ne.s32.totalorder %s178, %s179
    %p193 = scmp.eq.s32.totalorder %s19, 1
    %p194 = por %p192, %p193
    %p196 = scmp.ne.s32.totalorder %s179, %s195
    %p197 = scmp.eq.s32.totalorder %s19, 0
    %p198 = por %p196, %p197
    %p199 = scmp.le.s32.totalorder 1, %s13
    %p200 = scmp.lt.s32.totalorder %s13, 3
    %p201 = pnand %p199, %p200
    %p202 = pneg %p201
    // Predicated region
    $region9: #{lenet_forward.3} parent=5 // pred_check
      _
    $region10: #{lenet_forward.3} parent=5 // pred_check_branch
      %204 = sbr.rel (%p201) target = $region12
    $region11: #{lenet_forward.3} parent=5 // pred_region
      %s205 = ssub.s32 %s13, 1
      // Predicated region
      $region13: #{lenet_forward.3} parent=11 // pred_check
        %p206 = pneg %p60
      $region14: #{lenet_forward.3} parent=11 // pred_check_branch
        %208 = sbr.rel (%p206) target = $region16
      $region15: #{lenet_forward.3} parent=11 // pred_region
        _
      $region16: #{lenet_forward.3} parent=11 // pred_fallthru
        _
      // Predicated region
      $region17: #{lenet_forward.3} parent=11 // pred_check
        %p209 = pneg %p81
      $region18: #{lenet_forward.3} parent=11 // pred_check_branch
        %211 = sbr.rel (%p209) target = $region20
      $region19: #{lenet_forward.3} parent=11 // pred_region
        _
      $region20: #{lenet_forward.3} parent=11 // pred_fallthru
        _
      // Predicated region
      $region21: #{lenet_forward.3} parent=11 // pred_check
        %p212 = pneg %p102
      $region22: #{lenet_forward.3} parent=11 // pred_check_branch
        %214 = sbr.rel (%p212) target = $region24
      $region23: #{lenet_forward.3} parent=11 // pred_region
        _
      $region24: #{lenet_forward.3} parent=11 // pred_fallthru
        _
      // Predicated region
      $region25: #{lenet_forward.3} parent=11 // pred_check
        %p215 = pneg %p123
      $region26: #{lenet_forward.3} parent=11 // pred_check_branch
        %217 = sbr.rel (%p215) target = $region28
      $region27: #{lenet_forward.3} parent=11 // pred_region
        _
      $region28: #{lenet_forward.3} parent=11 // pred_fallthru
        _
      // Predicated region
      $region29: #{lenet_forward.3} parent=11 // pred_check
        %p218 = pneg %p144
      $region30: #{lenet_forward.3} parent=11 // pred_check_branch
        %220 = sbr.rel (%p218) target = $region32
      $region31: #{lenet_forward.3} parent=11 // pred_region
        _
      $region32: #{lenet_forward.3} parent=11 // pred_fallthru
        _
      // Predicated region
      $region33: #{lenet_forward.3} parent=11 // pred_check
        %p221 = pneg %p165
      $region34: #{lenet_forward.3} parent=11 // pred_check_branch
        %223 = sbr.rel (%p221) target = $region36
      $region35: #{lenet_forward.3} parent=11 // pred_region
        _
      $region36: #{lenet_forward.3} parent=11 // pred_fallthru
        _
    $region12: #{lenet_forward.3} parent=5 // pred_fallthru
      _
    %p224 = scmp.lt.s32.totalorder %s13, 2
    // Predicated region
    $region37: #{lenet_forward.3} parent=5 // pred_check
      %p225 = pneg %p224
    $region38: #{lenet_forward.3} parent=5 // pred_check_branch
      %227 = sbr.rel (%p225) target = $region40
    $region39: #{lenet_forward.3} parent=5 // pred_region
      // Predicated region
      $region41: #{lenet_forward.3} parent=39 // pred_check
        %p228 = pneg %p33
      $region42: #{lenet_forward.3} parent=39 // pred_check_branch
        %230 = sbr.rel (%p228) target = $region44
      $region43: #{lenet_forward.3} parent=39 // pred_region
        %s231 = smul.u32 4, %s13
        %p232 = scmp.lt.s32.totalorder %s231, 7
        %s233 = scalar_select %p232, %s231, 7
        %s234 = smul.addr %s233, 5
        %s235 = smul.addr %s234, 4
        %s236 = scalar_lea.vmem %s0, %s235
        %s237 = smul.u32 4, %s13
      $region44: #{lenet_forward.3} parent=39 // pred_fallthru
        _
    $region40: #{lenet_forward.3} parent=5 // pred_fallthru
      _
    %p238 = scmp.le.s32.totalorder 1, %s13
    %p239 = scmp.lt.s32.totalorder %s13, 3
    %p240 = pnand %p238, %p239
    %p241 = pneg %p240
    // Predicated region
    $region45: #{lenet_forward.3} parent=5 // pred_check
      _
    $region46: #{lenet_forward.3} parent=5 // pred_check_branch
      %243 = sbr.rel (%p240) target = $region48
    $region47: #{lenet_forward.3} parent=5 // pred_region
      %s244 = ssub.s32 %s13, 1
      %s245 = smul.u32 4, %s18
      %p246 = scmp.lt.s32.totalorder %s245, 7
      %s247 = scalar_select %p246, %s245, 7
      %s248 = smul.addr %s247, 5
      %s249 = smul.addr %s248, 4
      %s250 = scalar_lea.vmem %s0, %s249
      %p251 = pneg %p39
      %p252 = pneg %p36
      %p253 = pneg %p60
      %p254 = pneg %p57
      %p255 = pneg %p81
      %p256 = pneg %p78
      %p257 = pneg %p102
      %p258 = pneg %p99
      %p259 = pneg %p123
      %p260 = pneg %p120
      %p261 = pneg %p144
      %p262 = pneg %p141
      %p263 = pneg %p165
      %p264 = pneg %p162
      %p265 = pneg %p191
      %p266 = pneg %p188
      %s267 = smul.u32 4, %s18
      %p268 = scmp.lt.s32.totalorder %s267, 7
      %s269 = scalar_select %p268, %s267, 7
      %s270 = smul.addr %s269, 8
      %s271 = scalar_lea.vmem %s7, %s270
      %s272 = smul.u32 4, %s18
      %p273 = scmp.lt.s32.totalorder %s272, 7
      %s274 = scalar_select %p273, %s272, 7
      %s275 = smul.addr %s274, 5
      %s276 = smul.addr %s275, 4
      %s277 = scalar_lea.vmem %s0, %s276
      %s278 = smul.u32 4, %s18
      %s279 = smul.u32 4, %s18
      %p280 = scmp.lt.s32.totalorder %s279, 7
      %s281 = scalar_select %p280, %s279, 7
      %s282 = smul.addr %s281, 8
      %s283 = scalar_lea.vmem %s7, %s282
      %s284 = smul.u32 4, %s18
      %v286 = vld [vmem:[%s277] sm:$0xff]
      %v287 = vld [vmem:[%s277 + $0x8] sm:$0xff]
      %v288 = vld [vmem:[%s277 + $0x10] sm:$0xf]
      %v289 = vld [vmem:[%s277 + $0x14] sm:$0xff]
      %v290 = vld [vmem:[%s277 + $0x1c] sm:$0xff]
      %v291 = vld [vmem:[%s277 + $0x24] sm:$0xf]
      %v292 = vld [vmem:[%s277 + $0x28] sm:$0xff]
      %v293 = vld [vmem:[%s277 + $0x30] sm:$0xff]
      %v294 = vld [vmem:[%s277 + $0x38] sm:$0xf]
      %v295 = vld [vmem:[%s277 + $0x3c] sm:$0xff]
      %v296 = vld [vmem:[%s277 + $0x44] sm:$0xff]
      %v297 = vld [vmem:[%s277 + $0x4c] sm:$0xf]
      %v298 = vld [vmem:[%s1] sm:$0xf]
      %v299 = vld [vmem:[%s1 + $0x4] sm:$0xf]
      %v300 = vld [vmem:[%s1 + $0x8] sm:$0xf]
      %v301 = vld [vmem:[%s1 + $0xc] sm:$0xf]
      %v302 = vld [vmem:[%s1 + $0x10] sm:$0xf]
      %v303 = vld [vmem:[%s1 + $0x14] sm:$0xf]
      %v304 = vld [vmem:[%s1 + $0x18] sm:$0xf]
      %v305 = vld [vmem:[%s1 + $0x1c] sm:$0xf]
      %v306 = vld [vmem:[%s1 + $0x20] sm:$0xf]
      %v307 = vld [vmem:[%s1 + $0x24] sm:$0xf]
      %v308 = vld [vmem:[%s1 + $0x28] sm:$0xf]
      %v309 = vld [vmem:[%s1 + $0x2c] sm:$0xf]
      %v310 = vld [vmem:[%s1 + $0x30] sm:$0xf]
      %v311 = vld [vmem:[%s1 + $0x34] sm:$0xf]
      %v312 = vld [vmem:[%s1 + $0x38] sm:$0xf]
      %v313 = vld [vmem:[%s1 + $0x3c] sm:$0xf]
      %v314 = vld [vmem:[%s1 + $0x40] sm:$0xf]
      %v315 = vld [vmem:[%s1 + $0x44] sm:$0xf]
      %v316 = vld [vmem:[%s1 + $0x48] sm:$0xf]
      %v317 = vld [vmem:[%s1 + $0x4c] sm:$0xf]
      %v318 = vld [vmem:[%s1 + $0x50] sm:$0xf]
      %v319 = vld [vmem:[%s1 + $0x54] sm:$0xf]
      %v320 = vld [vmem:[%s1 + $0x58] sm:$0xf]
      %v321 = vld [vmem:[%s1 + $0x5c] sm:$0xf]
      %v322 = vld [vmem:[%s1 + $0x60] sm:$0xf]
      %v323 = vld [vmem:[%s1 + $0x64] sm:$0xf]
      %v324 = vld [vmem:[%s1 + $0x68] sm:$0xf]
      %v325 = vld [vmem:[%s1 + $0x6c] sm:$0xf]
      %v326 = vld [vmem:[%s1 + $0x70] sm:$0xf]
      %v327 = vld [vmem:[%s1 + $0x74] sm:$0xf]
      %v328 = vld [vmem:[%s1 + $0x78] sm:$0xf]
      %v329 = vld [vmem:[%s1 + $0x7c] sm:$0xf]
      %v330 = vld [vmem:[%s1 + $0x80] sm:$0xf]
      %v331 = vld [vmem:[%s1 + $0x84] sm:$0xf]
      %v332 = vld [vmem:[%s1 + $0x88] sm:$0xf]
      %v333 = vld [vmem:[%s1 + $0x8c] sm:$0xf]
      %v334 = vld [vmem:[%s1 + $0x90] sm:$0xf]
      %v335 = vld [vmem:[%s1 + $0x94] sm:$0xf]
      %v336 = vld [vmem:[%s1 + $0x98] sm:$0xf]
      %v337 = vld [vmem:[%s1 + $0x9c] sm:$0xf]
      %v338 = vld [vmem:[%s1 + $0xa0] sm:$0xf]
      %v339 = vld [vmem:[%s1 + $0xa4] sm:$0xf]
      %v340 = vld [vmem:[%s1 + $0xa8] sm:$0xf]
      %v341 = vld [vmem:[%s1 + $0xac] sm:$0xf]
      %v342 = vld [vmem:[%s1 + $0xb0] sm:$0xf]
      %v343 = vld [vmem:[%s1 + $0xb4] sm:$0xf]
      %v344 = vld [vmem:[%s1 + $0xb8] sm:$0xf]
      %v345 = vld [vmem:[%s1 + $0xbc] sm:$0xf]
      %v346 = vld [vmem:[%s1 + $0xc0] sm:$0xf]
      %v347 = vld [vmem:[%s1 + $0xc4] sm:$0xf]
      %v348 = vld [vmem:[%s1 + $0xc8] sm:$0xf]
      %v349 = vld [vmem:[%s1 + $0xcc] sm:$0xf]
      %v350 = vld [vmem:[%s1 + $0xd0] sm:$0xf]
      %v351 = vld [vmem:[%s1 + $0xd4] sm:$0xf]
      %v352 = vld [vmem:[%s1 + $0xd8] sm:$0xf]
      %v353 = vld [vmem:[%s1 + $0xdc] sm:$0xf]
      %v354 = vld [vmem:[%s1 + $0xe0] sm:$0xf]
      %v355 = vld [vmem:[%s1 + $0xe4] sm:$0xf]
      %v356 = vld [vmem:[%s1 + $0xe8] sm:$0xf]
      %v357 = vld [vmem:[%s1 + $0xec] sm:$0xf]
      %v358 = vld [vmem:[%s1 + $0xf0] sm:$0xf]
      %v359 = vld [vmem:[%s1 + $0xf4] sm:$0xf]
      %v360 = vld [vmem:[%s1 + $0xf8] sm:$0xf]
      %v361 = vld [vmem:[%s1 + $0xfc] sm:$0xf]
      %v362 = vld [vmem:[%s1 + $0x100] sm:$0xf]
      %v363 = vld [vmem:[%s1 + $0x104] sm:$0xf]
      %v364 = vld [vmem:[%s1 + $0x108] sm:$0xf]
      %v365 = vld [vmem:[%s1 + $0x10c] sm:$0xf]
      %v366 = vld [vmem:[%s1 + $0x110] sm:$0xf]
      %v367 = vld [vmem:[%s1 + $0x114] sm:$0xf]
      %v368 = vld [vmem:[%s1 + $0x118] sm:$0xf]
      %v369 = vld [vmem:[%s1 + $0x11c] sm:$0xf]
      %v370 = vld [vmem:[%s2] sm:$0x1]
      %v372 = vperm.slane %v370, 0
      %v386 = vunpack.c.l.b16 %v286
      %v387 = vunpack.c.h.b16 %v286
      %v388 = vunpack.c.l.b16 %v287
      %v389 = vunpack.c.h.b16 %v287
      %v390 = vunpack.c.l.b16 %v288
      %v391 = vunpack.c.l.b16 %v289
      %v392 = vunpack.c.h.b16 %v289
      %v393 = vunpack.c.l.b16 %v290
      %v394 = vunpack.c.h.b16 %v290
      %v395 = vunpack.c.l.b16 %v291
      %v396 = vunpack.c.l.b16 %v292
      %v397 = vunpack.c.h.b16 %v292
      %v398 = vunpack.c.l.b16 %v293
      %v399 = vunpack.c.h.b16 %v293
      %v400 = vunpack.c.l.b16 %v294
      %v401 = vunpack.c.l.b16 %v295
      %v402 = vunpack.c.h.b16 %v295
      %v403 = vunpack.c.l.b16 %v296
      %v404 = vunpack.c.h.b16 %v296
      %v405 = vunpack.c.l.b16 %v297
      %v406 = vpack.c.b16 %v391, %v386
      %v407 = vpack.c.b16 %v392, %v387
      %v408 = vpack.c.b16 %v393, %v388
      %v409 = vpack.c.b16 %v394, %v389
      %v410 = vpack.c.b16 %v395, %v390
      %v411 = vpack.c.b16 %v401, %v396
      %v412 = vpack.c.b16 %v402, %v397
      %v413 = vpack.c.b16 %v403, %v398
      %v414 = vpack.c.b16 %v404, %v399
      %v415 = vpack.c.b16 %v405, %v400
      %v496 = vunpack.c.l.b16 %v298
      %v497 = vunpack.c.l.b16 %v299
      %v498 = vunpack.c.l.b16 %v300
      %v499 = vunpack.c.l.b16 %v301
      %v500 = vunpack.c.l.b16 %v302
      %v501 = vunpack.c.l.b16 %v303
      %v502 = vunpack.c.l.b16 %v304
      %v503 = vunpack.c.l.b16 %v305
      %v504 = vunpack.c.l.b16 %v306
      %v505 = vunpack.c.l.b16 %v307
      %v506 = vunpack.c.l.b16 %v308
      %v507 = vunpack.c.l.b16 %v309
      %v508 = vunpack.c.l.b16 %v310
      %v509 = vunpack.c.l.b16 %v311
      %v510 = vunpack.c.l.b16 %v312
      %v511 = vunpack.c.l.b16 %v313
      %v512 = vunpack.c.l.b16 %v314
      %v513 = vunpack.c.l.b16 %v315
      %v514 = vunpack.c.l.b16 %v316
      %v515 = vunpack.c.l.b16 %v317
      %v516 = vunpack.c.l.b16 %v318
      %v517 = vunpack.c.l.b16 %v319
      %v518 = vunpack.c.l.b16 %v320
      %v519 = vunpack.c.l.b16 %v321
      %v520 = vunpack.c.l.b16 %v322
      %v521 = vunpack.c.l.b16 %v323
      %v522 = vunpack.c.l.b16 %v324
      %v523 = vunpack.c.l.b16 %v325
      %v524 = vunpack.c.l.b16 %v326
      %v525 = vunpack.c.l.b16 %v327
      %v526 = vunpack.c.l.b16 %v328
      %v527 = vunpack.c.l.b16 %v329
      %v528 = vunpack.c.l.b16 %v330
      %v529 = vunpack.c.l.b16 %v331
      %v530 = vunpack.c.l.b16 %v332
      %v531 = vunpack.c.l.b16 %v333
      %v532 = vunpack.c.l.b16 %v334
      %v533 = vunpack.c.l.b16 %v335
      %v534 = vunpack.c.l.b16 %v336
      %v535 = vunpack.c.l.b16 %v337
      %v536 = vunpack.c.l.b16 %v338
      %v537 = vunpack.c.l.b16 %v339
      %v538 = vunpack.c.l.b16 %v340
      %v539 = vunpack.c.l.b16 %v341
      %v540 = vunpack.c.l.b16 %v342
      %v541 = vunpack.c.l.b16 %v343
      %v542 = vunpack.c.l.b16 %v344
      %v543 = vunpack.c.l.b16 %v345
      %v544 = vunpack.c.l.b16 %v346
      %v545 = vunpack.c.l.b16 %v347
      %v546 = vunpack.c.l.b16 %v348
      %v547 = vunpack.c.l.b16 %v349
      %v548 = vunpack.c.l.b16 %v350
      %v549 = vunpack.c.l.b16 %v351
      %v550 = vunpack.c.l.b16 %v352
      %v551 = vunpack.c.l.b16 %v353
      %v552 = vunpack.c.l.b16 %v354
      %v553 = vunpack.c.l.b16 %v355
      %v554 = vunpack.c.l.b16 %v356
      %v555 = vunpack.c.l.b16 %v357
      %v556 = vunpack.c.l.b16 %v358
      %v557 = vunpack.c.l.b16 %v359
      %v558 = vunpack.c.l.b16 %v360
      %v559 = vunpack.c.l.b16 %v361
      %v560 = vunpack.c.l.b16 %v362
      %v561 = vunpack.c.l.b16 %v363
      %v562 = vunpack.c.l.b16 %v364
      %v563 = vunpack.c.l.b16 %v365
      %v564 = vunpack.c.l.b16 %v366
      %v565 = vunpack.c.l.b16 %v367
      %v566 = vunpack.c.l.b16 %v368
      %v567 = vunpack.c.l.b16 %v369
      %v568 = vpack.c.b16 %v497, %v496
      %v569 = vpack.c.b16 %v499, %v498
      %v570 = vpack.c.b16 %v501, %v500
      %v571 = vpack.c.b16 %v503, %v502
      %v572 = vpack.c.b16 %v505, %v504
      %v573 = vpack.c.b16 %v507, %v506
      %v574 = vpack.c.b16 %v509, %v508
      %v575 = vpack.c.b16 %v511, %v510
      %v576 = vpack.c.b16 %v513, %v512
      %v577 = vpack.c.b16 %v515, %v514
      %v578 = vpack.c.b16 %v517, %v516
      %v579 = vpack.c.b16 %v519, %v518
      %v580 = vpack.c.b16 %v521, %v520
      %v581 = vpack.c.b16 %v523, %v522
      %v582 = vpack.c.b16 %v525, %v524
      %v583 = vpack.c.b16 %v527, %v526
      %v584 = vpack.c.b16 %v529, %v528
      %v585 = vpack.c.b16 %v531, %v530
      %v586 = vpack.c.b16 %v533, %v532
      %v587 = vpack.c.b16 %v535, %v534
      %v588 = vpack.c.b16 %v537, %v536
      %v589 = vpack.c.b16 %v539, %v538
      %v590 = vpack.c.b16 %v541, %v540
      %v591 = vpack.c.b16 %v543, %v542
      %v592 = vpack.c.b16 %v545, %v544
      %v593 = vpack.c.b16 %v547, %v546
      %v594 = vpack.c.b16 %v549, %v548
      %v595 = vpack.c.b16 %v551, %v550
      %v596 = vpack.c.b16 %v553, %v552
      %v597 = vpack.c.b16 %v555, %v554
      %v598 = vpack.c.b16 %v557, %v556
      %v599 = vpack.c.b16 %v559, %v558
      %v600 = vpack.c.b16 %v561, %v560
      %v601 = vpack.c.b16 %v563, %v562
      %v602 = vpack.c.b16 %v565, %v564
      %v603 = vpack.c.b16 %v567, %v566
      %vm640 = vcmask 523264
      %v642 = vsel %vm640, %v410, 0
      %v645 = vsel %vm640, %v415, 0
      %647 = vmatpush.bf16.msra.mxu0 %v575
      %648 = vmatpush.bf16.msra.mxu0 %v574
      %649 = vmatpush.bf16.msra.mxu0 %v573
      %650 = vmatpush.bf16.msra.mxu0 %v572
      %651 = vmatpush.bf16.msra.mxu0 %v571
      %652 = vmatpush.bf16.msra.mxu0 %v570
      %653 = vmatpush.bf16.msra.mxu0 %v569
      %654 = vmatpush.bf16.msra.mxu0 %v568
      %655 = vmatmul.bf16.gmra.mxu0 %v406
      %v656 = vpop.f32.mrf.mxu0
      %v657 = vadd.f32 %v372, %v656
      %v658 = vpop.f32.mrf.mxu0
      %v659 = vadd.f32 %v372, %v658
      %660 = vmatmul.bf16.gmra.mxu0 %v411
      %v661 = vpop.f32.mrf.mxu0
      %v662 = vadd.f32 %v372, %v661
      %v663 = vpop.f32.mrf.mxu0
      %v664 = vadd.f32 %v372, %v663
      %665 = vdwg.mxu0
      %666 = vmatpush.bf16.msra.mxu0 %v583
      %667 = vmatpush.bf16.msra.mxu0 %v582
      %668 = vmatpush.bf16.msra.mxu0 %v581
      %669 = vmatpush.bf16.msra.mxu0 %v580
      %670 = vmatpush.bf16.msra.mxu0 %v579
      %671 = vmatpush.bf16.msra.mxu0 %v578
      %672 = vmatpush.bf16.msra.mxu0 %v577
      %673 = vmatpush.bf16.msra.mxu0 %v576
      %674 = vmatmul.bf16.gmra.mxu0 %v407
      %v675 = vpop.f32.mrf.mxu0
      %v676 = vadd.f32 %v657, %v675
      %v677 = vpop.f32.mrf.mxu0
      %v678 = vadd.f32 %v659, %v677
      %679 = vmatmul.bf16.gmra.mxu0 %v412
      %v680 = vpop.f32.mrf.mxu0
      %v681 = vadd.f32 %v662, %v680
      %v682 = vpop.f32.mrf.mxu0
      %v683 = vadd.f32 %v664, %v682
      %684 = vdwg.mxu0
      %685 = vmatpush.bf16.msra.mxu0 %v591
      %686 = vmatpush.bf16.msra.mxu0 %v590
      %687 = vmatpush.bf16.msra.mxu0 %v589
      %688 = vmatpush.bf16.msra.mxu0 %v588
      %689 = vmatpush.bf16.msra.mxu0 %v587
      %690 = vmatpush.bf16.msra.mxu0 %v586
      %691 = vmatpush.bf16.msra.mxu0 %v585
      %692 = vmatpush.bf16.msra.mxu0 %v584
      %693 = vmatmul.bf16.gmra.mxu0 %v408
      %v694 = vpop.f32.mrf.mxu0
      %v695 = vadd.f32 %v676, %v694
      %v696 = vpop.f32.mrf.mxu0
      %v697 = vadd.f32 %v678, %v696
      %698 = vmatmul.bf16.gmra.mxu0 %v413
      %v699 = vpop.f32.mrf.mxu0
      %v700 = vadd.f32 %v681, %v699
      %v701 = vpop.f32.mrf.mxu0
      %v702 = vadd.f32 %v683, %v701
      %703 = vdwg.mxu0
      %704 = vmatpush.bf16.msra.mxu0 %v599
      %705 = vmatpush.bf16.msra.mxu0 %v598
      %706 = vmatpush.bf16.msra.mxu0 %v597
      %707 = vmatpush.bf16.msra.mxu0 %v596
      %708 = vmatpush.bf16.msra.mxu0 %v595
      %709 = vmatpush.bf16.msra.mxu0 %v594
      %710 = vmatpush.bf16.msra.mxu0 %v593
      %711 = vmatpush.bf16.msra.mxu0 %v592
      %712 = vmatmul.bf16.gmra.mxu0 %v409
      %v713 = vpop.f32.mrf.mxu0
      %v714 = vadd.f32 %v695, %v713
      %v715 = vpop.f32.mrf.mxu0
      %v716 = vadd.f32 %v697, %v715
      %717 = vmatmul.bf16.gmra.mxu0 %v414
      %v718 = vpop.f32.mrf.mxu0
      %v719 = vadd.f32 %v700, %v718
      %v720 = vpop.f32.mrf.mxu0
      %v721 = vadd.f32 %v702, %v720
      %722 = vdwg.mxu0
      %723 = vmatpush.bf16.msra.mxu0 0
      %724 = vmatpush.bf16.msra.mxu0 0
      %725 = vmatpush.bf16.msra.mxu0 0
      %726 = vmatpush.bf16.msra.mxu0 0
      %727 = vmatpush.bf16.msra.mxu0 %v603
      %728 = vmatpush.bf16.msra.mxu0 %v602
      %729 = vmatpush.bf16.msra.mxu0 %v601
      %730 = vmatpush.bf16.msra.mxu0 %v600
      %731 = vmatmul.bf16.gmra.mxu0 %v642
      %v732 = vpop.f32.mrf.mxu0
      %v733 = vadd.f32 %v714, %v732
      %v734 = vpop.f32.mrf.mxu0
      %v735 = vadd.f32 %v716, %v734
      %736 = vmatmul.bf16.gmra.mxu0 %v645
      %v737 = vpop.f32.mrf.mxu0
      %v738 = vadd.f32 %v719, %v737
      %v739 = vpop.f32.mrf.mxu0
      %v740 = vadd.f32 %v721, %v739
      %741 = vdwg.mxu0
      %v742 = vmax.f32 %v733, 0.0
      %v743 = vmax.f32 %v735, 0.0
      %v744 = vmax.f32 %v738, 0.0
      %v745 = vmax.f32 %v740, 0.0
      %v746 = vpack.c.bf16 %v743, %v742
      %v747 = vpack.c.bf16 %v745, %v744
      %v748 = vld [vmem:[%s3] sm:$0xf]
      %v749 = vld [vmem:[%s3 + $0x4] sm:$0xf]
      %v750 = vld [vmem:[%s3 + $0x8] sm:$0xf]
      %v751 = vld [vmem:[%s3 + $0xc] sm:$0xf]
      %v752 = vld [vmem:[%s3 + $0x10] sm:$0xf]
      %v753 = vld [vmem:[%s3 + $0x14] sm:$0xf]
      %v754 = vld [vmem:[%s3 + $0x18] sm:$0xf]
      %v755 = vld [vmem:[%s3 + $0x1c] sm:$0xf]
      %v756 = vld [vmem:[%s3 + $0x20] sm:$0xf]
      %v757 = vld [vmem:[%s3 + $0x24] sm:$0xf]
      %v758 = vld [vmem:[%s3 + $0x28] sm:$0xf]
      %v759 = vld [vmem:[%s3 + $0x2c] sm:$0xf]
      %v760 = vld [vmem:[%s3 + $0x30] sm:$0xf]
      %v761 = vld [vmem:[%s3 + $0x34] sm:$0xf]
      %v762 = vld [vmem:[%s3 + $0x38] sm:$0xf]
      %v763 = vld [vmem:[%s4] sm:$0x1]
      %v765 = vperm.slane %v763, 0
      %v782 = vunpack.c.l.b16 %v748
      %v783 = vunpack.c.l.b16 %v749
      %v784 = vunpack.c.l.b16 %v750
      %v785 = vunpack.c.l.b16 %v751
      %v786 = vunpack.c.l.b16 %v752
      %v787 = vunpack.c.l.b16 %v753
      %v788 = vunpack.c.l.b16 %v754
      %v789 = vunpack.c.l.b16 %v755
      %v790 = vunpack.c.l.b16 %v756
      %v791 = vunpack.c.l.b16 %v757
      %v792 = vunpack.c.l.b16 %v758
      %v793 = vunpack.c.l.b16 %v759
      %v794 = vunpack.c.l.b16 %v760
      %v795 = vunpack.c.l.b16 %v761
      %v796 = vunpack.c.l.b16 %v762
      %v797 = vpack.c.b16 %v783, %v782
      %v798 = vpack.c.b16 %v785, %v784
      %v799 = vpack.c.b16 %v787, %v786
      %v800 = vpack.c.b16 %v789, %v788
      %v801 = vpack.c.b16 %v791, %v790
      %v802 = vpack.c.b16 %v793, %v792
      %v803 = vpack.c.b16 %v795, %v794
      %v804 = vpack.c.b16 %v796, %v796
      %vm812 = vcmask 982016
      %v814 = vsel %vm812, %v746, 0
      %v817 = vsel %vm812, %v747, 0
      %vm819 = vcmask 1043456
      %v821 = vsel %vm819, %v804, 0
      %823 = vmatpush.bf16.msra.mxu0 %v821
      %824 = vmatpush.bf16.msra.mxu0 %v803
      %825 = vmatpush.bf16.msra.mxu0 %v802
      %826 = vmatpush.bf16.msra.mxu0 %v801
      %827 = vmatpush.bf16.msra.mxu0 %v800
      %828 = vmatpush.bf16.msra.mxu0 %v799
      %829 = vmatpush.bf16.msra.mxu0 %v798
      %830 = vmatpush.bf16.msra.mxu0 %v797
      %831 = vmatmul.bf16.gmra.mxu0 %v814
      %v832 = vpop.f32.mrf.mxu0
      %v833 = vadd.f32 %v765, %v832
      %v834 = vpop.f32.mrf.mxu0
      %v835 = vadd.f32 %v765, %v834
      %836 = vmatmul.bf16.gmra.mxu0 %v817
      %v837 = vpop.f32.mrf.mxu0
      %v838 = vadd.f32 %v765, %v837
      %v839 = vpop.f32.mrf.mxu0
      %v840 = vadd.f32 %v765, %v839
      %841 = vdwg.mxu0
      %v842 = vmax.f32 %v833, 0.0
      %v843 = vmax.f32 %v835, 0.0
      %v844 = vmax.f32 %v838, 0.0
      %v845 = vmax.f32 %v840, 0.0
      %v846 = vpack.c.bf16 %v843, %v842
      %v847 = vpack.c.bf16 %v845, %v844
      %v848 = vld [vmem:[%s5] sm:$0xf]
      %v849 = vld [vmem:[%s5 + $0x4] sm:$0xf]
      %v850 = vld [vmem:[%s5 + $0x8] sm:$0xf]
      %v851 = vld [vmem:[%s5 + $0xc] sm:$0xf]
      %v852 = vld [vmem:[%s5 + $0x10] sm:$0xf]
      %v853 = vld [vmem:[%s5 + $0x14] sm:$0xf]
      %v854 = vld [vmem:[%s5 + $0x18] sm:$0xf]
      %v855 = vld [vmem:[%s5 + $0x1c] sm:$0xf]
      %v856 = vld [vmem:[%s5 + $0x20] sm:$0xf]
      %v857 = vld [vmem:[%s5 + $0x24] sm:$0xf]
      %v858 = vld [vmem:[%s5 + $0x28] sm:$0x3]
      %v859 = vld [vmem:[%s6] sm:$0x1]
      %v861 = vperm.slane %v859, 0
      %v874 = vunpack.c.l.b16 %v848
      %v875 = vunpack.c.l.b16 %v849
      %v876 = vunpack.c.l.b16 %v850
      %v877 = vunpack.c.l.b16 %v851
      %v878 = vunpack.c.l.b16 %v852
      %v879 = vunpack.c.l.b16 %v853
      %v880 = vunpack.c.l.b16 %v854
      %v881 = vunpack.c.l.b16 %v855
      %v882 = vunpack.c.l.b16 %v856
      %v883 = vunpack.c.l.b16 %v857
      %v884 = vunpack.c.l.b16 %v858
      %v885 = vpack.c.b16 %v875, %v874
      %v886 = vpack.c.b16 %v877, %v876
      %v887 = vpack.c.b16 %v879, %v878
      %v888 = vpack.c.b16 %v881, %v880
      %v889 = vpack.c.b16 %v883, %v882
      %v890 = vpack.c.b16 %v884, %v884
      %vm896 = vcmask 687104
      %v898 = vsel %vm896, %v846, 0
      %v901 = vsel %vm896, %v847, 0
      %vm903 = vcmask 1041408
      %v905 = vsel %vm903, %v890, 0
      %907 = vmatpush.bf16.msra.mxu0 0
      %908 = vmatpush.bf16.msra.mxu0 0
      %909 = vmatpush.bf16.msra.mxu0 %v905
      %910 = vmatpush.bf16.msra.mxu0 %v889
      %911 = vmatpush.bf16.msra.mxu0 %v888
      %912 = vmatpush.bf16.msra.mxu0 %v887
      %913 = vmatpush.bf16.msra.mxu0 %v886
      %914 = vmatpush.bf16.msra.mxu0 %v885
      %915 = vmatmul.bf16.gmra.mxu0 %v898
      %v916 = vpop.f32.mrf.mxu0
      %v917 = vadd.f32 %v861, %v916
      %v918 = vpop.f32.mrf.mxu0
      %v919 = vadd.f32 %v861, %v918
      %920 = vmatmul.bf16.gmra.mxu0 %v901
      %v921 = vpop.f32.mrf.mxu0
      %v922 = vadd.f32 %v861, %v921
      %v923 = vpop.f32.mrf.mxu0
      %v924 = vadd.f32 %v861, %v923
      %925 = vdwg.mxu0
      %926 = vst [vmem:[%s283] sm:$0xff] %v917
      %927 = vst [vmem:[%s283 + $0x8] sm:$0xff] %v919
      %928 = vst [vmem:[%s283 + $0x10] sm:$0xff] %v922
      %929 = vst [vmem:[%s283 + $0x18] sm:$0xff] %v924
      %s930 = smul.u32 4, %s18
      %p931 = scmp.lt.s32.totalorder %s930, 7
      %s932 = scalar_select %p931, %s930, 7
      %s933 = smul.addr %s932, 8
      %s934 = scalar_lea.vmem %s7, %s933
      // Predicated region
      $region49: #{lenet_forward.3} parent=47 // pred_check
        %p935 = pneg %p188
      $region50: #{lenet_forward.3} parent=47 // pred_check_branch
        %937 = sbr.rel (%p935) target = $region52
      $region51: #{lenet_forward.3} parent=47 // pred_region
        %s938 = smul.u32 4, %s18
      $region52: #{lenet_forward.3} parent=47 // pred_fallthru
        _
    $region48: #{lenet_forward.3} parent=5 // pred_fallthru
      _
    %p939 = scmp.le.s32.totalorder 2, %s13
    // Predicated region
    $region53: #{lenet_forward.3} parent=5 // pred_check
      %p940 = pneg %p939
    $region54: #{lenet_forward.3} parent=5 // pred_check_branch
      %942 = sbr.rel (%p940) target = $region56
    $region55: #{lenet_forward.3} parent=5 // pred_region
      %s943 = ssub.s32 %s13, 2
      // Predicated region
      $region57: #{lenet_forward.3} parent=55 // pred_check
        %p944 = pneg %p194
      $region58: #{lenet_forward.3} parent=55 // pred_check_branch
        %946 = sbr.rel (%p944) target = $region60
      $region59: #{lenet_forward.3} parent=55 // pred_region
        %s947 = smul.u32 4, %s19
        %p948 = scmp.lt.s32.totalorder %s947, 7
        %s949 = scalar_select %p948, %s947, 7
        %s950 = smul.addr %s949, 8
        %s951 = scalar_lea.vmem %s7, %s950
      $region60: #{lenet_forward.3} parent=55 // pred_fallthru
        _
    $region56: #{lenet_forward.3} parent=5 // pred_fallthru
      _
  $region6: #{lenet_forward.3} parent=0 // loop_footer
    %s17 = sadd.s32 1, %s13
  $region7: #{lenet_forward.3} parent=0 // loop_footer_branch
    %12 = sbr.rel target = $region3
  $region8: #{lenet_forward.3} parent=0 // loop_exit
    _

</llo_original>
